<compile_context>
chip_gen: v7x
topology: tpu7x:2x2x1
jax: 0.10.0
libtpu: 0.0.40
codegen_flags: <defaults>
</compile_context>

<pallas_src>
import functools

import jax
import jax.numpy as jnp
import numpy as np
from jax.experimental import pallas as pl
from jax.experimental.pallas import tpu as pltpu


def residual_stack_kernel(x_ref, w1_ref, w2_ref, o_ref, hpad_ref, cols_ref, *,
                          n_layers):
    # x_ref:    (Bb, H, W, Cin)        block of images (NHWC)
    # w1_ref:   (9*Cin, Cres)          folded 3x3 conv weight (tap-major, cin-minor)
    # w2_ref:   (Cres, Cout)           1x1 conv weight
    # o_ref:    (Bb, H, W, Cout)
    # hpad_ref: (Bb, H+2, W+2, Cin)    padded-activation scratch (zero halo)
    # cols_ref: (Bb, H, W, 9*Cin)      im2col scratch
    Bb, H, W, Cin = x_ref.shape
    Cres = w2_ref.shape[0]
    Cout = w2_ref.shape[1]

    # Weights loaded once, outside the layer loop (shared across layers).
    w1 = w1_ref[...].astype(jnp.float32)
    w2 = w2_ref[...].astype(jnp.float32)
    x = x_ref[...].astype(jnp.float32)

    # Zero the padded scratch once per grid step.  Each layer rewrites only the
    # interior, so the 1-pixel zero halo (== SAME padding) persists across
    # layers: no per-layer (let alone per-tap) zero fills.
    hpad_ref[...] = jnp.zeros_like(hpad_ref)

    taps = [(dy, dx) for dy in range(3) for dx in range(3)]

    def layer(x):
        # ReLU, written straight into the interior of the padded buffer.
        hpad_ref[:, 1:H + 1, 1:W + 1, :] = jnp.maximum(x, 0.0)

        # im2col: 9 shifted read-slices packed along the channel (lane) axis.
        for t, (dy, dx) in enumerate(taps):
            cols_ref[:, :, :, t * Cin:(t + 1) * Cin] = (
                hpad_ref[:, dy:dy + H, dx:dx + W, :])

        cols = cols_ref[...].reshape(Bb * H * W, 9 * Cin)

        # 3x3 conv (pad=1, no bias) == one K-dense MXU matmul.
        z = jnp.dot(cols, w1, preferred_element_type=jnp.float32)   # (M, Cres)
        z = jnp.maximum(z, 0.0)                                      # ReLU

        # 1x1 conv (no bias).
        y = jnp.dot(z, w2, preferred_element_type=jnp.float32)      # (M, Cout)
        return x + y.reshape(Bb, H, W, Cout)                        # residual add

    if n_layers <= 4:
        # Small stacks: static unroll gives the scheduler full visibility.
        for _ in range(n_layers):
            x = layer(x)
    else:
        # Large stacks: bound code size / vreg live ranges.
        x = jax.lax.fori_loop(0, n_layers, lambda _, xc: layer(xc), x)

    o_ref[...] = jnp.maximum(x, 0.0).astype(o_ref.dtype)            # final ReLU


def fold_weights(w1_oihw, w2_oihw):
    """OIHW torch weights -> matmul-ready layouts (done once, outside the kernel)."""
    Cres, Cin, KH, KW = w1_oihw.shape
    # w1k[(dy*3+dx)*Cin + cin, co] = w1_oihw[co, cin, dy, dx]
    w1k = jnp.transpose(w1_oihw, (2, 3, 1, 0)).reshape(KH * KW * Cin, Cres)
    # w2[cres, cout] = w2_oihw[cout, cres, 0, 0]
    w2 = jnp.transpose(w2_oihw[:, :, 0, 0], (1, 0))
    return w1k, w2


def residual_stack_nhwc(x_nhwc, w1k, w2, n_layers, images_per_block=None):
    B, H, W, Cin = x_nhwc.shape
    K9Cin, Cres = w1k.shape
    Cout = w2.shape[1]
    assert Cout == Cin, "residual add requires h_dim == in_dim"
    assert K9Cin == 9 * Cin

    if images_per_block is None:
        # >= 2 grid steps when possible (v7x: 2 TensorCores), merged images per
        # step otherwise to amortize per-step overhead and raise matmul M.
        images_per_block = B // 2 if (B >= 2 and B % 2 == 0) else 1
    assert B % images_per_block == 0
    Bb = images_per_block
    grid = (B // Bb,)

    # Whole-image-in-VMEM budget (double-buffered I/O + scratch + intermediates).
    vmem_bytes = 4 * (
        2 * Bb * H * W * Cin          # input blocks (double-buffered)
        + 2 * Bb * H * W * Cout       # output blocks (double-buffered)
        + K9Cin * Cres + Cres * Cout  # weights
        + Bb * (H + 2) * (W + 2) * Cin
        + Bb * H * W * 9 * Cin
        + 4 * Bb * H * W * max(Cin, Cout))  # live intermediates (x, y, z, slack)
    # TODO(synk): switch to H-row-stripe blocks with a 1-row halo (and set
    # pltpu.CompilerParams(vmem_limit_bytes=...)) for feature maps that exceed
    # this budget (v7x: 64 MiB physical / 32 MiB default-scoped VMEM).
    assert vmem_bytes < 20 * 1024 * 1024, (
        f"whole-image blocks need ~{vmem_bytes/2**20:.1f} MiB VMEM; tile by rows")

    kernel = functools.partial(residual_stack_kernel, n_layers=n_layers)
    return pl.pallas_call(
        kernel,
        out_shape=jax.ShapeDtypeStruct((B, H, W, Cout), x_nhwc.dtype),
        grid=grid,
        in_specs=[
            pl.BlockSpec((Bb, H, W, Cin), lambda b: (b, 0, 0, 0)),
            pl.BlockSpec((K9Cin, Cres), lambda b: (0, 0)),
            pl.BlockSpec((Cres, Cout), lambda b: (0, 0)),
        ],
        out_specs=pl.BlockSpec((Bb, H, W, Cout), lambda b: (b, 0, 0, 0)),
        scratch_shapes=[
            pltpu.VMEM((Bb, H + 2, W + 2, Cin), jnp.float32),   # padded activation
            pltpu.VMEM((Bb, H, W, 9 * Cin), jnp.float32),       # im2col slab
        ],
        compiler_params=pltpu.CompilerParams(dimension_semantics=("parallel",)),
    )(x_nhwc, w1k, w2)


@functools.partial(jax.jit, static_argnames=("n_layers",))
def residual_stack_nchw(x_nchw, w1_oihw, w2_oihw, n_layers):
    """PyTorch-convention wrapper: NCHW input, OIHW weights, NCHW output."""
    w1k, w2 = fold_weights(w1_oihw, w2_oihw)
    x_nhwc = jnp.transpose(x_nchw, (0, 2, 3, 1))
    out_nhwc = residual_stack_nhwc(x_nhwc, w1k, w2, n_layers)
    return jnp.transpose(out_nhwc, (0, 3, 1, 2))


def reference_nchw(x, w1_oihw, w2_oihw, n_layers):
    """Pure-JAX reference matching the PyTorch forward exactly."""
    dn = ("NCHW", "OIHW", "NCHW")
    for _ in range(n_layers):
        h = jax.nn.relu(x)
        h = jax.lax.conv_general_dilated(h, w1_oihw, (1, 1), "SAME",
                                         dimension_numbers=dn)
        h = jax.nn.relu(h)
        h = jax.lax.conv_general_dilated(h, w2_oihw, (1, 1), "VALID",
                                         dimension_numbers=dn)
        x = x + h
    return jax.nn.relu(x)


if __name__ == "__main__":
    # ResidualStack(in_dim=32, h_dim=32, res_h_dim=16, n_res_layers=2)
    in_dim = 32
    h_dim = 32        # must equal in_dim for the residual add
    res_h_dim = 16
    n_res_layers = 2
    B, H, W = 2, 16, 16

    key = jax.random.PRNGKey(0)
    kx, k1, k2 = jax.random.split(key, 3)

    x = jax.random.normal(kx, (B, in_dim, H, W), dtype=jnp.float32)  # NCHW
    # Conv2d(in_dim, res_h_dim, 3, pad=1, bias=False): weight (res_h_dim, in_dim, 3, 3)
    w1 = jax.random.normal(k1, (res_h_dim, in_dim, 3, 3), dtype=jnp.float32) * 0.1
    # Conv2d(res_h_dim, h_dim, 1, bias=False): weight (h_dim, res_h_dim, 1, 1)
    w2 = jax.random.normal(k2, (h_dim, res_h_dim, 1, 1), dtype=jnp.float32) * 0.1

    out = residual_stack_nchw(x, w1, w2, n_layers=n_res_layers)
    out = jax.block_until_ready(out)

    ref = jax.block_until_ready(reference_nchw(x, w1, w2, n_res_layers))
    np.testing.assert_allclose(np.asarray(out), np.asarray(ref), atol=1e-4, rtol=1e-4)

    print("KERNEL_OK")
</pallas_src>

<mosaic_0001>
module attributes {stable_mosaic.version = 11 : i64} {
  func.func @residual_stack_kernel(%arg0: i32, %arg1: memref<1x16x16x32xf32, #tpu.memory_space<vmem>>, %arg2: memref<288x16xf32, #tpu.memory_space<vmem>>, %arg3: memref<16x32xf32, #tpu.memory_space<vmem>>, %arg4: memref<1x16x16x32xf32, #tpu.memory_space<vmem>>, %arg5: memref<1x18x18x32xf32, #tpu.memory_space<vmem>>, %arg6: memref<1x16x16x288xf32, #tpu.memory_space<vmem>>) attributes {dimension_semantics = [#tpu.dimension_semantics<parallel>], iteration_bounds = array<i64: 2>, scalar_prefetch = 0 : i64, scratch_operands = 2 : i64, tpu.core_type = #tpu.core_type<tc>, window_params = [{transform_indices = @transform_0, window_bounds = array<i64: 1, 16, 16, 32>}, {pipeline_mode = #tpu.pipeline_mode<synchronous>, transform_indices = @transform_1, window_bounds = array<i64: 288, 16>}, {pipeline_mode = #tpu.pipeline_mode<synchronous>, transform_indices = @transform_2, window_bounds = array<i64: 16, 32>}, {transform_indices = @transform_3, window_bounds = array<i64: 1, 16, 16, 32>}]} {
    %c0 = arith.constant 0 : index
    %c0_0 = arith.constant 0 : index
    %0 = vector.load %arg2[%c0, %c0_0] : memref<288x16xf32, #tpu.memory_space<vmem>>, vector<288x16xf32>
    %c0_1 = arith.constant 0 : index
    %c0_2 = arith.constant 0 : index
    %1 = vector.load %arg3[%c0_1, %c0_2] : memref<16x32xf32, #tpu.memory_space<vmem>>, vector<16x32xf32>
    %c0_3 = arith.constant 0 : index
    %c0_4 = arith.constant 0 : index
    %c0_5 = arith.constant 0 : index
    %c0_6 = arith.constant 0 : index
    %2 = vector.load %arg1[%c0_3, %c0_4, %c0_5, %c0_6] : memref<1x16x16x32xf32, #tpu.memory_space<vmem>>, vector<1x16x16x32xf32>
    %cst = arith.constant 0.000000e+00 : f32
    %3 = vector.broadcast %cst : f32 to vector<1x18x18x32xf32>
    %c0_7 = arith.constant 0 : index
    %c0_8 = arith.constant 0 : index
    %c0_9 = arith.constant 0 : index
    %c0_10 = arith.constant 0 : index
    %4 = vector.load %arg5[%c0_7, %c0_8, %c0_9, %c0_10] : memref<1x18x18x32xf32, #tpu.memory_space<vmem>>, vector<1x18x18x32xf32>
    tpu.vector_store %arg5[%c0_7, %c0_8, %c0_9, %c0_10], %3 {strides = array<i32>} : memref<1x18x18x32xf32, #tpu.memory_space<vmem>>, vector<1x18x18x32xf32>,
    %cst_11 = arith.constant 0.000000e+00 : f32
    %5 = vector.broadcast %cst_11 : f32 to vector<1x16x16x32xf32>
    %6 = arith.maximumf %2, %5 : vector<1x16x16x32xf32>
    %c0_12 = arith.constant 0 : index
    %c1 = arith.constant 1 : index
    %c1_13 = arith.constant 1 : index
    %c0_14 = arith.constant 0 : index
    %7 = vector.load %arg5[%c0_12, %c1, %c1_13, %c0_14] : memref<1x18x18x32xf32, #tpu.memory_space<vmem>>, vector<1x16x16x32xf32>
    tpu.vector_store %arg5[%c0_12, %c1, %c1_13, %c0_14], %6 {strides = array<i32>} : memref<1x18x18x32xf32, #tpu.memory_space<vmem>>, vector<1x16x16x32xf32>,
    %c0_15 = arith.constant 0 : index
    %c0_16 = arith.constant 0 : index
    %c0_17 = arith.constant 0 : index
    %c0_18 = arith.constant 0 : index
    %8 = vector.load %arg5[%c0_15, %c0_16, %c0_17, %c0_18] : memref<1x18x18x32xf32, #tpu.memory_space<vmem>>, vector<1x16x16x32xf32>
    %c0_19 = arith.constant 0 : index
    %c0_20 = arith.constant 0 : index
    %c0_21 = arith.constant 0 : index
    %c0_22 = arith.constant 0 : index
    %9 = vector.load %arg6[%c0_19, %c0_20, %c0_21, %c0_22] : memref<1x16x16x288xf32, #tpu.memory_space<vmem>>, vector<1x16x16x32xf32>
    tpu.vector_store %arg6[%c0_19, %c0_20, %c0_21, %c0_22], %8 {strides = array<i32>} : memref<1x16x16x288xf32, #tpu.memory_space<vmem>>, vector<1x16x16x32xf32>,
    %c0_23 = arith.constant 0 : index
    %c0_24 = arith.constant 0 : index
    %c1_25 = arith.constant 1 : index
    %c0_26 = arith.constant 0 : index
    %10 = vector.load %arg5[%c0_23, %c0_24, %c1_25, %c0_26] : memref<1x18x18x32xf32, #tpu.memory_space<vmem>>, vector<1x16x16x32xf32>
    %c0_27 = arith.constant 0 : index
    %c0_28 = arith.constant 0 : index
    %c0_29 = arith.constant 0 : index
    %c32 = arith.constant 32 : index
    %11 = vector.load %arg6[%c0_27, %c0_28, %c0_29, %c32] : memref<1x16x16x288xf32, #tpu.memory_space<vmem>>, vector<1x16x16x32xf32>
    tpu.vector_store %arg6[%c0_27, %c0_28, %c0_29, %c32], %10 {strides = array<i32>} : memref<1x16x16x288xf32, #tpu.memory_space<vmem>>, vector<1x16x16x32xf32>,
    %c0_30 = arith.constant 0 : index
    %c0_31 = arith.constant 0 : index
    %c2 = arith.constant 2 : index
    %c0_32 = arith.constant 0 : index
    %12 = vector.load %arg5[%c0_30, %c0_31, %c2, %c0_32] : memref<1x18x18x32xf32, #tpu.memory_space<vmem>>, vector<1x16x16x32xf32>
    %c0_33 = arith.constant 0 : index
    %c0_34 = arith.constant 0 : index
    %c0_35 = arith.constant 0 : index
    %c64 = arith.constant 64 : index
    %13 = vector.load %arg6[%c0_33, %c0_34, %c0_35, %c64] : memref<1x16x16x288xf32, #tpu.memory_space<vmem>>, vector<1x16x16x32xf32>
    tpu.vector_store %arg6[%c0_33, %c0_34, %c0_35, %c64], %12 {strides = array<i32>} : memref<1x16x16x288xf32, #tpu.memory_space<vmem>>, vector<1x16x16x32xf32>,
    %c0_36 = arith.constant 0 : index
    %c1_37 = arith.constant 1 : index
    %c0_38 = arith.constant 0 : index
    %c0_39 = arith.constant 0 : index
    %14 = vector.load %arg5[%c0_36, %c1_37, %c0_38, %c0_39] : memref<1x18x18x32xf32, #tpu.memory_space<vmem>>, vector<1x16x16x32xf32>
    %c0_40 = arith.constant 0 : index
    %c0_41 = arith.constant 0 : index
    %c0_42 = arith.constant 0 : index
    %c96 = arith.constant 96 : index
    %15 = vector.load %arg6[%c0_40, %c0_41, %c0_42, %c96] : memref<1x16x16x288xf32, #tpu.memory_space<vmem>>, vector<1x16x16x32xf32>
    tpu.vector_store %arg6[%c0_40, %c0_41, %c0_42, %c96], %14 {strides = array<i32>} : memref<1x16x16x288xf32, #tpu.memory_space<vmem>>, vector<1x16x16x32xf32>,
    %c0_43 = arith.constant 0 : index
    %c1_44 = arith.constant 1 : index
    %c1_45 = arith.constant 1 : index
    %c0_46 = arith.constant 0 : index
    %16 = vector.load %arg5[%c0_43, %c1_44, %c1_45, %c0_46] : memref<1x18x18x32xf32, #tpu.memory_space<vmem>>, vector<1x16x16x32xf32>
    %c0_47 = arith.constant 0 : index
    %c0_48 = arith.constant 0 : index
    %c0_49 = arith.constant 0 : index
    %c128 = arith.constant 128 : index
    %17 = vector.load %arg6[%c0_47, %c0_48, %c0_49, %c128] : memref<1x16x16x288xf32, #tpu.memory_space<vmem>>, vector<1x16x16x32xf32>
    tpu.vector_store %arg6[%c0_47, %c0_48, %c0_49, %c128], %16 {strides = array<i32>} : memref<1x16x16x288xf32, #tpu.memory_space<vmem>>, vector<1x16x16x32xf32>,
    %c0_50 = arith.constant 0 : index
    %c1_51 = arith.constant 1 : index
    %c2_52 = arith.constant 2 : index
    %c0_53 = arith.constant 0 : index
    %18 = vector.load %arg5[%c0_50, %c1_51, %c2_52, %c0_53] : memref<1x18x18x32xf32, #tpu.memory_space<vmem>>, vector<1x16x16x32xf32>
    %c0_54 = arith.constant 0 : index
    %c0_55 = arith.constant 0 : index
    %c0_56 = arith.constant 0 : index
    %c160 = arith.constant 160 : index
    %19 = vector.load %arg6[%c0_54, %c0_55, %c0_56, %c160] : memref<1x16x16x288xf32, #tpu.memory_space<vmem>>, vector<1x16x16x32xf32>
    tpu.vector_store %arg6[%c0_54, %c0_55, %c0_56, %c160], %18 {strides = array<i32>} : memref<1x16x16x288xf32, #tpu.memory_space<vmem>>, vector<1x16x16x32xf32>,
    %c0_57 = arith.constant 0 : index
    %c2_58 = arith.constant 2 : index
    %c0_59 = arith.constant 0 : index
    %c0_60 = arith.constant 0 : index
    %20 = vector.load %arg5[%c0_57, %c2_58, %c0_59, %c0_60] : memref<1x18x18x32xf32, #tpu.memory_space<vmem>>, vector<1x16x16x32xf32>
    %c0_61 = arith.constant 0 : index
    %c0_62 = arith.constant 0 : index
    %c0_63 = arith.constant 0 : index
    %c192 = arith.constant 192 : index
    %21 = vector.load %arg6[%c0_61, %c0_62, %c0_63, %c192] : memref<1x16x16x288xf32, #tpu.memory_space<vmem>>, vector<1x16x16x32xf32>
    tpu.vector_store %arg6[%c0_61, %c0_62, %c0_63, %c192], %20 {strides = array<i32>} : memref<1x16x16x288xf32, #tpu.memory_space<vmem>>, vector<1x16x16x32xf32>,
    %c0_64 = arith.constant 0 : index
    %c2_65 = arith.constant 2 : index
    %c1_66 = arith.constant 1 : index
    %c0_67 = arith.constant 0 : index
    %22 = vector.load %arg5[%c0_64, %c2_65, %c1_66, %c0_67] : memref<1x18x18x32xf32, #tpu.memory_space<vmem>>, vector<1x16x16x32xf32>
    %c0_68 = arith.constant 0 : index
    %c0_69 = arith.constant 0 : index
    %c0_70 = arith.constant 0 : index
    %c224 = arith.constant 224 : index
    %23 = vector.load %arg6[%c0_68, %c0_69, %c0_70, %c224] : memref<1x16x16x288xf32, #tpu.memory_space<vmem>>, vector<1x16x16x32xf32>
    tpu.vector_store %arg6[%c0_68, %c0_69, %c0_70, %c224], %22 {strides = array<i32>} : memref<1x16x16x288xf32, #tpu.memory_space<vmem>>, vector<1x16x16x32xf32>,
    %c0_71 = arith.constant 0 : index
    %c2_72 = arith.constant 2 : index
    %c2_73 = arith.constant 2 : index
    %c0_74 = arith.constant 0 : index
    %24 = vector.load %arg5[%c0_71, %c2_72, %c2_73, %c0_74] : memref<1x18x18x32xf32, #tpu.memory_space<vmem>>, vector<1x16x16x32xf32>
    %c0_75 = arith.constant 0 : index
    %c0_76 = arith.constant 0 : index
    %c0_77 = arith.constant 0 : index
    %c256 = arith.constant 256 : index
    %25 = vector.load %arg6[%c0_75, %c0_76, %c0_77, %c256] : memref<1x16x16x288xf32, #tpu.memory_space<vmem>>, vector<1x16x16x32xf32>
    tpu.vector_store %arg6[%c0_75, %c0_76, %c0_77, %c256], %24 {strides = array<i32>} : memref<1x16x16x288xf32, #tpu.memory_space<vmem>>, vector<1x16x16x32xf32>,
    %c0_78 = arith.constant 0 : index
    %c0_79 = arith.constant 0 : index
    %c0_80 = arith.constant 0 : index
    %c0_81 = arith.constant 0 : index
    %26 = vector.load %arg6[%c0_78, %c0_79, %c0_80, %c0_81] : memref<1x16x16x288xf32, #tpu.memory_space<vmem>>, vector<1x16x16x288xf32>
    %27 = vector.shape_cast %26 : vector<1x16x16x288xf32> to vector<256x288xf32>
    %cst_82 = arith.constant dense<0.000000e+00> : vector<256x16xf32>
    %28 = tpu.matmul %27, %0, %cst_82 {dimension_numbers = #tpu.dot_dimension_numbers<[1], [0], [0], [1], [0, 0, 1, 1], [], []>} : vector<256x288xf32>, vector<288x16xf32>, vector<256x16xf32> -> vector<256x16xf32>
    %cst_83 = arith.constant 0.000000e+00 : f32
    %29 = vector.broadcast %cst_83 : f32 to vector<256x16xf32>
    %30 = arith.maximumf %28, %29 : vector<256x16xf32>
    %cst_84 = arith.constant dense<0.000000e+00> : vector<256x32xf32>
    %31 = tpu.matmul %30, %1, %cst_84 {dimension_numbers = #tpu.dot_dimension_numbers<[1], [0], [0], [1], [0, 0, 1, 1], [], []>} : vector<256x16xf32>, vector<16x32xf32>, vector<256x32xf32> -> vector<256x32xf32>
    %32 = vector.shape_cast %31 : vector<256x32xf32> to vector<1x16x16x32xf32>
    %33 = arith.addf %2, %32 : vector<1x16x16x32xf32>
    %cst_85 = arith.constant 0.000000e+00 : f32
    %34 = vector.broadcast %cst_85 : f32 to vector<1x16x16x32xf32>
    %35 = arith.maximumf %33, %34 : vector<1x16x16x32xf32>
    %c0_86 = arith.constant 0 : index
    %c1_87 = arith.constant 1 : index
    %c1_88 = arith.constant 1 : index
    %c0_89 = arith.constant 0 : index
    %36 = vector.load %arg5[%c0_86, %c1_87, %c1_88, %c0_89] : memref<1x18x18x32xf32, #tpu.memory_space<vmem>>, vector<1x16x16x32xf32>
    tpu.vector_store %arg5[%c0_86, %c1_87, %c1_88, %c0_89], %35 {strides = array<i32>} : memref<1x18x18x32xf32, #tpu.memory_space<vmem>>, vector<1x16x16x32xf32>,
    %c0_90 = arith.constant 0 : index
    %c0_91 = arith.constant 0 : index
    %c0_92 = arith.constant 0 : index
    %c0_93 = arith.constant 0 : index
    %37 = vector.load %arg5[%c0_90, %c0_91, %c0_92, %c0_93] : memref<1x18x18x32xf32, #tpu.memory_space<vmem>>, vector<1x16x16x32xf32>
    %c0_94 = arith.constant 0 : index
    %c0_95 = arith.constant 0 : index
    %c0_96 = arith.constant 0 : index
    %c0_97 = arith.constant 0 : index
    %38 = vector.load %arg6[%c0_94, %c0_95, %c0_96, %c0_97] : memref<1x16x16x288xf32, #tpu.memory_space<vmem>>, vector<1x16x16x32xf32>
    tpu.vector_store %arg6[%c0_94, %c0_95, %c0_96, %c0_97], %37 {strides = array<i32>} : memref<1x16x16x288xf32, #tpu.memory_space<vmem>>, vector<1x16x16x32xf32>,
    %c0_98 = arith.constant 0 : index
    %c0_99 = arith.constant 0 : index
    %c1_100 = arith.constant 1 : index
    %c0_101 = arith.constant 0 : index
    %39 = vector.load %arg5[%c0_98, %c0_99, %c1_100, %c0_101] : memref<1x18x18x32xf32, #tpu.memory_space<vmem>>, vector<1x16x16x32xf32>
    %c0_102 = arith.constant 0 : index
    %c0_103 = arith.constant 0 : index
    %c0_104 = arith.constant 0 : index
    %c32_105 = arith.constant 32 : index
    %40 = vector.load %arg6[%c0_102, %c0_103, %c0_104, %c32_105] : memref<1x16x16x288xf32, #tpu.memory_space<vmem>>, vector<1x16x16x32xf32>
    tpu.vector_store %arg6[%c0_102, %c0_103, %c0_104, %c32_105], %39 {strides = array<i32>} : memref<1x16x16x288xf32, #tpu.memory_space<vmem>>, vector<1x16x16x32xf32>,
    %c0_106 = arith.constant 0 : index
    %c0_107 = arith.constant 0 : index
    %c2_108 = arith.constant 2 : index
    %c0_109 = arith.constant 0 : index
    %41 = vector.load %arg5[%c0_106, %c0_107, %c2_108, %c0_109] : memref<1x18x18x32xf32, #tpu.memory_space<vmem>>, vector<1x16x16x32xf32>
    %c0_110 = arith.constant 0 : index
    %c0_111 = arith.constant 0 : index
    %c0_112 = arith.constant 0 : index
    %c64_113 = arith.constant 64 : index
    %42 = vector.load %arg6[%c0_110, %c0_111, %c0_112, %c64_113] : memref<1x16x16x288xf32, #tpu.memory_space<vmem>>, vector<1x16x16x32xf32>
    tpu.vector_store %arg6[%c0_110, %c0_111, %c0_112, %c64_113], %41 {strides = array<i32>} : memref<1x16x16x288xf32, #tpu.memory_space<vmem>>, vector<1x16x16x32xf32>,
    %c0_114 = arith.constant 0 : index
    %c1_115 = arith.constant 1 : index
    %c0_116 = arith.constant 0 : index
    %c0_117 = arith.constant 0 : index
    %43 = vector.load %arg5[%c0_114, %c1_115, %c0_116, %c0_117] : memref<1x18x18x32xf32, #tpu.memory_space<vmem>>, vector<1x16x16x32xf32>
    %c0_118 = arith.constant 0 : index
    %c0_119 = arith.constant 0 : index
    %c0_120 = arith.constant 0 : index
    %c96_121 = arith.constant 96 : index
    %44 = vector.load %arg6[%c0_118, %c0_119, %c0_120, %c96_121] : memref<1x16x16x288xf32, #tpu.memory_space<vmem>>, vector<1x16x16x32xf32>
    tpu.vector_store %arg6[%c0_118, %c0_119, %c0_120, %c96_121], %43 {strides = array<i32>} : memref<1x16x16x288xf32, #tpu.memory_space<vmem>>, vector<1x16x16x32xf32>,
    %c0_122 = arith.constant 0 : index
    %c1_123 = arith.constant 1 : index
    %c1_124 = arith.constant 1 : index
    %c0_125 = arith.constant 0 : index
    %45 = vector.load %arg5[%c0_122, %c1_123, %c1_124, %c0_125] : memref<1x18x18x32xf32, #tpu.memory_space<vmem>>, vector<1x16x16x32xf32>
    %c0_126 = arith.constant 0 : index
    %c0_127 = arith.constant 0 : index
    %c0_128 = arith.constant 0 : index
    %c128_129 = arith.constant 128 : index
    %46 = vector.load %arg6[%c0_126, %c0_127, %c0_128, %c128_129] : memref<1x16x16x288xf32, #tpu.memory_space<vmem>>, vector<1x16x16x32xf32>
    tpu.vector_store %arg6[%c0_126, %c0_127, %c0_128, %c128_129], %45 {strides = array<i32>} : memref<1x16x16x288xf32, #tpu.memory_space<vmem>>, vector<1x16x16x32xf32>,
    %c0_130 = arith.constant 0 : index
    %c1_131 = arith.constant 1 : index
    %c2_132 = arith.constant 2 : index
    %c0_133 = arith.constant 0 : index
    %47 = vector.load %arg5[%c0_130, %c1_131, %c2_132, %c0_133] : memref<1x18x18x32xf32, #tpu.memory_space<vmem>>, vector<1x16x16x32xf32>
    %c0_134 = arith.constant 0 : index
    %c0_135 = arith.constant 0 : index
    %c0_136 = arith.constant 0 : index
    %c160_137 = arith.constant 160 : index
    %48 = vector.load %arg6[%c0_134, %c0_135, %c0_136, %c160_137] : memref<1x16x16x288xf32, #tpu.memory_space<vmem>>, vector<1x16x16x32xf32>
    tpu.vector_store %arg6[%c0_134, %c0_135, %c0_136, %c160_137], %47 {strides = array<i32>} : memref<1x16x16x288xf32, #tpu.memory_space<vmem>>, vector<1x16x16x32xf32>,
    %c0_138 = arith.constant 0 : index
    %c2_139 = arith.constant 2 : index
    %c0_140 = arith.constant 0 : index
    %c0_141 = arith.constant 0 : index
    %49 = vector.load %arg5[%c0_138, %c2_139, %c0_140, %c0_141] : memref<1x18x18x32xf32, #tpu.memory_space<vmem>>, vector<1x16x16x32xf32>
    %c0_142 = arith.constant 0 : index
    %c0_143 = arith.constant 0 : index
    %c0_144 = arith.constant 0 : index
    %c192_145 = arith.constant 192 : index
    %50 = vector.load %arg6[%c0_142, %c0_143, %c0_144, %c192_145] : memref<1x16x16x288xf32, #tpu.memory_space<vmem>>, vector<1x16x16x32xf32>
    tpu.vector_store %arg6[%c0_142, %c0_143, %c0_144, %c192_145], %49 {strides = array<i32>} : memref<1x16x16x288xf32, #tpu.memory_space<vmem>>, vector<1x16x16x32xf32>,
    %c0_146 = arith.constant 0 : index
    %c2_147 = arith.constant 2 : index
    %c1_148 = arith.constant 1 : index
    %c0_149 = arith.constant 0 : index
    %51 = vector.load %arg5[%c0_146, %c2_147, %c1_148, %c0_149] : memref<1x18x18x32xf32, #tpu.memory_space<vmem>>, vector<1x16x16x32xf32>
    %c0_150 = arith.constant 0 : index
    %c0_151 = arith.constant 0 : index
    %c0_152 = arith.constant 0 : index
    %c224_153 = arith.constant 224 : index
    %52 = vector.load %arg6[%c0_150, %c0_151, %c0_152, %c224_153] : memref<1x16x16x288xf32, #tpu.memory_space<vmem>>, vector<1x16x16x32xf32>
    tpu.vector_store %arg6[%c0_150, %c0_151, %c0_152, %c224_153], %51 {strides = array<i32>} : memref<1x16x16x288xf32, #tpu.memory_space<vmem>>, vector<1x16x16x32xf32>,
    %c0_154 = arith.constant 0 : index
    %c2_155 = arith.constant 2 : index
    %c2_156 = arith.constant 2 : index
    %c0_157 = arith.constant 0 : index
    %53 = vector.load %arg5[%c0_154, %c2_155, %c2_156, %c0_157] : memref<1x18x18x32xf32, #tpu.memory_space<vmem>>, vector<1x16x16x32xf32>
    %c0_158 = arith.constant 0 : index
    %c0_159 = arith.constant 0 : index
    %c0_160 = arith.constant 0 : index
    %c256_161 = arith.constant 256 : index
    %54 = vector.load %arg6[%c0_158, %c0_159, %c0_160, %c256_161] : memref<1x16x16x288xf32, #tpu.memory_space<vmem>>, vector<1x16x16x32xf32>
    tpu.vector_store %arg6[%c0_158, %c0_159, %c0_160, %c256_161], %53 {strides = array<i32>} : memref<1x16x16x288xf32, #tpu.memory_space<vmem>>, vector<1x16x16x32xf32>,
    %c0_162 = arith.constant 0 : index
    %c0_163 = arith.constant 0 : index
    %c0_164 = arith.constant 0 : index
    %c0_165 = arith.constant 0 : index
    %55 = vector.load %arg6[%c0_162, %c0_163, %c0_164, %c0_165] : memref<1x16x16x288xf32, #tpu.memory_space<vmem>>, vector<1x16x16x288xf32>
    %56 = vector.shape_cast %55 : vector<1x16x16x288xf32> to vector<256x288xf32>
    %cst_166 = arith.constant dense<0.000000e+00> : vector<256x16xf32>
    %57 = tpu.matmul %56, %0, %cst_166 {dimension_numbers = #tpu.dot_dimension_numbers<[1], [0], [0], [1], [0, 0, 1, 1], [], []>} : vector<256x288xf32>, vector<288x16xf32>, vector<256x16xf32> -> vector<256x16xf32>
    %cst_167 = arith.constant 0.000000e+00 : f32
    %58 = vector.broadcast %cst_167 : f32 to vector<256x16xf32>
    %59 = arith.maximumf %57, %58 : vector<256x16xf32>
    %cst_168 = arith.constant dense<0.000000e+00> : vector<256x32xf32>
    %60 = tpu.matmul %59, %1, %cst_168 {dimension_numbers = #tpu.dot_dimension_numbers<[1], [0], [0], [1], [0, 0, 1, 1], [], []>} : vector<256x16xf32>, vector<16x32xf32>, vector<256x32xf32> -> vector<256x32xf32>
    %61 = vector.shape_cast %60 : vector<256x32xf32> to vector<1x16x16x32xf32>
    %62 = arith.addf %33, %61 : vector<1x16x16x32xf32>
    %cst_169 = arith.constant 0.000000e+00 : f32
    %63 = vector.broadcast %cst_169 : f32 to vector<1x16x16x32xf32>
    %64 = arith.maximumf %62, %63 : vector<1x16x16x32xf32>
    %c0_170 = arith.constant 0 : index
    %c0_171 = arith.constant 0 : index
    %c0_172 = arith.constant 0 : index
    %c0_173 = arith.constant 0 : index
    %65 = vector.load %arg4[%c0_170, %c0_171, %c0_172, %c0_173] : memref<1x16x16x32xf32, #tpu.memory_space<vmem>>, vector<1x16x16x32xf32>
    tpu.vector_store %arg4[%c0_170, %c0_171, %c0_172, %c0_173], %64 {strides = array<i32>} : memref<1x16x16x32xf32, #tpu.memory_space<vmem>>, vector<1x16x16x32xf32>,
    return
  }
  func.func @transform_0(%arg0: i32) -> (i32, i32, i32, i32) {
    %c0_i32 = arith.constant 0 : i32
    %c0_i32_0 = arith.constant 0 : i32
    %c0_i32_1 = arith.constant 0 : i32
    %c0_i32_2 = arith.constant 0 : i32
    return %arg0, %c0_i32, %c0_i32_0, %c0_i32_1 : i32, i32, i32, i32
  }
  func.func @transform_1(%arg0: i32) -> (i32, i32) {
    %c0_i32 = arith.constant 0 : i32
    %c0_i32_0 = arith.constant 0 : i32
    %c0_i32_1 = arith.constant 0 : i32
    return %c0_i32, %c0_i32_0 : i32, i32
  }
  func.func @transform_2(%arg0: i32) -> (i32, i32) {
    %c0_i32 = arith.constant 0 : i32
    %c0_i32_0 = arith.constant 0 : i32
    %c0_i32_1 = arith.constant 0 : i32
    return %c0_i32, %c0_i32_0 : i32, i32
  }
  func.func @transform_3(%arg0: i32) -> (i32, i32, i32, i32) {
    %c0_i32 = arith.constant 0 : i32
    %c0_i32_0 = arith.constant 0 : i32
    %c0_i32_1 = arith.constant 0 : i32
    %c0_i32_2 = arith.constant 0 : i32
    return %arg0, %c0_i32, %c0_i32_0, %c0_i32_1 : i32, i32, i32, i32
  }
}

</mosaic_0001>

<llo_original>
// kernel: residual_stack_nchw.1
$region0: #{residual_stack_nchw.1}
  #allocation0 [shape = 'u32[]', space=smem, size = 0x4, offset = 0x4, fixed_abs, tag = 'smem constant byte address 0x4 - core index']
  #allocation1 [shape = 'u32[144,128]{1,0:T(1,128)}', space=vmem, size = 0x12000, scoped, tag = 'internal scratch']
  #allocation2 [shape = 'f32[1,18,18,32]{3,2,1,0:T(8,128)}', space=vmem, size = 0x36000, scoped, tag = 'scratch operand']
  #allocation3 [shape = 'f32[1,16,16,288]{3,2,1,0:T(8,128)}', space=vmem, size = 0x60000, scoped, tag = 'scratch operand']
  %s0 = inlined_call_operand.hbm [shape: f32[2,16,16,32], index: 0, kind: input, shape index: {}]
  %s1 = inlined_call_operand.vmem [shape: f32[288,16], index: 1, kind: input, shape index: {}]
  %s2 = inlined_call_operand.vmem [shape: f32[16,32], index: 2, kind: input, shape index: {}]
  %s3 = inlined_call_operand.hbm [shape: f32[2,16,16,32], index: 3, kind: output, shape index: {}]
  %s4 = sld [smem:[#allocation0]]
  $region49: #{residual_stack_nchw.1} parent=0
    _
  %s6 = ssub.s32 1, %s4
  %s7 = scalar_select 0, %s6, %s4
  $region1: #{residual_stack_nchw.1} parent=0
    #allocation4 [shape = 'u8[262144]{0}', space=vmem, size = 0x40000, scoped, tag = 'input window, operand 0']
    #allocation5 [shape = 's32[2]{0}', space=sflag, size = 0x8, scoped, tag = 'scoped memory for residual_stack_nchw.1']
    #allocation6 [shape = 's32[2]{0}', space=sflag, size = 0x8, scoped, tag = 'scoped memory for residual_stack_nchw.1']
    #allocation7 [shape = 'u8[262144]{0}', space=vmem, size = 0x40000, scoped, tag = 'output window, operand 0']
    %8 = vsyncpa [#allocation5], 0
    %s9 = scalar_lea.sflag [#allocation5], 1
    %10 = vsyncpa %s9, 0
    %11 = vsyncpa [#allocation6], 0
    %s12 = scalar_lea.sflag [#allocation6], 1
    %13 = vsyncpa %s12, 0
    loop: start=0, step=1, limit=4
    $region2: #{residual_stack_nchw.1} parent=1 // loop_pre_header
      _
    $region3: #{residual_stack_nchw.1} parent=1 // loop_header
      %s15 = sphi 0, %s19
      %p16 = scmp.ge.s32.totalorder %s15, 4
      %s25 = sphi 0, %s27
      %s28 = sphi 0, %s25
      %s29 = sphi 0, %s28
      %s45 = sphi 0, %s29
      %s49 = sphi 0, %s49
      %s51 = sphi 0, %s49
      %s52 = sphi 0, %s51
      %s66 = sphi 0, %s52
      %s70 = sphi 0, %s70
      %s72 = sphi 0, %s70
      %s73 = sphi 0, %s72
      %s87 = sphi 0, %s73
      %s93 = sphi 0, %s95
      %s96 = sphi 0, %s93
      %s97 = sphi 0, %s96
      %s113 = sphi 0, %s97
    $region4: #{residual_stack_nchw.1} parent=1 // loop_header_branch
      %18 = sbr.rel (%p16) target = $region8
    $region5: #{residual_stack_nchw.1} parent=1 // loop_body
      %s20 = ssub.s32 %s15, 1
      %s21 = ssub.s32 %s15, 2
      %s22 = sadd.s32 %s15, 1
      %s23 = ssub.s32 %s15, %s22
      %p24 = scmp.eq.s32.totalorder %s23, 0
      %s26 = sadd.s32 %s25, 1
      %s27 = scalar_select %p24, %s25, %s26
      %p30 = pneg %p24
      %p31 = scmp.eq.s32.totalorder %s15, 1
      %p32 = por %p30, %p31
      %p33 = scmp.ne.s32.totalorder %s25, %s28
      %p34 = scmp.eq.s32.totalorder %s15, 0
      %p35 = por %p33, %p34
      %p36 = scmp.ne.s32.totalorder %s25, %s28
      %p37 = scmp.eq.s32.totalorder %s20, 1
      %p38 = por %p36, %p37
      %p39 = scmp.ne.s32.totalorder %s28, %s29
      %p40 = scmp.eq.s32.totalorder %s20, 0
      %p41 = por %p39, %p40
      %p42 = scmp.ne.s32.totalorder %s28, %s29
      %p43 = scmp.eq.s32.totalorder %s21, 1
      %p44 = por %p42, %p43
      %p46 = scmp.ne.s32.totalorder %s29, %s45
      %p47 = scmp.eq.s32.totalorder %s21, 0
      %p48 = por %p46, %p47
      %s50 = sadd.s32 %s49, 1
      %p53 = scmp.eq.s32.totalorder %s15, 1
      %p54 = scmp.ne.s32.totalorder %s49, %s51
      %p55 = scmp.eq.s32.totalorder %s15, 0
      %p56 = por %p54, %p55
      %p57 = scmp.ne.s32.totalorder %s49, %s51
      %p58 = scmp.eq.s32.totalorder %s20, 1
      %p59 = por %p57, %p58
      %p60 = scmp.ne.s32.totalorder %s51, %s52
      %p61 = scmp.eq.s32.totalorder %s20, 0
      %p62 = por %p60, %p61
      %p63 = scmp.ne.s32.totalorder %s51, %s52
      %p64 = scmp.eq.s32.totalorder %s21, 1
      %p65 = por %p63, %p64
      %p67 = scmp.ne.s32.totalorder %s52, %s66
      %p68 = scmp.eq.s32.totalorder %s21, 0
      %p69 = por %p67, %p68
      %s71 = sadd.s32 %s70, 1
      %p74 = scmp.eq.s32.totalorder %s15, 1
      %p75 = scmp.ne.s32.totalorder %s70, %s72
      %p76 = scmp.eq.s32.totalorder %s15, 0
      %p77 = por %p75, %p76
      %p78 = scmp.ne.s32.totalorder %s70, %s72
      %p79 = scmp.eq.s32.totalorder %s20, 1
      %p80 = por %p78, %p79
      %p81 = scmp.ne.s32.totalorder %s72, %s73
      %p82 = scmp.eq.s32.totalorder %s20, 0
      %p83 = por %p81, %p82
      %p84 = scmp.ne.s32.totalorder %s72, %s73
      %p85 = scmp.eq.s32.totalorder %s21, 1
      %p86 = por %p84, %p85
      %p88 = scmp.ne.s32.totalorder %s73, %s87
      %p89 = scmp.eq.s32.totalorder %s21, 0
      %p90 = por %p88, %p89
      %s91 = ssub.s32 %s15, %s22
      %p92 = scmp.eq.s32.totalorder %s91, 0
      %s94 = sadd.s32 %s93, 1
      %s95 = scalar_select %p92, %s93, %s94
      %p98 = pneg %p92
      %p99 = scmp.eq.s32.totalorder %s15, 1
      %p100 = por %p98, %p99
      %p101 = scmp.ne.s32.totalorder %s93, %s96
      %p102 = scmp.eq.s32.totalorder %s15, 0
      %p103 = por %p101, %p102
      %p104 = scmp.ne.s32.totalorder %s93, %s96
      %p105 = scmp.eq.s32.totalorder %s20, 1
      %p106 = por %p104, %p105
      %p107 = scmp.ne.s32.totalorder %s96, %s97
      %p108 = scmp.eq.s32.totalorder %s20, 0
      %p109 = por %p107, %p108
      %p110 = scmp.ne.s32.totalorder %s96, %s97
      %p111 = scmp.eq.s32.totalorder %s21, 1
      %p112 = por %p110, %p111
      %p114 = scmp.ne.s32.totalorder %s97, %s113
      %p115 = scmp.eq.s32.totalorder %s21, 0
      %p116 = por %p114, %p115
      %p117 = scmp.le.s32.totalorder 1, %s15
      %p118 = scmp.lt.s32.totalorder %s15, 3
      %p119 = pnand %p117, %p118
      %p120 = pneg %p119
      // Predicated region
      $region9: #{residual_stack_nchw.1} parent=5 // pred_check
        _
      $region10: #{residual_stack_nchw.1} parent=5 // pred_check_branch
        %122 = sbr.rel (%p119) target = $region12
      $region11: #{residual_stack_nchw.1} parent=5 // pred_region
        %s123 = ssub.s32 %s15, 1
        // Predicated region
        $region13: #{residual_stack_nchw.1} parent=11 // pred_check
          %p124 = pneg %p62
        $region14: #{residual_stack_nchw.1} parent=11 // pred_check_branch
          %126 = sbr.rel (%p124) target = $region16
        $region15: #{residual_stack_nchw.1} parent=11 // pred_region
          _
        $region16: #{residual_stack_nchw.1} parent=11 // pred_fallthru
          _
        // Predicated region
        $region17: #{residual_stack_nchw.1} parent=11 // pred_check
          %p127 = pneg %p83
        $region18: #{residual_stack_nchw.1} parent=11 // pred_check_branch
          %129 = sbr.rel (%p127) target = $region20
        $region19: #{residual_stack_nchw.1} parent=11 // pred_region
          _
        $region20: #{residual_stack_nchw.1} parent=11 // pred_fallthru
          _
      $region12: #{residual_stack_nchw.1} parent=5 // pred_fallthru
        _
      %p130 = scmp.lt.s32.totalorder %s15, 2
      // Predicated region
      $region21: #{residual_stack_nchw.1} parent=5 // pred_check
        %p131 = pneg %p130
      $region22: #{residual_stack_nchw.1} parent=5 // pred_check_branch
        %133 = sbr.rel (%p131) target = $region24
      $region23: #{residual_stack_nchw.1} parent=5 // pred_region
        // Predicated region
        $region25: #{residual_stack_nchw.1} parent=23 // pred_check
          %p134 = pneg %p35
        $region26: #{residual_stack_nchw.1} parent=23 // pred_check_branch
          %136 = sbr.rel (%p134) target = $region28
        $region27: #{residual_stack_nchw.1} parent=23 // pred_region
          %s137 = sand.u32 %s25, 1
          %s138 = scalar_lea.sflag [#allocation5], %s137
          %s139 = sand.u32 %s25, 1
          %s140 = smul.addr %s139, 256
          %s141 = scalar_lea.vmem [#allocation4], %s140
          %s143 = ssub.s32 4096, 4096
          %144 = vsyncadd %s138, %s143
          %s145 = smul.addr %s15, 32
          %s146 = smul.addr %s145, 128
          %s147 = scalar_lea.hbm %s0, %s146
          %s148 = sshll.u32 %s141, 4
          %s149 = int_to_ptr.vmem [resolvable:$true] %s148
          %154 = dma.hbm_to_vmem [thread:$0]  %s147, 4096, %s149, %s138, 128, 128, 8
        $region28: #{residual_stack_nchw.1} parent=23 // pred_fallthru
          _
      $region24: #{residual_stack_nchw.1} parent=5 // pred_fallthru
        _
      %p155 = scmp.le.s32.totalorder 1, %s15
      %p156 = scmp.lt.s32.totalorder %s15, 3
      %p157 = pnand %p155, %p156
      %p158 = pneg %p157
      // Predicated region
      $region29: #{residual_stack_nchw.1} parent=5 // pred_check
        _
      $region30: #{residual_stack_nchw.1} parent=5 // pred_check_branch
        %160 = sbr.rel (%p157) target = $region32
      $region31: #{residual_stack_nchw.1} parent=5 // pred_region
        %s161 = ssub.s32 %s15, 1
        %s162 = sand.u32 %s28, 1
        %s163 = scalar_lea.sflag [#allocation5], %s162
        %s164 = sand.u32 %s28, 1
        %s165 = smul.addr %s164, 256
        %s166 = scalar_lea.vmem [#allocation4], %s165
        // Predicated region
        $region33: #{residual_stack_nchw.1} parent=31 // pred_check
          %p167 = pneg %p41
        $region34: #{residual_stack_nchw.1} parent=31 // pred_check_branch
          %169 = sbr.rel (%p167) target = $region36
        $region35: #{residual_stack_nchw.1} parent=31 // pred_region
          %170 = dma.done %s163, 4096
        $region36: #{residual_stack_nchw.1} parent=31 // pred_fallthru
          _
        %s171 = sand.u32 %s28, 1
        %s172 = scalar_lea.sflag [#allocation5], %s171
        %s173 = sand.u32 %s28, 1
        %s174 = smul.addr %s173, 256
        %s175 = scalar_lea.vmem [#allocation4], %s174
        %p176 = pneg %p41
        %p177 = pneg %p38
        %p178 = pneg %p62
        %p179 = pneg %p59
        %p180 = pneg %p83
        %p181 = pneg %p80
        %p182 = pneg %p109
        %p183 = pneg %p106
        %s184 = sand.u32 %s96, 1
        %s185 = scalar_lea.sflag [#allocation6], %s184
        %s186 = sand.u32 %s96, 1
        %s187 = smul.addr %s186, 256
        %s188 = scalar_lea.vmem [#allocation7], %s187
        %v189 = vld [vmem:[%s1] sm:$0xff]
        %v190 = vld [vmem:[%s1 + $0x8] sm:$0xff]
        %v191 = vld [vmem:[%s1 + $0x10] sm:$0xff]
        %v192 = vld [vmem:[%s1 + $0x18] sm:$0xff]
        %v193 = vld [vmem:[%s1 + $0x20] sm:$0xff]
        %v194 = vld [vmem:[%s1 + $0x28] sm:$0xff]
        %v195 = vld [vmem:[%s1 + $0x30] sm:$0xff]
        %v196 = vld [vmem:[%s1 + $0x38] sm:$0xff]
        %v197 = vld [vmem:[%s1 + $0x40] sm:$0xff]
        %v198 = vld [vmem:[%s1 + $0x48] sm:$0xff]
        %v199 = vld [vmem:[%s1 + $0x50] sm:$0xff]
        %v200 = vld [vmem:[%s1 + $0x58] sm:$0xff]
        %v201 = vld [vmem:[%s1 + $0x60] sm:$0xff]
        %v202 = vld [vmem:[%s1 + $0x68] sm:$0xff]
        %v203 = vld [vmem:[%s1 + $0x70] sm:$0xff]
        %v204 = vld [vmem:[%s1 + $0x78] sm:$0xff]
        %v205 = vld [vmem:[%s1 + $0x80] sm:$0xff]
        %v206 = vld [vmem:[%s1 + $0x88] sm:$0xff]
        %v207 = vld [vmem:[%s1 + $0x90] sm:$0xff]
        %v208 = vld [vmem:[%s1 + $0x98] sm:$0xff]
        %v209 = vld [vmem:[%s1 + $0xa0] sm:$0xff]
        %v210 = vld [vmem:[%s1 + $0xa8] sm:$0xff]
        %v211 = vld [vmem:[%s1 + $0xb0] sm:$0xff]
        %v212 = vld [vmem:[%s1 + $0xb8] sm:$0xff]
        %v213 = vld [vmem:[%s1 + $0xc0] sm:$0xff]
        %v214 = vld [vmem:[%s1 + $0xc8] sm:$0xff]
        %v215 = vld [vmem:[%s1 + $0xd0] sm:$0xff]
        %v216 = vld [vmem:[%s1 + $0xd8] sm:$0xff]
        %v217 = vld [vmem:[%s1 + $0xe0] sm:$0xff]
        %v218 = vld [vmem:[%s1 + $0xe8] sm:$0xff]
        %v219 = vld [vmem:[%s1 + $0xf0] sm:$0xff]
        %v220 = vld [vmem:[%s1 + $0xf8] sm:$0xff]
        %v221 = vld [vmem:[%s1 + $0x100] sm:$0xff]
        %v222 = vld [vmem:[%s1 + $0x108] sm:$0xff]
        %v223 = vld [vmem:[%s1 + $0x110] sm:$0xff]
        %v224 = vld [vmem:[%s1 + $0x118] sm:$0xff]
        %v225 = vld [vmem:[%s2] sm:$0xff]
        %v226 = vld [vmem:[%s2 + $0x8] sm:$0xff]
        %v227 = vld [vmem:[%s166] sm:$0xff]
        %v228 = vld [vmem:[%s166 + $0x8] sm:$0xff]
        %v229 = vld [vmem:[%s166 + $0x10] sm:$0xff]
        %v230 = vld [vmem:[%s166 + $0x18] sm:$0xff]
        %v231 = vld [vmem:[%s166 + $0x20] sm:$0xff]
        %v232 = vld [vmem:[%s166 + $0x28] sm:$0xff]
        %v233 = vld [vmem:[%s166 + $0x30] sm:$0xff]
        %v234 = vld [vmem:[%s166 + $0x38] sm:$0xff]
        %v235 = vld [vmem:[%s166 + $0x40] sm:$0xff]
        %v236 = vld [vmem:[%s166 + $0x48] sm:$0xff]
        %v237 = vld [vmem:[%s166 + $0x50] sm:$0xff]
        %v238 = vld [vmem:[%s166 + $0x58] sm:$0xff]
        %v239 = vld [vmem:[%s166 + $0x60] sm:$0xff]
        %v240 = vld [vmem:[%s166 + $0x68] sm:$0xff]
        %v241 = vld [vmem:[%s166 + $0x70] sm:$0xff]
        %v242 = vld [vmem:[%s166 + $0x78] sm:$0xff]
        %v243 = vld [vmem:[%s166 + $0x80] sm:$0xff]
        %v244 = vld [vmem:[%s166 + $0x88] sm:$0xff]
        %v245 = vld [vmem:[%s166 + $0x90] sm:$0xff]
        %v246 = vld [vmem:[%s166 + $0x98] sm:$0xff]
        %v247 = vld [vmem:[%s166 + $0xa0] sm:$0xff]
        %v248 = vld [vmem:[%s166 + $0xa8] sm:$0xff]
        %v249 = vld [vmem:[%s166 + $0xb0] sm:$0xff]
        %v250 = vld [vmem:[%s166 + $0xb8] sm:$0xff]
        %v251 = vld [vmem:[%s166 + $0xc0] sm:$0xff]
        %v252 = vld [vmem:[%s166 + $0xc8] sm:$0xff]
        %v253 = vld [vmem:[%s166 + $0xd0] sm:$0xff]
        %v254 = vld [vmem:[%s166 + $0xd8] sm:$0xff]
        %v255 = vld [vmem:[%s166 + $0xe0] sm:$0xff]
        %v256 = vld [vmem:[%s166 + $0xe8] sm:$0xff]
        %v257 = vld [vmem:[%s166 + $0xf0] sm:$0xff]
        %v258 = vld [vmem:[%s166 + $0xf8] sm:$0xff]
        %vm259 = vcmask 261120
        %260 = vst.msk [vmem:[#allocation2] sm:$0xff] %vm259, 0.0
        %261 = vst.msk [vmem:[#allocation2 + $0x8] sm:$0xff] %vm259, 0.0
        %vm262 = vcmask 254976
        %263 = vst.msk [vmem:[#allocation2 + $0x10] sm:$0x3] %vm262, 0.0
        %264 = vst.msk [vmem:[#allocation2 + $0x18] sm:$0xff] %vm259, 0.0
        %265 = vst.msk [vmem:[#allocation2 + $0x20] sm:$0xff] %vm259, 0.0
        %266 = vst.msk [vmem:[#allocation2 + $0x28] sm:$0x3] %vm262, 0.0
        %267 = vst.msk [vmem:[#allocation2 + $0x30] sm:$0xff] %vm259, 0.0
        %268 = vst.msk [vmem:[#allocation2 + $0x38] sm:$0xff] %vm259, 0.0
        %269 = vst.msk [vmem:[#allocation2 + $0x40] sm:$0x3] %vm262, 0.0
        %270 = vst.msk [vmem:[#allocation2 + $0x48] sm:$0xff] %vm259, 0.0
        %271 = vst.msk [vmem:[#allocation2 + $0x50] sm:$0xff] %vm259, 0.0
        %272 = vst.msk [vmem:[#allocation2 + $0x58] sm:$0x3] %vm262, 0.0
        %273 = vst.msk [vmem:[#allocation2 + $0x60] sm:$0xff] %vm259, 0.0
        %274 = vst.msk [vmem:[#allocation2 + $0x68] sm:$0xff] %vm259, 0.0
        %275 = vst.msk [vmem:[#allocation2 + $0x70] sm:$0x3] %vm262, 0.0
        %276 = vst.msk [vmem:[#allocation2 + $0x78] sm:$0xff] %vm259, 0.0
        %277 = vst.msk [vmem:[#allocation2 + $0x80] sm:$0xff] %vm259, 0.0
        %278 = vst.msk [vmem:[#allocation2 + $0x88] sm:$0x3] %vm262, 0.0
        %279 = vst.msk [vmem:[#allocation2 + $0x90] sm:$0xff] %vm259, 0.0
        %280 = vst.msk [vmem:[#allocation2 + $0x98] sm:$0xff] %vm259, 0.0
        %281 = vst.msk [vmem:[#allocation2 + $0xa0] sm:$0x3] %vm262, 0.0
        %282 = vst.msk [vmem:[#allocation2 + $0xa8] sm:$0xff] %vm259, 0.0
        %283 = vst.msk [vmem:[#allocation2 + $0xb0] sm:$0xff] %vm259, 0.0
        %284 = vst.msk [vmem:[#allocation2 + $0xb8] sm:$0x3] %vm262, 0.0
        %285 = vst.msk [vmem:[#allocation2 + $0xc0] sm:$0xff] %vm259, 0.0
        %286 = vst.msk [vmem:[#allocation2 + $0xc8] sm:$0xff] %vm259, 0.0
        %287 = vst.msk [vmem:[#allocation2 + $0xd0] sm:$0x3] %vm262, 0.0
        %288 = vst.msk [vmem:[#allocation2 + $0xd8] sm:$0xff] %vm259, 0.0
        %289 = vst.msk [vmem:[#allocation2 + $0xe0] sm:$0xff] %vm259, 0.0
        %290 = vst.msk [vmem:[#allocation2 + $0xe8] sm:$0x3] %vm262, 0.0
        %291 = vst.msk [vmem:[#allocation2 + $0xf0] sm:$0xff] %vm259, 0.0
        %292 = vst.msk [vmem:[#allocation2 + $0xf8] sm:$0xff] %vm259, 0.0
        %293 = vst.msk [vmem:[#allocation2 + $0x100] sm:$0x3] %vm262, 0.0
        %294 = vst.msk [vmem:[#allocation2 + $0x108] sm:$0xff] %vm259, 0.0
        %295 = vst.msk [vmem:[#allocation2 + $0x110] sm:$0xff] %vm259, 0.0
        %296 = vst.msk [vmem:[#allocation2 + $0x118] sm:$0x3] %vm262, 0.0
        %297 = vst.msk [vmem:[#allocation2 + $0x120] sm:$0xff] %vm259, 0.0
        %298 = vst.msk [vmem:[#allocation2 + $0x128] sm:$0xff] %vm259, 0.0
        %299 = vst.msk [vmem:[#allocation2 + $0x130] sm:$0x3] %vm262, 0.0
        %300 = vst.msk [vmem:[#allocation2 + $0x138] sm:$0xff] %vm259, 0.0
        %301 = vst.msk [vmem:[#allocation2 + $0x140] sm:$0xff] %vm259, 0.0
        %302 = vst.msk [vmem:[#allocation2 + $0x148] sm:$0x3] %vm262, 0.0
        %303 = vst.msk [vmem:[#allocation2 + $0x150] sm:$0xff] %vm259, 0.0
        %304 = vst.msk [vmem:[#allocation2 + $0x158] sm:$0xff] %vm259, 0.0
        %305 = vst.msk [vmem:[#allocation2 + $0x160] sm:$0x3] %vm262, 0.0
        %306 = vst.msk [vmem:[#allocation2 + $0x168] sm:$0xff] %vm259, 0.0
        %307 = vst.msk [vmem:[#allocation2 + $0x170] sm:$0xff] %vm259, 0.0
        %308 = vst.msk [vmem:[#allocation2 + $0x178] sm:$0x3] %vm262, 0.0
        %309 = vst.msk [vmem:[#allocation2 + $0x180] sm:$0xff] %vm259, 0.0
        %310 = vst.msk [vmem:[#allocation2 + $0x188] sm:$0xff] %vm259, 0.0
        %311 = vst.msk [vmem:[#allocation2 + $0x190] sm:$0x3] %vm262, 0.0
        %312 = vst.msk [vmem:[#allocation2 + $0x198] sm:$0xff] %vm259, 0.0
        %313 = vst.msk [vmem:[#allocation2 + $0x1a0] sm:$0xff] %vm259, 0.0
        %314 = vst.msk [vmem:[#allocation2 + $0x1a8] sm:$0x3] %vm262, 0.0
        %v315 = vmax.f32 %v227, 0.0
        %v316 = vmax.f32 %v228, 0.0
        %v317 = vmax.f32 %v229, 0.0
        %v318 = vmax.f32 %v230, 0.0
        %v319 = vmax.f32 %v231, 0.0
        %v320 = vmax.f32 %v232, 0.0
        %v321 = vmax.f32 %v233, 0.0
        %v322 = vmax.f32 %v234, 0.0
        %v323 = vmax.f32 %v235, 0.0
        %v324 = vmax.f32 %v236, 0.0
        %v325 = vmax.f32 %v237, 0.0
        %v326 = vmax.f32 %v238, 0.0
        %v327 = vmax.f32 %v239, 0.0
        %v328 = vmax.f32 %v240, 0.0
        %v329 = vmax.f32 %v241, 0.0
        %v330 = vmax.f32 %v242, 0.0
        %v331 = vmax.f32 %v243, 0.0
        %v332 = vmax.f32 %v244, 0.0
        %v333 = vmax.f32 %v245, 0.0
        %v334 = vmax.f32 %v246, 0.0
        %v335 = vmax.f32 %v247, 0.0
        %v336 = vmax.f32 %v248, 0.0
        %v337 = vmax.f32 %v249, 0.0
        %v338 = vmax.f32 %v250, 0.0
        %v339 = vmax.f32 %v251, 0.0
        %v340 = vmax.f32 %v252, 0.0
        %v341 = vmax.f32 %v253, 0.0
        %v342 = vmax.f32 %v254, 0.0
        %v343 = vmax.f32 %v255, 0.0
        %v344 = vmax.f32 %v256, 0.0
        %v345 = vmax.f32 %v257, 0.0
        %v346 = vmax.f32 %v258, 0.0
        %s347 = scalar_lea.vmem [#allocation2], 24
        %348 = vst.msk [vmem:[%s347 + $0x1] sm:$0xff] %vm259, %v315
        %349 = vst.msk [vmem:[%s347 + $0x9] sm:$0xff] %vm259, %v316
        %350 = vst.msk [vmem:[%s347 + $0x19] sm:$0xff] %vm259, %v317
        %351 = vst.msk [vmem:[%s347 + $0x21] sm:$0xff] %vm259, %v318
        %352 = vst.msk [vmem:[%s347 + $0x31] sm:$0xff] %vm259, %v319
        %353 = vst.msk [vmem:[%s347 + $0x39] sm:$0xff] %vm259, %v320
        %354 = vst.msk [vmem:[%s347 + $0x49] sm:$0xff] %vm259, %v321
        %355 = vst.msk [vmem:[%s347 + $0x51] sm:$0xff] %vm259, %v322
        %356 = vst.msk [vmem:[%s347 + $0x61] sm:$0xff] %vm259, %v323
        %357 = vst.msk [vmem:[%s347 + $0x69] sm:$0xff] %vm259, %v324
        %358 = vst.msk [vmem:[%s347 + $0x79] sm:$0xff] %vm259, %v325
        %359 = vst.msk [vmem:[%s347 + $0x81] sm:$0xff] %vm259, %v326
        %360 = vst.msk [vmem:[%s347 + $0x91] sm:$0xff] %vm259, %v327
        %361 = vst.msk [vmem:[%s347 + $0x99] sm:$0xff] %vm259, %v328
        %362 = vst.msk [vmem:[%s347 + $0xa9] sm:$0xff] %vm259, %v329
        %363 = vst.msk [vmem:[%s347 + $0xb1] sm:$0xff] %vm259, %v330
        %364 = vst.msk [vmem:[%s347 + $0xc1] sm:$0xff] %vm259, %v331
        %365 = vst.msk [vmem:[%s347 + $0xc9] sm:$0xff] %vm259, %v332
        %366 = vst.msk [vmem:[%s347 + $0xd9] sm:$0xff] %vm259, %v333
        %367 = vst.msk [vmem:[%s347 + $0xe1] sm:$0xff] %vm259, %v334
        %368 = vst.msk [vmem:[%s347 + $0xf1] sm:$0xff] %vm259, %v335
        %369 = vst.msk [vmem:[%s347 + $0xf9] sm:$0xff] %vm259, %v336
        %370 = vst.msk [vmem:[%s347 + $0x109] sm:$0xff] %vm259, %v337
        %371 = vst.msk [vmem:[%s347 + $0x111] sm:$0xff] %vm259, %v338
        %372 = vst.msk [vmem:[%s347 + $0x121] sm:$0xff] %vm259, %v339
        %373 = vst.msk [vmem:[%s347 + $0x129] sm:$0xff] %vm259, %v340
        %374 = vst.msk [vmem:[%s347 + $0x139] sm:$0xff] %vm259, %v341
        %375 = vst.msk [vmem:[%s347 + $0x141] sm:$0xff] %vm259, %v342
        %376 = vst.msk [vmem:[%s347 + $0x151] sm:$0xff] %vm259, %v343
        %377 = vst.msk [vmem:[%s347 + $0x159] sm:$0xff] %vm259, %v344
        %378 = vst.msk [vmem:[%s347 + $0x169] sm:$0xff] %vm259, %v345
        %379 = vst.msk [vmem:[%s347 + $0x171] sm:$0xff] %vm259, %v346
        %v380 = vld [vmem:[#allocation2] sm:$0xff]
        %v381 = vld [vmem:[#allocation2 + $0x8] sm:$0xff]
        %v382 = vld [vmem:[#allocation2 + $0x18] sm:$0xff]
        %v383 = vld [vmem:[#allocation2 + $0x20] sm:$0xff]
        %v384 = vld [vmem:[#allocation2 + $0x30] sm:$0xff]
        %v385 = vld [vmem:[#allocation2 + $0x38] sm:$0xff]
        %v386 = vld [vmem:[#allocation2 + $0x48] sm:$0xff]
        %v387 = vld [vmem:[#allocation2 + $0x50] sm:$0xff]
        %v388 = vld [vmem:[#allocation2 + $0x60] sm:$0xff]
        %v389 = vld [vmem:[#allocation2 + $0x68] sm:$0xff]
        %v390 = vld [vmem:[#allocation2 + $0x78] sm:$0xff]
        %v391 = vld [vmem:[#allocation2 + $0x80] sm:$0xff]
        %v392 = vld [vmem:[#allocation2 + $0x90] sm:$0xff]
        %v393 = vld [vmem:[#allocation2 + $0x98] sm:$0xff]
        %v394 = vld [vmem:[#allocation2 + $0xa8] sm:$0xff]
        %v395 = vld [vmem:[#allocation2 + $0xb0] sm:$0xff]
        %v396 = vld [vmem:[#allocation2 + $0xc0] sm:$0xff]
        %v397 = vld [vmem:[#allocation2 + $0xc8] sm:$0xff]
        %v398 = vld [vmem:[#allocation2 + $0xd8] sm:$0xff]
        %v399 = vld [vmem:[#allocation2 + $0xe0] sm:$0xff]
        %v400 = vld [vmem:[#allocation2 + $0xf0] sm:$0xff]
        %v401 = vld [vmem:[#allocation2 + $0xf8] sm:$0xff]
        %v402 = vld [vmem:[#allocation2 + $0x108] sm:$0xff]
        %v403 = vld [vmem:[#allocation2 + $0x110] sm:$0xff]
        %v404 = vld [vmem:[#allocation2 + $0x120] sm:$0xff]
        %v405 = vld [vmem:[#allocation2 + $0x128] sm:$0xff]
        %v406 = vld [vmem:[#allocation2 + $0x138] sm:$0xff]
        %v407 = vld [vmem:[#allocation2 + $0x140] sm:$0xff]
        %v408 = vld [vmem:[#allocation2 + $0x150] sm:$0xff]
        %v409 = vld [vmem:[#allocation2 + $0x158] sm:$0xff]
        %v410 = vld [vmem:[#allocation2 + $0x168] sm:$0xff]
        %v411 = vld [vmem:[#allocation2 + $0x170] sm:$0xff]
        %412 = vst.msk [vmem:[#allocation3] sm:$0xff] %vm259, %v380
        %413 = vst.msk [vmem:[#allocation3 + $0x18] sm:$0xff] %vm259, %v381
        %414 = vst.msk [vmem:[#allocation3 + $0x30] sm:$0xff] %vm259, %v382
        %415 = vst.msk [vmem:[#allocation3 + $0x48] sm:$0xff] %vm259, %v383
        %416 = vst.msk [vmem:[#allocation3 + $0x60] sm:$0xff] %vm259, %v384
        %417 = vst.msk [vmem:[#allocation3 + $0x78] sm:$0xff] %vm259, %v385
        %418 = vst.msk [vmem:[#allocation3 + $0x90] sm:$0xff] %vm259, %v386
        %419 = vst.msk [vmem:[#allocation3 + $0xa8] sm:$0xff] %vm259, %v387
        %420 = vst.msk [vmem:[#allocation3 + $0xc0] sm:$0xff] %vm259, %v388
        %421 = vst.msk [vmem:[#allocation3 + $0xd8] sm:$0xff] %vm259, %v389
        %422 = vst.msk [vmem:[#allocation3 + $0xf0] sm:$0xff] %vm259, %v390
        %423 = vst.msk [vmem:[#allocation3 + $0x108] sm:$0xff] %vm259, %v391
        %424 = vst.msk [vmem:[#allocation3 + $0x120] sm:$0xff] %vm259, %v392
        %425 = vst.msk [vmem:[#allocation3 + $0x138] sm:$0xff] %vm259, %v393
        %426 = vst.msk [vmem:[#allocation3 + $0x150] sm:$0xff] %vm259, %v394
        %427 = vst.msk [vmem:[#allocation3 + $0x168] sm:$0xff] %vm259, %v395
        %428 = vst.msk [vmem:[#allocation3 + $0x180] sm:$0xff] %vm259, %v396
        %429 = vst.msk [vmem:[#allocation3 + $0x198] sm:$0xff] %vm259, %v397
        %430 = vst.msk [vmem:[#allocation3 + $0x1b0] sm:$0xff] %vm259, %v398
        %431 = vst.msk [vmem:[#allocation3 + $0x1c8] sm:$0xff] %vm259, %v399
        %432 = vst.msk [vmem:[#allocation3 + $0x1e0] sm:$0xff] %vm259, %v400
        %433 = vst.msk [vmem:[#allocation3 + $0x1f8] sm:$0xff] %vm259, %v401
        %434 = vst.msk [vmem:[#allocation3 + $0x210] sm:$0xff] %vm259, %v402
        %435 = vst.msk [vmem:[#allocation3 + $0x228] sm:$0xff] %vm259, %v403
        %436 = vst.msk [vmem:[#allocation3 + $0x240] sm:$0xff] %vm259, %v404
        %437 = vst.msk [vmem:[#allocation3 + $0x258] sm:$0xff] %vm259, %v405
        %438 = vst.msk [vmem:[#allocation3 + $0x270] sm:$0xff] %vm259, %v406
        %439 = vst.msk [vmem:[#allocation3 + $0x288] sm:$0xff] %vm259, %v407
        %440 = vst.msk [vmem:[#allocation3 + $0x2a0] sm:$0xff] %vm259, %v408
        %441 = vst.msk [vmem:[#allocation3 + $0x2b8] sm:$0xff] %vm259, %v409
        %442 = vst.msk [vmem:[#allocation3 + $0x2d0] sm:$0xff] %vm259, %v410
        %443 = vst.msk [vmem:[#allocation3 + $0x2e8] sm:$0xff] %vm259, %v411
        %v444 = vld [vmem:[#allocation2 + $0x1] sm:$0xff]
        %v445 = vld [vmem:[#allocation2 + $0x9] sm:$0xff]
        %v446 = vld [vmem:[#allocation2 + $0x19] sm:$0xff]
        %v447 = vld [vmem:[#allocation2 + $0x21] sm:$0xff]
        %v448 = vld [vmem:[#allocation2 + $0x31] sm:$0xff]
        %v449 = vld [vmem:[#allocation2 + $0x39] sm:$0xff]
        %v450 = vld [vmem:[#allocation2 + $0x49] sm:$0xff]
        %v451 = vld [vmem:[#allocation2 + $0x51] sm:$0xff]
        %v452 = vld [vmem:[#allocation2 + $0x61] sm:$0xff]
        %v453 = vld [vmem:[#allocation2 + $0x69] sm:$0xff]
        %v454 = vld [vmem:[#allocation2 + $0x79] sm:$0xff]
        %v455 = vld [vmem:[#allocation2 + $0x81] sm:$0xff]
        %v456 = vld [vmem:[#allocation2 + $0x91] sm:$0xff]
        %v457 = vld [vmem:[#allocation2 + $0x99] sm:$0xff]
        %v458 = vld [vmem:[#allocation2 + $0xa9] sm:$0xff]
        %v459 = vld [vmem:[#allocation2 + $0xb1] sm:$0xff]
        %v460 = vld [vmem:[#allocation2 + $0xc1] sm:$0xff]
        %v461 = vld [vmem:[#allocation2 + $0xc9] sm:$0xff]
        %v462 = vld [vmem:[#allocation2 + $0xd9] sm:$0xff]
        %v463 = vld [vmem:[#allocation2 + $0xe1] sm:$0xff]
        %v464 = vld [vmem:[#allocation2 + $0xf1] sm:$0xff]
        %v465 = vld [vmem:[#allocation2 + $0xf9] sm:$0xff]
        %v466 = vld [vmem:[#allocation2 + $0x109] sm:$0xff]
        %v467 = vld [vmem:[#allocation2 + $0x111] sm:$0xff]
        %v468 = vld [vmem:[#allocation2 + $0x121] sm:$0xff]
        %v469 = vld [vmem:[#allocation2 + $0x129] sm:$0xff]
        %v470 = vld [vmem:[#allocation2 + $0x139] sm:$0xff]
        %v471 = vld [vmem:[#allocation2 + $0x141] sm:$0xff]
        %v472 = vld [vmem:[#allocation2 + $0x151] sm:$0xff]
        %v473 = vld [vmem:[#allocation2 + $0x159] sm:$0xff]
        %v474 = vld [vmem:[#allocation2 + $0x169] sm:$0xff]
        %v475 = vld [vmem:[#allocation2 + $0x171] sm:$0xff]
        %508 = vrot.lane.b32.xlu0 %v444, 32
        %v509 = vpop.permute.xlu0 %508
        %510 = vrot.lane.b32.xlu0 %v445, 32
        %v511 = vpop.permute.xlu0 %510
        %512 = vrot.lane.b32.xlu0 %v446, 32
        %v513 = vpop.permute.xlu0 %512
        %514 = vrot.lane.b32.xlu0 %v447, 32
        %v515 = vpop.permute.xlu0 %514
        %516 = vrot.lane.b32.xlu0 %v448, 32
        %v517 = vpop.permute.xlu0 %516
        %518 = vrot.lane.b32.xlu0 %v449, 32
        %v519 = vpop.permute.xlu0 %518
        %520 = vrot.lane.b32.xlu0 %v450, 32
        %v521 = vpop.permute.xlu0 %520
        %522 = vrot.lane.b32.xlu0 %v451, 32
        %v523 = vpop.permute.xlu0 %522
        %524 = vrot.lane.b32.xlu0 %v452, 32
        %v525 = vpop.permute.xlu0 %524
        %526 = vrot.lane.b32.xlu0 %v453, 32
        %v527 = vpop.permute.xlu0 %526
        %528 = vrot.lane.b32.xlu0 %v454, 32
        %v529 = vpop.permute.xlu0 %528
        %530 = vrot.lane.b32.xlu0 %v455, 32
        %v531 = vpop.permute.xlu0 %530
        %532 = vrot.lane.b32.xlu0 %v456, 32
        %v533 = vpop.permute.xlu0 %532
        %534 = vrot.lane.b32.xlu0 %v457, 32
        %v535 = vpop.permute.xlu0 %534
        %536 = vrot.lane.b32.xlu0 %v458, 32
        %v537 = vpop.permute.xlu0 %536
        %538 = vrot.lane.b32.xlu0 %v459, 32
        %v539 = vpop.permute.xlu0 %538
        %540 = vrot.lane.b32.xlu0 %v460, 32
        %v541 = vpop.permute.xlu0 %540
        %542 = vrot.lane.b32.xlu0 %v461, 32
        %v543 = vpop.permute.xlu0 %542
        %544 = vrot.lane.b32.xlu0 %v462, 32
        %v545 = vpop.permute.xlu0 %544
        %546 = vrot.lane.b32.xlu0 %v463, 32
        %v547 = vpop.permute.xlu0 %546
        %548 = vrot.lane.b32.xlu0 %v464, 32
        %v549 = vpop.permute.xlu0 %548
        %550 = vrot.lane.b32.xlu0 %v465, 32
        %v551 = vpop.permute.xlu0 %550
        %552 = vrot.lane.b32.xlu0 %v466, 32
        %v553 = vpop.permute.xlu0 %552
        %554 = vrot.lane.b32.xlu0 %v467, 32
        %v555 = vpop.permute.xlu0 %554
        %556 = vrot.lane.b32.xlu0 %v468, 32
        %v557 = vpop.permute.xlu0 %556
        %558 = vrot.lane.b32.xlu0 %v469, 32
        %v559 = vpop.permute.xlu0 %558
        %560 = vrot.lane.b32.xlu0 %v470, 32
        %v561 = vpop.permute.xlu0 %560
        %562 = vrot.lane.b32.xlu0 %v471, 32
        %v563 = vpop.permute.xlu0 %562
        %564 = vrot.lane.b32.xlu0 %v472, 32
        %v565 = vpop.permute.xlu0 %564
        %566 = vrot.lane.b32.xlu0 %v473, 32
        %v567 = vpop.permute.xlu0 %566
        %568 = vrot.lane.b32.xlu0 %v474, 32
        %v569 = vpop.permute.xlu0 %568
        %570 = vrot.lane.b32.xlu0 %v475, 32
        %v571 = vpop.permute.xlu0 %570
        %vm604 = vcmask 523520
        %605 = vst.msk [vmem:[#allocation3] sm:$0xff] %vm604, %v509
        %606 = vst.msk [vmem:[#allocation3 + $0x18] sm:$0xff] %vm604, %v511
        %607 = vst.msk [vmem:[#allocation3 + $0x30] sm:$0xff] %vm604, %v513
        %608 = vst.msk [vmem:[#allocation3 + $0x48] sm:$0xff] %vm604, %v515
        %609 = vst.msk [vmem:[#allocation3 + $0x60] sm:$0xff] %vm604, %v517
        %610 = vst.msk [vmem:[#allocation3 + $0x78] sm:$0xff] %vm604, %v519
        %611 = vst.msk [vmem:[#allocation3 + $0x90] sm:$0xff] %vm604, %v521
        %612 = vst.msk [vmem:[#allocation3 + $0xa8] sm:$0xff] %vm604, %v523
        %613 = vst.msk [vmem:[#allocation3 + $0xc0] sm:$0xff] %vm604, %v525
        %614 = vst.msk [vmem:[#allocation3 + $0xd8] sm:$0xff] %vm604, %v527
        %615 = vst.msk [vmem:[#allocation3 + $0xf0] sm:$0xff] %vm604, %v529
        %616 = vst.msk [vmem:[#allocation3 + $0x108] sm:$0xff] %vm604, %v531
        %617 = vst.msk [vmem:[#allocation3 + $0x120] sm:$0xff] %vm604, %v533
        %618 = vst.msk [vmem:[#allocation3 + $0x138] sm:$0xff] %vm604, %v535
        %619 = vst.msk [vmem:[#allocation3 + $0x150] sm:$0xff] %vm604, %v537
        %620 = vst.msk [vmem:[#allocation3 + $0x168] sm:$0xff] %vm604, %v539
        %621 = vst.msk [vmem:[#allocation3 + $0x180] sm:$0xff] %vm604, %v541
        %622 = vst.msk [vmem:[#allocation3 + $0x198] sm:$0xff] %vm604, %v543
        %623 = vst.msk [vmem:[#allocation3 + $0x1b0] sm:$0xff] %vm604, %v545
        %624 = vst.msk [vmem:[#allocation3 + $0x1c8] sm:$0xff] %vm604, %v547
        %625 = vst.msk [vmem:[#allocation3 + $0x1e0] sm:$0xff] %vm604, %v549
        %626 = vst.msk [vmem:[#allocation3 + $0x1f8] sm:$0xff] %vm604, %v551
        %627 = vst.msk [vmem:[#allocation3 + $0x210] sm:$0xff] %vm604, %v553
        %628 = vst.msk [vmem:[#allocation3 + $0x228] sm:$0xff] %vm604, %v555
        %629 = vst.msk [vmem:[#allocation3 + $0x240] sm:$0xff] %vm604, %v557
        %630 = vst.msk [vmem:[#allocation3 + $0x258] sm:$0xff] %vm604, %v559
        %631 = vst.msk [vmem:[#allocation3 + $0x270] sm:$0xff] %vm604, %v561
        %632 = vst.msk [vmem:[#allocation3 + $0x288] sm:$0xff] %vm604, %v563
        %633 = vst.msk [vmem:[#allocation3 + $0x2a0] sm:$0xff] %vm604, %v565
        %634 = vst.msk [vmem:[#allocation3 + $0x2b8] sm:$0xff] %vm604, %v567
        %635 = vst.msk [vmem:[#allocation3 + $0x2d0] sm:$0xff] %vm604, %v569
        %636 = vst.msk [vmem:[#allocation3 + $0x2e8] sm:$0xff] %vm604, %v571
        %v637 = vld [vmem:[#allocation2 + $0x2] sm:$0xff]
        %v638 = vld [vmem:[#allocation2 + $0xa] sm:$0xff]
        %v639 = vld [vmem:[#allocation2 + $0x1a] sm:$0xff]
        %v640 = vld [vmem:[#allocation2 + $0x22] sm:$0xff]
        %v641 = vld [vmem:[#allocation2 + $0x32] sm:$0xff]
        %v642 = vld [vmem:[#allocation2 + $0x3a] sm:$0xff]
        %v643 = vld [vmem:[#allocation2 + $0x4a] sm:$0xff]
        %v644 = vld [vmem:[#allocation2 + $0x52] sm:$0xff]
        %v645 = vld [vmem:[#allocation2 + $0x62] sm:$0xff]
        %v646 = vld [vmem:[#allocation2 + $0x6a] sm:$0xff]
        %v647 = vld [vmem:[#allocation2 + $0x7a] sm:$0xff]
        %v648 = vld [vmem:[#allocation2 + $0x82] sm:$0xff]
        %v649 = vld [vmem:[#allocation2 + $0x92] sm:$0xff]
        %v650 = vld [vmem:[#allocation2 + $0x9a] sm:$0xff]
        %v651 = vld [vmem:[#allocation2 + $0xaa] sm:$0xff]
        %v652 = vld [vmem:[#allocation2 + $0xb2] sm:$0xff]
        %v653 = vld [vmem:[#allocation2 + $0xc2] sm:$0xff]
        %v654 = vld [vmem:[#allocation2 + $0xca] sm:$0xff]
        %v655 = vld [vmem:[#allocation2 + $0xda] sm:$0xff]
        %v656 = vld [vmem:[#allocation2 + $0xe2] sm:$0xff]
        %v657 = vld [vmem:[#allocation2 + $0xf2] sm:$0xff]
        %v658 = vld [vmem:[#allocation2 + $0xfa] sm:$0xff]
        %v659 = vld [vmem:[#allocation2 + $0x10a] sm:$0xff]
        %v660 = vld [vmem:[#allocation2 + $0x112] sm:$0xff]
        %v661 = vld [vmem:[#allocation2 + $0x122] sm:$0xff]
        %v662 = vld [vmem:[#allocation2 + $0x12a] sm:$0xff]
        %v663 = vld [vmem:[#allocation2 + $0x13a] sm:$0xff]
        %v664 = vld [vmem:[#allocation2 + $0x142] sm:$0xff]
        %v665 = vld [vmem:[#allocation2 + $0x152] sm:$0xff]
        %v666 = vld [vmem:[#allocation2 + $0x15a] sm:$0xff]
        %v667 = vld [vmem:[#allocation2 + $0x16a] sm:$0xff]
        %v668 = vld [vmem:[#allocation2 + $0x172] sm:$0xff]
        %701 = vrot.lane.b32.xlu0 %v637, 64
        %v702 = vpop.permute.xlu0 %701
        %703 = vrot.lane.b32.xlu0 %v638, 64
        %v704 = vpop.permute.xlu0 %703
        %705 = vrot.lane.b32.xlu0 %v639, 64
        %v706 = vpop.permute.xlu0 %705
        %707 = vrot.lane.b32.xlu0 %v640, 64
        %v708 = vpop.permute.xlu0 %707
        %709 = vrot.lane.b32.xlu0 %v641, 64
        %v710 = vpop.permute.xlu0 %709
        %711 = vrot.lane.b32.xlu0 %v642, 64
        %v712 = vpop.permute.xlu0 %711
        %713 = vrot.lane.b32.xlu0 %v643, 64
        %v714 = vpop.permute.xlu0 %713
        %715 = vrot.lane.b32.xlu0 %v644, 64
        %v716 = vpop.permute.xlu0 %715
        %717 = vrot.lane.b32.xlu0 %v645, 64
        %v718 = vpop.permute.xlu0 %717
        %719 = vrot.lane.b32.xlu0 %v646, 64
        %v720 = vpop.permute.xlu0 %719
        %721 = vrot.lane.b32.xlu0 %v647, 64
        %v722 = vpop.permute.xlu0 %721
        %723 = vrot.lane.b32.xlu0 %v648, 64
        %v724 = vpop.permute.xlu0 %723
        %725 = vrot.lane.b32.xlu0 %v649, 64
        %v726 = vpop.permute.xlu0 %725
        %727 = vrot.lane.b32.xlu0 %v650, 64
        %v728 = vpop.permute.xlu0 %727
        %729 = vrot.lane.b32.xlu0 %v651, 64
        %v730 = vpop.permute.xlu0 %729
        %731 = vrot.lane.b32.xlu0 %v652, 64
        %v732 = vpop.permute.xlu0 %731
        %733 = vrot.lane.b32.xlu0 %v653, 64
        %v734 = vpop.permute.xlu0 %733
        %735 = vrot.lane.b32.xlu0 %v654, 64
        %v736 = vpop.permute.xlu0 %735
        %737 = vrot.lane.b32.xlu0 %v655, 64
        %v738 = vpop.permute.xlu0 %737
        %739 = vrot.lane.b32.xlu0 %v656, 64
        %v740 = vpop.permute.xlu0 %739
        %741 = vrot.lane.b32.xlu0 %v657, 64
        %v742 = vpop.permute.xlu0 %741
        %743 = vrot.lane.b32.xlu0 %v658, 64
        %v744 = vpop.permute.xlu0 %743
        %745 = vrot.lane.b32.xlu0 %v659, 64
        %v746 = vpop.permute.xlu0 %745
        %747 = vrot.lane.b32.xlu0 %v660, 64
        %v748 = vpop.permute.xlu0 %747
        %749 = vrot.lane.b32.xlu0 %v661, 64
        %v750 = vpop.permute.xlu0 %749
        %751 = vrot.lane.b32.xlu0 %v662, 64
        %v752 = vpop.permute.xlu0 %751
        %753 = vrot.lane.b32.xlu0 %v663, 64
        %v754 = vpop.permute.xlu0 %753
        %755 = vrot.lane.b32.xlu0 %v664, 64
        %v756 = vpop.permute.xlu0 %755
        %757 = vrot.lane.b32.xlu0 %v665, 64
        %v758 = vpop.permute.xlu0 %757
        %759 = vrot.lane.b32.xlu0 %v666, 64
        %v760 = vpop.permute.xlu0 %759
        %761 = vrot.lane.b32.xlu0 %v667, 64
        %v762 = vpop.permute.xlu0 %761
        %763 = vrot.lane.b32.xlu0 %v668, 64
        %v764 = vpop.permute.xlu0 %763
        %vm797 = vcmask 785920
        %798 = vst.msk [vmem:[#allocation3] sm:$0xff] %vm797, %v702
        %799 = vst.msk [vmem:[#allocation3 + $0x18] sm:$0xff] %vm797, %v704
        %800 = vst.msk [vmem:[#allocation3 + $0x30] sm:$0xff] %vm797, %v706
        %801 = vst.msk [vmem:[#allocation3 + $0x48] sm:$0xff] %vm797, %v708
        %802 = vst.msk [vmem:[#allocation3 + $0x60] sm:$0xff] %vm797, %v710
        %803 = vst.msk [vmem:[#allocation3 + $0x78] sm:$0xff] %vm797, %v712
        %804 = vst.msk [vmem:[#allocation3 + $0x90] sm:$0xff] %vm797, %v714
        %805 = vst.msk [vmem:[#allocation3 + $0xa8] sm:$0xff] %vm797, %v716
        %806 = vst.msk [vmem:[#allocation3 + $0xc0] sm:$0xff] %vm797, %v718
        %807 = vst.msk [vmem:[#allocation3 + $0xd8] sm:$0xff] %vm797, %v720
        %808 = vst.msk [vmem:[#allocation3 + $0xf0] sm:$0xff] %vm797, %v722
        %809 = vst.msk [vmem:[#allocation3 + $0x108] sm:$0xff] %vm797, %v724
        %810 = vst.msk [vmem:[#allocation3 + $0x120] sm:$0xff] %vm797, %v726
        %811 = vst.msk [vmem:[#allocation3 + $0x138] sm:$0xff] %vm797, %v728
        %812 = vst.msk [vmem:[#allocation3 + $0x150] sm:$0xff] %vm797, %v730
        %813 = vst.msk [vmem:[#allocation3 + $0x168] sm:$0xff] %vm797, %v732
        %814 = vst.msk [vmem:[#allocation3 + $0x180] sm:$0xff] %vm797, %v734
        %815 = vst.msk [vmem:[#allocation3 + $0x198] sm:$0xff] %vm797, %v736
        %816 = vst.msk [vmem:[#allocation3 + $0x1b0] sm:$0xff] %vm797, %v738
        %817 = vst.msk [vmem:[#allocation3 + $0x1c8] sm:$0xff] %vm797, %v740
        %818 = vst.msk [vmem:[#allocation3 + $0x1e0] sm:$0xff] %vm797, %v742
        %819 = vst.msk [vmem:[#allocation3 + $0x1f8] sm:$0xff] %vm797, %v744
        %820 = vst.msk [vmem:[#allocation3 + $0x210] sm:$0xff] %vm797, %v746
        %821 = vst.msk [vmem:[#allocation3 + $0x228] sm:$0xff] %vm797, %v748
        %822 = vst.msk [vmem:[#allocation3 + $0x240] sm:$0xff] %vm797, %v750
        %823 = vst.msk [vmem:[#allocation3 + $0x258] sm:$0xff] %vm797, %v752
        %824 = vst.msk [vmem:[#allocation3 + $0x270] sm:$0xff] %vm797, %v754
        %825 = vst.msk [vmem:[#allocation3 + $0x288] sm:$0xff] %vm797, %v756
        %826 = vst.msk [vmem:[#allocation3 + $0x2a0] sm:$0xff] %vm797, %v758
        %827 = vst.msk [vmem:[#allocation3 + $0x2b8] sm:$0xff] %vm797, %v760
        %828 = vst.msk [vmem:[#allocation3 + $0x2d0] sm:$0xff] %vm797, %v762
        %829 = vst.msk [vmem:[#allocation3 + $0x2e8] sm:$0xff] %vm797, %v764
        %v830 = vld [vmem:[%s347] sm:$0xff]
        %v831 = vld [vmem:[%s347 + $0x8] sm:$0xff]
        %v832 = vld [vmem:[%s347 + $0x18] sm:$0xff]
        %v833 = vld [vmem:[%s347 + $0x20] sm:$0xff]
        %v834 = vld [vmem:[%s347 + $0x30] sm:$0xff]
        %v835 = vld [vmem:[%s347 + $0x38] sm:$0xff]
        %v836 = vld [vmem:[%s347 + $0x48] sm:$0xff]
        %v837 = vld [vmem:[%s347 + $0x50] sm:$0xff]
        %v838 = vld [vmem:[%s347 + $0x60] sm:$0xff]
        %v839 = vld [vmem:[%s347 + $0x68] sm:$0xff]
        %v840 = vld [vmem:[%s347 + $0x78] sm:$0xff]
        %v841 = vld [vmem:[%s347 + $0x80] sm:$0xff]
        %v842 = vld [vmem:[%s347 + $0x90] sm:$0xff]
        %v843 = vld [vmem:[%s347 + $0x98] sm:$0xff]
        %v844 = vld [vmem:[%s347 + $0xa8] sm:$0xff]
        %v845 = vld [vmem:[%s347 + $0xb0] sm:$0xff]
        %v846 = vld [vmem:[%s347 + $0xc0] sm:$0xff]
        %v847 = vld [vmem:[%s347 + $0xc8] sm:$0xff]
        %v848 = vld [vmem:[%s347 + $0xd8] sm:$0xff]
        %v849 = vld [vmem:[%s347 + $0xe0] sm:$0xff]
        %v850 = vld [vmem:[%s347 + $0xf0] sm:$0xff]
        %v851 = vld [vmem:[%s347 + $0xf8] sm:$0xff]
        %v852 = vld [vmem:[%s347 + $0x108] sm:$0xff]
        %v853 = vld [vmem:[%s347 + $0x110] sm:$0xff]
        %v854 = vld [vmem:[%s347 + $0x120] sm:$0xff]
        %v855 = vld [vmem:[%s347 + $0x128] sm:$0xff]
        %v856 = vld [vmem:[%s347 + $0x138] sm:$0xff]
        %v857 = vld [vmem:[%s347 + $0x140] sm:$0xff]
        %v858 = vld [vmem:[%s347 + $0x150] sm:$0xff]
        %v859 = vld [vmem:[%s347 + $0x158] sm:$0xff]
        %v860 = vld [vmem:[%s347 + $0x168] sm:$0xff]
        %v861 = vld [vmem:[%s347 + $0x170] sm:$0xff]
        %894 = vrot.lane.b32.xlu0 %v830, 96
        %v895 = vpop.permute.xlu0 %894
        %896 = vrot.lane.b32.xlu0 %v831, 96
        %v897 = vpop.permute.xlu0 %896
        %898 = vrot.lane.b32.xlu0 %v832, 96
        %v899 = vpop.permute.xlu0 %898
        %900 = vrot.lane.b32.xlu0 %v833, 96
        %v901 = vpop.permute.xlu0 %900
        %902 = vrot.lane.b32.xlu0 %v834, 96
        %v903 = vpop.permute.xlu0 %902
        %904 = vrot.lane.b32.xlu0 %v835, 96
        %v905 = vpop.permute.xlu0 %904
        %906 = vrot.lane.b32.xlu0 %v836, 96
        %v907 = vpop.permute.xlu0 %906
        %908 = vrot.lane.b32.xlu0 %v837, 96
        %v909 = vpop.permute.xlu0 %908
        %910 = vrot.lane.b32.xlu0 %v838, 96
        %v911 = vpop.permute.xlu0 %910
        %912 = vrot.lane.b32.xlu0 %v839, 96
        %v913 = vpop.permute.xlu0 %912
        %914 = vrot.lane.b32.xlu0 %v840, 96
        %v915 = vpop.permute.xlu0 %914
        %916 = vrot.lane.b32.xlu0 %v841, 96
        %v917 = vpop.permute.xlu0 %916
        %918 = vrot.lane.b32.xlu0 %v842, 96
        %v919 = vpop.permute.xlu0 %918
        %920 = vrot.lane.b32.xlu0 %v843, 96
        %v921 = vpop.permute.xlu0 %920
        %922 = vrot.lane.b32.xlu0 %v844, 96
        %v923 = vpop.permute.xlu0 %922
        %924 = vrot.lane.b32.xlu0 %v845, 96
        %v925 = vpop.permute.xlu0 %924
        %926 = vrot.lane.b32.xlu0 %v846, 96
        %v927 = vpop.permute.xlu0 %926
        %928 = vrot.lane.b32.xlu0 %v847, 96
        %v929 = vpop.permute.xlu0 %928
        %930 = vrot.lane.b32.xlu0 %v848, 96
        %v931 = vpop.permute.xlu0 %930
        %932 = vrot.lane.b32.xlu0 %v849, 96
        %v933 = vpop.permute.xlu0 %932
        %934 = vrot.lane.b32.xlu0 %v850, 96
        %v935 = vpop.permute.xlu0 %934
        %936 = vrot.lane.b32.xlu0 %v851, 96
        %v937 = vpop.permute.xlu0 %936
        %938 = vrot.lane.b32.xlu0 %v852, 96
        %v939 = vpop.permute.xlu0 %938
        %940 = vrot.lane.b32.xlu0 %v853, 96
        %v941 = vpop.permute.xlu0 %940
        %942 = vrot.lane.b32.xlu0 %v854, 96
        %v943 = vpop.permute.xlu0 %942
        %944 = vrot.lane.b32.xlu0 %v855, 96
        %v945 = vpop.permute.xlu0 %944
        %946 = vrot.lane.b32.xlu0 %v856, 96
        %v947 = vpop.permute.xlu0 %946
        %948 = vrot.lane.b32.xlu0 %v857, 96
        %v949 = vpop.permute.xlu0 %948
        %950 = vrot.lane.b32.xlu0 %v858, 96
        %v951 = vpop.permute.xlu0 %950
        %952 = vrot.lane.b32.xlu0 %v859, 96
        %v953 = vpop.permute.xlu0 %952
        %954 = vrot.lane.b32.xlu0 %v860, 96
        %v955 = vpop.permute.xlu0 %954
        %956 = vrot.lane.b32.xlu0 %v861, 96
        %v957 = vpop.permute.xlu0 %956
        %vm990 = vcmask 1048320
        %991 = vst.msk [vmem:[#allocation3] sm:$0xff] %vm990, %v895
        %992 = vst.msk [vmem:[#allocation3 + $0x18] sm:$0xff] %vm990, %v897
        %993 = vst.msk [vmem:[#allocation3 + $0x30] sm:$0xff] %vm990, %v899
        %994 = vst.msk [vmem:[#allocation3 + $0x48] sm:$0xff] %vm990, %v901
        %995 = vst.msk [vmem:[#allocation3 + $0x60] sm:$0xff] %vm990, %v903
        %996 = vst.msk [vmem:[#allocation3 + $0x78] sm:$0xff] %vm990, %v905
        %997 = vst.msk [vmem:[#allocation3 + $0x90] sm:$0xff] %vm990, %v907
        %998 = vst.msk [vmem:[#allocation3 + $0xa8] sm:$0xff] %vm990, %v909
        %999 = vst.msk [vmem:[#allocation3 + $0xc0] sm:$0xff] %vm990, %v911
        %1000 = vst.msk [vmem:[#allocation3 + $0xd8] sm:$0xff] %vm990, %v913
        %1001 = vst.msk [vmem:[#allocation3 + $0xf0] sm:$0xff] %vm990, %v915
        %1002 = vst.msk [vmem:[#allocation3 + $0x108] sm:$0xff] %vm990, %v917
        %1003 = vst.msk [vmem:[#allocation3 + $0x120] sm:$0xff] %vm990, %v919
        %1004 = vst.msk [vmem:[#allocation3 + $0x138] sm:$0xff] %vm990, %v921
        %1005 = vst.msk [vmem:[#allocation3 + $0x150] sm:$0xff] %vm990, %v923
        %1006 = vst.msk [vmem:[#allocation3 + $0x168] sm:$0xff] %vm990, %v925
        %1007 = vst.msk [vmem:[#allocation3 + $0x180] sm:$0xff] %vm990, %v927
        %1008 = vst.msk [vmem:[#allocation3 + $0x198] sm:$0xff] %vm990, %v929
        %1009 = vst.msk [vmem:[#allocation3 + $0x1b0] sm:$0xff] %vm990, %v931
        %1010 = vst.msk [vmem:[#allocation3 + $0x1c8] sm:$0xff] %vm990, %v933
        %1011 = vst.msk [vmem:[#allocation3 + $0x1e0] sm:$0xff] %vm990, %v935
        %1012 = vst.msk [vmem:[#allocation3 + $0x1f8] sm:$0xff] %vm990, %v937
        %1013 = vst.msk [vmem:[#allocation3 + $0x210] sm:$0xff] %vm990, %v939
        %1014 = vst.msk [vmem:[#allocation3 + $0x228] sm:$0xff] %vm990, %v941
        %1015 = vst.msk [vmem:[#allocation3 + $0x240] sm:$0xff] %vm990, %v943
        %1016 = vst.msk [vmem:[#allocation3 + $0x258] sm:$0xff] %vm990, %v945
        %1017 = vst.msk [vmem:[#allocation3 + $0x270] sm:$0xff] %vm990, %v947
        %1018 = vst.msk [vmem:[#allocation3 + $0x288] sm:$0xff] %vm990, %v949
        %1019 = vst.msk [vmem:[#allocation3 + $0x2a0] sm:$0xff] %vm990, %v951
        %1020 = vst.msk [vmem:[#allocation3 + $0x2b8] sm:$0xff] %vm990, %v953
        %1021 = vst.msk [vmem:[#allocation3 + $0x2d0] sm:$0xff] %vm990, %v955
        %1022 = vst.msk [vmem:[#allocation3 + $0x2e8] sm:$0xff] %vm990, %v957
        %v1023 = vld [vmem:[%s347 + $0x1] sm:$0xff]
        %v1024 = vld [vmem:[%s347 + $0x9] sm:$0xff]
        %v1025 = vld [vmem:[%s347 + $0x19] sm:$0xff]
        %v1026 = vld [vmem:[%s347 + $0x21] sm:$0xff]
        %v1027 = vld [vmem:[%s347 + $0x31] sm:$0xff]
        %v1028 = vld [vmem:[%s347 + $0x39] sm:$0xff]
        %v1029 = vld [vmem:[%s347 + $0x49] sm:$0xff]
        %v1030 = vld [vmem:[%s347 + $0x51] sm:$0xff]
        %v1031 = vld [vmem:[%s347 + $0x61] sm:$0xff]
        %v1032 = vld [vmem:[%s347 + $0x69] sm:$0xff]
        %v1033 = vld [vmem:[%s347 + $0x79] sm:$0xff]
        %v1034 = vld [vmem:[%s347 + $0x81] sm:$0xff]
        %v1035 = vld [vmem:[%s347 + $0x91] sm:$0xff]
        %v1036 = vld [vmem:[%s347 + $0x99] sm:$0xff]
        %v1037 = vld [vmem:[%s347 + $0xa9] sm:$0xff]
        %v1038 = vld [vmem:[%s347 + $0xb1] sm:$0xff]
        %v1039 = vld [vmem:[%s347 + $0xc1] sm:$0xff]
        %v1040 = vld [vmem:[%s347 + $0xc9] sm:$0xff]
        %v1041 = vld [vmem:[%s347 + $0xd9] sm:$0xff]
        %v1042 = vld [vmem:[%s347 + $0xe1] sm:$0xff]
        %v1043 = vld [vmem:[%s347 + $0xf1] sm:$0xff]
        %v1044 = vld [vmem:[%s347 + $0xf9] sm:$0xff]
        %v1045 = vld [vmem:[%s347 + $0x109] sm:$0xff]
        %v1046 = vld [vmem:[%s347 + $0x111] sm:$0xff]
        %v1047 = vld [vmem:[%s347 + $0x121] sm:$0xff]
        %v1048 = vld [vmem:[%s347 + $0x129] sm:$0xff]
        %v1049 = vld [vmem:[%s347 + $0x139] sm:$0xff]
        %v1050 = vld [vmem:[%s347 + $0x141] sm:$0xff]
        %v1051 = vld [vmem:[%s347 + $0x151] sm:$0xff]
        %v1052 = vld [vmem:[%s347 + $0x159] sm:$0xff]
        %v1053 = vld [vmem:[%s347 + $0x169] sm:$0xff]
        %v1054 = vld [vmem:[%s347 + $0x171] sm:$0xff]
        %1055 = vst.msk [vmem:[#allocation3 + $0x8] sm:$0xff] %vm259, %v1023
        %1056 = vst.msk [vmem:[#allocation3 + $0x20] sm:$0xff] %vm259, %v1024
        %1057 = vst.msk [vmem:[#allocation3 + $0x38] sm:$0xff] %vm259, %v1025
        %1058 = vst.msk [vmem:[#allocation3 + $0x50] sm:$0xff] %vm259, %v1026
        %1059 = vst.msk [vmem:[#allocation3 + $0x68] sm:$0xff] %vm259, %v1027
        %1060 = vst.msk [vmem:[#allocation3 + $0x80] sm:$0xff] %vm259, %v1028
        %1061 = vst.msk [vmem:[#allocation3 + $0x98] sm:$0xff] %vm259, %v1029
        %1062 = vst.msk [vmem:[#allocation3 + $0xb0] sm:$0xff] %vm259, %v1030
        %1063 = vst.msk [vmem:[#allocation3 + $0xc8] sm:$0xff] %vm259, %v1031
        %1064 = vst.msk [vmem:[#allocation3 + $0xe0] sm:$0xff] %vm259, %v1032
        %1065 = vst.msk [vmem:[#allocation3 + $0xf8] sm:$0xff] %vm259, %v1033
        %1066 = vst.msk [vmem:[#allocation3 + $0x110] sm:$0xff] %vm259, %v1034
        %1067 = vst.msk [vmem:[#allocation3 + $0x128] sm:$0xff] %vm259, %v1035
        %1068 = vst.msk [vmem:[#allocation3 + $0x140] sm:$0xff] %vm259, %v1036
        %1069 = vst.msk [vmem:[#allocation3 + $0x158] sm:$0xff] %vm259, %v1037
        %1070 = vst.msk [vmem:[#allocation3 + $0x170] sm:$0xff] %vm259, %v1038
        %1071 = vst.msk [vmem:[#allocation3 + $0x188] sm:$0xff] %vm259, %v1039
        %1072 = vst.msk [vmem:[#allocation3 + $0x1a0] sm:$0xff] %vm259, %v1040
        %1073 = vst.msk [vmem:[#allocation3 + $0x1b8] sm:$0xff] %vm259, %v1041
        %1074 = vst.msk [vmem:[#allocation3 + $0x1d0] sm:$0xff] %vm259, %v1042
        %1075 = vst.msk [vmem:[#allocation3 + $0x1e8] sm:$0xff] %vm259, %v1043
        %1076 = vst.msk [vmem:[#allocation3 + $0x200] sm:$0xff] %vm259, %v1044
        %1077 = vst.msk [vmem:[#allocation3 + $0x218] sm:$0xff] %vm259, %v1045
        %1078 = vst.msk [vmem:[#allocation3 + $0x230] sm:$0xff] %vm259, %v1046
        %1079 = vst.msk [vmem:[#allocation3 + $0x248] sm:$0xff] %vm259, %v1047
        %1080 = vst.msk [vmem:[#allocation3 + $0x260] sm:$0xff] %vm259, %v1048
        %1081 = vst.msk [vmem:[#allocation3 + $0x278] sm:$0xff] %vm259, %v1049
        %1082 = vst.msk [vmem:[#allocation3 + $0x290] sm:$0xff] %vm259, %v1050
        %1083 = vst.msk [vmem:[#allocation3 + $0x2a8] sm:$0xff] %vm259, %v1051
        %1084 = vst.msk [vmem:[#allocation3 + $0x2c0] sm:$0xff] %vm259, %v1052
        %1085 = vst.msk [vmem:[#allocation3 + $0x2d8] sm:$0xff] %vm259, %v1053
        %1086 = vst.msk [vmem:[#allocation3 + $0x2f0] sm:$0xff] %vm259, %v1054
        %v1087 = vld [vmem:[%s347 + $0x2] sm:$0xff]
        %v1088 = vld [vmem:[%s347 + $0xa] sm:$0xff]
        %v1089 = vld [vmem:[%s347 + $0x1a] sm:$0xff]
        %v1090 = vld [vmem:[%s347 + $0x22] sm:$0xff]
        %v1091 = vld [vmem:[%s347 + $0x32] sm:$0xff]
        %v1092 = vld [vmem:[%s347 + $0x3a] sm:$0xff]
        %v1093 = vld [vmem:[%s347 + $0x4a] sm:$0xff]
        %v1094 = vld [vmem:[%s347 + $0x52] sm:$0xff]
        %v1095 = vld [vmem:[%s347 + $0x62] sm:$0xff]
        %v1096 = vld [vmem:[%s347 + $0x6a] sm:$0xff]
        %v1097 = vld [vmem:[%s347 + $0x7a] sm:$0xff]
        %v1098 = vld [vmem:[%s347 + $0x82] sm:$0xff]
        %v1099 = vld [vmem:[%s347 + $0x92] sm:$0xff]
        %v1100 = vld [vmem:[%s347 + $0x9a] sm:$0xff]
        %v1101 = vld [vmem:[%s347 + $0xaa] sm:$0xff]
        %v1102 = vld [vmem:[%s347 + $0xb2] sm:$0xff]
        %v1103 = vld [vmem:[%s347 + $0xc2] sm:$0xff]
        %v1104 = vld [vmem:[%s347 + $0xca] sm:$0xff]
        %v1105 = vld [vmem:[%s347 + $0xda] sm:$0xff]
        %v1106 = vld [vmem:[%s347 + $0xe2] sm:$0xff]
        %v1107 = vld [vmem:[%s347 + $0xf2] sm:$0xff]
        %v1108 = vld [vmem:[%s347 + $0xfa] sm:$0xff]
        %v1109 = vld [vmem:[%s347 + $0x10a] sm:$0xff]
        %v1110 = vld [vmem:[%s347 + $0x112] sm:$0xff]
        %v1111 = vld [vmem:[%s347 + $0x122] sm:$0xff]
        %v1112 = vld [vmem:[%s347 + $0x12a] sm:$0xff]
        %v1113 = vld [vmem:[%s347 + $0x13a] sm:$0xff]
        %v1114 = vld [vmem:[%s347 + $0x142] sm:$0xff]
        %v1115 = vld [vmem:[%s347 + $0x152] sm:$0xff]
        %v1116 = vld [vmem:[%s347 + $0x15a] sm:$0xff]
        %v1117 = vld [vmem:[%s347 + $0x16a] sm:$0xff]
        %v1118 = vld [vmem:[%s347 + $0x172] sm:$0xff]
        %1151 = vrot.lane.b32.xlu0 %v1087, 32
        %v1152 = vpop.permute.xlu0 %1151
        %1153 = vrot.lane.b32.xlu0 %v1088, 32
        %v1154 = vpop.permute.xlu0 %1153
        %1155 = vrot.lane.b32.xlu0 %v1089, 32
        %v1156 = vpop.permute.xlu0 %1155
        %1157 = vrot.lane.b32.xlu0 %v1090, 32
        %v1158 = vpop.permute.xlu0 %1157
        %1159 = vrot.lane.b32.xlu0 %v1091, 32
        %v1160 = vpop.permute.xlu0 %1159
        %1161 = vrot.lane.b32.xlu0 %v1092, 32
        %v1162 = vpop.permute.xlu0 %1161
        %1163 = vrot.lane.b32.xlu0 %v1093, 32
        %v1164 = vpop.permute.xlu0 %1163
        %1165 = vrot.lane.b32.xlu0 %v1094, 32
        %v1166 = vpop.permute.xlu0 %1165
        %1167 = vrot.lane.b32.xlu0 %v1095, 32
        %v1168 = vpop.permute.xlu0 %1167
        %1169 = vrot.lane.b32.xlu0 %v1096, 32
        %v1170 = vpop.permute.xlu0 %1169
        %1171 = vrot.lane.b32.xlu0 %v1097, 32
        %v1172 = vpop.permute.xlu0 %1171
        %1173 = vrot.lane.b32.xlu0 %v1098, 32
        %v1174 = vpop.permute.xlu0 %1173
        %1175 = vrot.lane.b32.xlu0 %v1099, 32
        %v1176 = vpop.permute.xlu0 %1175
        %1177 = vrot.lane.b32.xlu0 %v1100, 32
        %v1178 = vpop.permute.xlu0 %1177
        %1179 = vrot.lane.b32.xlu0 %v1101, 32
        %v1180 = vpop.permute.xlu0 %1179
        %1181 = vrot.lane.b32.xlu0 %v1102, 32
        %v1182 = vpop.permute.xlu0 %1181
        %1183 = vrot.lane.b32.xlu0 %v1103, 32
        %v1184 = vpop.permute.xlu0 %1183
        %1185 = vrot.lane.b32.xlu0 %v1104, 32
        %v1186 = vpop.permute.xlu0 %1185
        %1187 = vrot.lane.b32.xlu0 %v1105, 32
        %v1188 = vpop.permute.xlu0 %1187
        %1189 = vrot.lane.b32.xlu0 %v1106, 32
        %v1190 = vpop.permute.xlu0 %1189
        %1191 = vrot.lane.b32.xlu0 %v1107, 32
        %v1192 = vpop.permute.xlu0 %1191
        %1193 = vrot.lane.b32.xlu0 %v1108, 32
        %v1194 = vpop.permute.xlu0 %1193
        %1195 = vrot.lane.b32.xlu0 %v1109, 32
        %v1196 = vpop.permute.xlu0 %1195
        %1197 = vrot.lane.b32.xlu0 %v1110, 32
        %v1198 = vpop.permute.xlu0 %1197
        %1199 = vrot.lane.b32.xlu0 %v1111, 32
        %v1200 = vpop.permute.xlu0 %1199
        %1201 = vrot.lane.b32.xlu0 %v1112, 32
        %v1202 = vpop.permute.xlu0 %1201
        %1203 = vrot.lane.b32.xlu0 %v1113, 32
        %v1204 = vpop.permute.xlu0 %1203
        %1205 = vrot.lane.b32.xlu0 %v1114, 32
        %v1206 = vpop.permute.xlu0 %1205
        %1207 = vrot.lane.b32.xlu0 %v1115, 32
        %v1208 = vpop.permute.xlu0 %1207
        %1209 = vrot.lane.b32.xlu0 %v1116, 32
        %v1210 = vpop.permute.xlu0 %1209
        %1211 = vrot.lane.b32.xlu0 %v1117, 32
        %v1212 = vpop.permute.xlu0 %1211
        %1213 = vrot.lane.b32.xlu0 %v1118, 32
        %v1214 = vpop.permute.xlu0 %1213
        %1247 = vst.msk [vmem:[#allocation3 + $0x8] sm:$0xff] %vm604, %v1152
        %1248 = vst.msk [vmem:[#allocation3 + $0x20] sm:$0xff] %vm604, %v1154
        %1249 = vst.msk [vmem:[#allocation3 + $0x38] sm:$0xff] %vm604, %v1156
        %1250 = vst.msk [vmem:[#allocation3 + $0x50] sm:$0xff] %vm604, %v1158
        %1251 = vst.msk [vmem:[#allocation3 + $0x68] sm:$0xff] %vm604, %v1160
        %1252 = vst.msk [vmem:[#allocation3 + $0x80] sm:$0xff] %vm604, %v1162
        %1253 = vst.msk [vmem:[#allocation3 + $0x98] sm:$0xff] %vm604, %v1164
        %1254 = vst.msk [vmem:[#allocation3 + $0xb0] sm:$0xff] %vm604, %v1166
        %1255 = vst.msk [vmem:[#allocation3 + $0xc8] sm:$0xff] %vm604, %v1168
        %1256 = vst.msk [vmem:[#allocation3 + $0xe0] sm:$0xff] %vm604, %v1170
        %1257 = vst.msk [vmem:[#allocation3 + $0xf8] sm:$0xff] %vm604, %v1172
        %1258 = vst.msk [vmem:[#allocation3 + $0x110] sm:$0xff] %vm604, %v1174
        %1259 = vst.msk [vmem:[#allocation3 + $0x128] sm:$0xff] %vm604, %v1176
        %1260 = vst.msk [vmem:[#allocation3 + $0x140] sm:$0xff] %vm604, %v1178
        %1261 = vst.msk [vmem:[#allocation3 + $0x158] sm:$0xff] %vm604, %v1180
        %1262 = vst.msk [vmem:[#allocation3 + $0x170] sm:$0xff] %vm604, %v1182
        %1263 = vst.msk [vmem:[#allocation3 + $0x188] sm:$0xff] %vm604, %v1184
        %1264 = vst.msk [vmem:[#allocation3 + $0x1a0] sm:$0xff] %vm604, %v1186
        %1265 = vst.msk [vmem:[#allocation3 + $0x1b8] sm:$0xff] %vm604, %v1188
        %1266 = vst.msk [vmem:[#allocation3 + $0x1d0] sm:$0xff] %vm604, %v1190
        %1267 = vst.msk [vmem:[#allocation3 + $0x1e8] sm:$0xff] %vm604, %v1192
        %1268 = vst.msk [vmem:[#allocation3 + $0x200] sm:$0xff] %vm604, %v1194
        %1269 = vst.msk [vmem:[#allocation3 + $0x218] sm:$0xff] %vm604, %v1196
        %1270 = vst.msk [vmem:[#allocation3 + $0x230] sm:$0xff] %vm604, %v1198
        %1271 = vst.msk [vmem:[#allocation3 + $0x248] sm:$0xff] %vm604, %v1200
        %1272 = vst.msk [vmem:[#allocation3 + $0x260] sm:$0xff] %vm604, %v1202
        %1273 = vst.msk [vmem:[#allocation3 + $0x278] sm:$0xff] %vm604, %v1204
        %1274 = vst.msk [vmem:[#allocation3 + $0x290] sm:$0xff] %vm604, %v1206
        %1275 = vst.msk [vmem:[#allocation3 + $0x2a8] sm:$0xff] %vm604, %v1208
        %1276 = vst.msk [vmem:[#allocation3 + $0x2c0] sm:$0xff] %vm604, %v1210
        %1277 = vst.msk [vmem:[#allocation3 + $0x2d8] sm:$0xff] %vm604, %v1212
        %1278 = vst.msk [vmem:[#allocation3 + $0x2f0] sm:$0xff] %vm604, %v1214
        %s1279 = scalar_lea.vmem [#allocation2], 48
        %v1280 = vld [vmem:[%s1279] sm:$0xff]
        %v1281 = vld [vmem:[%s1279 + $0x8] sm:$0xff]
        %v1282 = vld [vmem:[%s1279 + $0x18] sm:$0xff]
        %v1283 = vld [vmem:[%s1279 + $0x20] sm:$0xff]
        %v1284 = vld [vmem:[%s1279 + $0x30] sm:$0xff]
        %v1285 = vld [vmem:[%s1279 + $0x38] sm:$0xff]
        %v1286 = vld [vmem:[%s1279 + $0x48] sm:$0xff]
        %v1287 = vld [vmem:[%s1279 + $0x50] sm:$0xff]
        %v1288 = vld [vmem:[%s1279 + $0x60] sm:$0xff]
        %v1289 = vld [vmem:[%s1279 + $0x68] sm:$0xff]
        %v1290 = vld [vmem:[%s1279 + $0x78] sm:$0xff]
        %v1291 = vld [vmem:[%s1279 + $0x80] sm:$0xff]
        %v1292 = vld [vmem:[%s1279 + $0x90] sm:$0xff]
        %v1293 = vld [vmem:[%s1279 + $0x98] sm:$0xff]
        %v1294 = vld [vmem:[%s1279 + $0xa8] sm:$0xff]
        %v1295 = vld [vmem:[%s1279 + $0xb0] sm:$0xff]
        %v1296 = vld [vmem:[%s1279 + $0xc0] sm:$0xff]
        %v1297 = vld [vmem:[%s1279 + $0xc8] sm:$0xff]
        %v1298 = vld [vmem:[%s1279 + $0xd8] sm:$0xff]
        %v1299 = vld [vmem:[%s1279 + $0xe0] sm:$0xff]
        %v1300 = vld [vmem:[%s1279 + $0xf0] sm:$0xff]
        %v1301 = vld [vmem:[%s1279 + $0xf8] sm:$0xff]
        %v1302 = vld [vmem:[%s1279 + $0x108] sm:$0xff]
        %v1303 = vld [vmem:[%s1279 + $0x110] sm:$0xff]
        %v1304 = vld [vmem:[%s1279 + $0x120] sm:$0xff]
        %v1305 = vld [vmem:[%s1279 + $0x128] sm:$0xff]
        %v1306 = vld [vmem:[%s1279 + $0x138] sm:$0xff]
        %v1307 = vld [vmem:[%s1279 + $0x140] sm:$0xff]
        %v1308 = vld [vmem:[%s1279 + $0x150] sm:$0xff]
        %v1309 = vld [vmem:[%s1279 + $0x158] sm:$0xff]
        %v1310 = vld [vmem:[%s1279 + $0x168] sm:$0xff]
        %v1311 = vld [vmem:[%s1279 + $0x170] sm:$0xff]
        %1344 = vrot.lane.b32.xlu0 %v1280, 64
        %v1345 = vpop.permute.xlu0 %1344
        %1346 = vrot.lane.b32.xlu0 %v1281, 64
        %v1347 = vpop.permute.xlu0 %1346
        %1348 = vrot.lane.b32.xlu0 %v1282, 64
        %v1349 = vpop.permute.xlu0 %1348
        %1350 = vrot.lane.b32.xlu0 %v1283, 64
        %v1351 = vpop.permute.xlu0 %1350
        %1352 = vrot.lane.b32.xlu0 %v1284, 64
        %v1353 = vpop.permute.xlu0 %1352
        %1354 = vrot.lane.b32.xlu0 %v1285, 64
        %v1355 = vpop.permute.xlu0 %1354
        %1356 = vrot.lane.b32.xlu0 %v1286, 64
        %v1357 = vpop.permute.xlu0 %1356
        %1358 = vrot.lane.b32.xlu0 %v1287, 64
        %v1359 = vpop.permute.xlu0 %1358
        %1360 = vrot.lane.b32.xlu0 %v1288, 64
        %v1361 = vpop.permute.xlu0 %1360
        %1362 = vrot.lane.b32.xlu0 %v1289, 64
        %v1363 = vpop.permute.xlu0 %1362
        %1364 = vrot.lane.b32.xlu0 %v1290, 64
        %v1365 = vpop.permute.xlu0 %1364
        %1366 = vrot.lane.b32.xlu0 %v1291, 64
        %v1367 = vpop.permute.xlu0 %1366
        %1368 = vrot.lane.b32.xlu0 %v1292, 64
        %v1369 = vpop.permute.xlu0 %1368
        %1370 = vrot.lane.b32.xlu0 %v1293, 64
        %v1371 = vpop.permute.xlu0 %1370
        %1372 = vrot.lane.b32.xlu0 %v1294, 64
        %v1373 = vpop.permute.xlu0 %1372
        %1374 = vrot.lane.b32.xlu0 %v1295, 64
        %v1375 = vpop.permute.xlu0 %1374
        %1376 = vrot.lane.b32.xlu0 %v1296, 64
        %v1377 = vpop.permute.xlu0 %1376
        %1378 = vrot.lane.b32.xlu0 %v1297, 64
        %v1379 = vpop.permute.xlu0 %1378
        %1380 = vrot.lane.b32.xlu0 %v1298, 64
        %v1381 = vpop.permute.xlu0 %1380
        %1382 = vrot.lane.b32.xlu0 %v1299, 64
        %v1383 = vpop.permute.xlu0 %1382
        %1384 = vrot.lane.b32.xlu0 %v1300, 64
        %v1385 = vpop.permute.xlu0 %1384
        %1386 = vrot.lane.b32.xlu0 %v1301, 64
        %v1387 = vpop.permute.xlu0 %1386
        %1388 = vrot.lane.b32.xlu0 %v1302, 64
        %v1389 = vpop.permute.xlu0 %1388
        %1390 = vrot.lane.b32.xlu0 %v1303, 64
        %v1391 = vpop.permute.xlu0 %1390
        %1392 = vrot.lane.b32.xlu0 %v1304, 64
        %v1393 = vpop.permute.xlu0 %1392
        %1394 = vrot.lane.b32.xlu0 %v1305, 64
        %v1395 = vpop.permute.xlu0 %1394
        %1396 = vrot.lane.b32.xlu0 %v1306, 64
        %v1397 = vpop.permute.xlu0 %1396
        %1398 = vrot.lane.b32.xlu0 %v1307, 64
        %v1399 = vpop.permute.xlu0 %1398
        %1400 = vrot.lane.b32.xlu0 %v1308, 64
        %v1401 = vpop.permute.xlu0 %1400
        %1402 = vrot.lane.b32.xlu0 %v1309, 64
        %v1403 = vpop.permute.xlu0 %1402
        %1404 = vrot.lane.b32.xlu0 %v1310, 64
        %v1405 = vpop.permute.xlu0 %1404
        %1406 = vrot.lane.b32.xlu0 %v1311, 64
        %v1407 = vpop.permute.xlu0 %1406
        %1440 = vst.msk [vmem:[#allocation3 + $0x8] sm:$0xff] %vm797, %v1345
        %1441 = vst.msk [vmem:[#allocation3 + $0x20] sm:$0xff] %vm797, %v1347
        %1442 = vst.msk [vmem:[#allocation3 + $0x38] sm:$0xff] %vm797, %v1349
        %1443 = vst.msk [vmem:[#allocation3 + $0x50] sm:$0xff] %vm797, %v1351
        %1444 = vst.msk [vmem:[#allocation3 + $0x68] sm:$0xff] %vm797, %v1353
        %1445 = vst.msk [vmem:[#allocation3 + $0x80] sm:$0xff] %vm797, %v1355
        %1446 = vst.msk [vmem:[#allocation3 + $0x98] sm:$0xff] %vm797, %v1357
        %1447 = vst.msk [vmem:[#allocation3 + $0xb0] sm:$0xff] %vm797, %v1359
        %1448 = vst.msk [vmem:[#allocation3 + $0xc8] sm:$0xff] %vm797, %v1361
        %1449 = vst.msk [vmem:[#allocation3 + $0xe0] sm:$0xff] %vm797, %v1363
        %1450 = vst.msk [vmem:[#allocation3 + $0xf8] sm:$0xff] %vm797, %v1365
        %1451 = vst.msk [vmem:[#allocation3 + $0x110] sm:$0xff] %vm797, %v1367
        %1452 = vst.msk [vmem:[#allocation3 + $0x128] sm:$0xff] %vm797, %v1369
        %1453 = vst.msk [vmem:[#allocation3 + $0x140] sm:$0xff] %vm797, %v1371
        %1454 = vst.msk [vmem:[#allocation3 + $0x158] sm:$0xff] %vm797, %v1373
        %1455 = vst.msk [vmem:[#allocation3 + $0x170] sm:$0xff] %vm797, %v1375
        %1456 = vst.msk [vmem:[#allocation3 + $0x188] sm:$0xff] %vm797, %v1377
        %1457 = vst.msk [vmem:[#allocation3 + $0x1a0] sm:$0xff] %vm797, %v1379
        %1458 = vst.msk [vmem:[#allocation3 + $0x1b8] sm:$0xff] %vm797, %v1381
        %1459 = vst.msk [vmem:[#allocation3 + $0x1d0] sm:$0xff] %vm797, %v1383
        %1460 = vst.msk [vmem:[#allocation3 + $0x1e8] sm:$0xff] %vm797, %v1385
        %1461 = vst.msk [vmem:[#allocation3 + $0x200] sm:$0xff] %vm797, %v1387
        %1462 = vst.msk [vmem:[#allocation3 + $0x218] sm:$0xff] %vm797, %v1389
        %1463 = vst.msk [vmem:[#allocation3 + $0x230] sm:$0xff] %vm797, %v1391
        %1464 = vst.msk [vmem:[#allocation3 + $0x248] sm:$0xff] %vm797, %v1393
        %1465 = vst.msk [vmem:[#allocation3 + $0x260] sm:$0xff] %vm797, %v1395
        %1466 = vst.msk [vmem:[#allocation3 + $0x278] sm:$0xff] %vm797, %v1397
        %1467 = vst.msk [vmem:[#allocation3 + $0x290] sm:$0xff] %vm797, %v1399
        %1468 = vst.msk [vmem:[#allocation3 + $0x2a8] sm:$0xff] %vm797, %v1401
        %1469 = vst.msk [vmem:[#allocation3 + $0x2c0] sm:$0xff] %vm797, %v1403
        %1470 = vst.msk [vmem:[#allocation3 + $0x2d8] sm:$0xff] %vm797, %v1405
        %1471 = vst.msk [vmem:[#allocation3 + $0x2f0] sm:$0xff] %vm797, %v1407
        %v1472 = vld [vmem:[%s1279 + $0x1] sm:$0xff]
        %v1473 = vld [vmem:[%s1279 + $0x9] sm:$0xff]
        %v1474 = vld [vmem:[%s1279 + $0x19] sm:$0xff]
        %v1475 = vld [vmem:[%s1279 + $0x21] sm:$0xff]
        %v1476 = vld [vmem:[%s1279 + $0x31] sm:$0xff]
        %v1477 = vld [vmem:[%s1279 + $0x39] sm:$0xff]
        %v1478 = vld [vmem:[%s1279 + $0x49] sm:$0xff]
        %v1479 = vld [vmem:[%s1279 + $0x51] sm:$0xff]
        %v1480 = vld [vmem:[%s1279 + $0x61] sm:$0xff]
        %v1481 = vld [vmem:[%s1279 + $0x69] sm:$0xff]
        %v1482 = vld [vmem:[%s1279 + $0x79] sm:$0xff]
        %v1483 = vld [vmem:[%s1279 + $0x81] sm:$0xff]
        %v1484 = vld [vmem:[%s1279 + $0x91] sm:$0xff]
        %v1485 = vld [vmem:[%s1279 + $0x99] sm:$0xff]
        %v1486 = vld [vmem:[%s1279 + $0xa9] sm:$0xff]
        %v1487 = vld [vmem:[%s1279 + $0xb1] sm:$0xff]
        %v1488 = vld [vmem:[%s1279 + $0xc1] sm:$0xff]
        %v1489 = vld [vmem:[%s1279 + $0xc9] sm:$0xff]
        %v1490 = vld [vmem:[%s1279 + $0xd9] sm:$0xff]
        %v1491 = vld [vmem:[%s1279 + $0xe1] sm:$0xff]
        %v1492 = vld [vmem:[%s1279 + $0xf1] sm:$0xff]
        %v1493 = vld [vmem:[%s1279 + $0xf9] sm:$0xff]
        %v1494 = vld [vmem:[%s1279 + $0x109] sm:$0xff]
        %v1495 = vld [vmem:[%s1279 + $0x111] sm:$0xff]
        %v1496 = vld [vmem:[%s1279 + $0x121] sm:$0xff]
        %v1497 = vld [vmem:[%s1279 + $0x129] sm:$0xff]
        %v1498 = vld [vmem:[%s1279 + $0x139] sm:$0xff]
        %v1499 = vld [vmem:[%s1279 + $0x141] sm:$0xff]
        %v1500 = vld [vmem:[%s1279 + $0x151] sm:$0xff]
        %v1501 = vld [vmem:[%s1279 + $0x159] sm:$0xff]
        %v1502 = vld [vmem:[%s1279 + $0x169] sm:$0xff]
        %v1503 = vld [vmem:[%s1279 + $0x171] sm:$0xff]
        %1536 = vrot.lane.b32.xlu0 %v1472, 96
        %v1537 = vpop.permute.xlu0 %1536
        %1538 = vrot.lane.b32.xlu0 %v1473, 96
        %v1539 = vpop.permute.xlu0 %1538
        %1540 = vrot.lane.b32.xlu0 %v1474, 96
        %v1541 = vpop.permute.xlu0 %1540
        %1542 = vrot.lane.b32.xlu0 %v1475, 96
        %v1543 = vpop.permute.xlu0 %1542
        %1544 = vrot.lane.b32.xlu0 %v1476, 96
        %v1545 = vpop.permute.xlu0 %1544
        %1546 = vrot.lane.b32.xlu0 %v1477, 96
        %v1547 = vpop.permute.xlu0 %1546
        %1548 = vrot.lane.b32.xlu0 %v1478, 96
        %v1549 = vpop.permute.xlu0 %1548
        %1550 = vrot.lane.b32.xlu0 %v1479, 96
        %v1551 = vpop.permute.xlu0 %1550
        %1552 = vrot.lane.b32.xlu0 %v1480, 96
        %v1553 = vpop.permute.xlu0 %1552
        %1554 = vrot.lane.b32.xlu0 %v1481, 96
        %v1555 = vpop.permute.xlu0 %1554
        %1556 = vrot.lane.b32.xlu0 %v1482, 96
        %v1557 = vpop.permute.xlu0 %1556
        %1558 = vrot.lane.b32.xlu0 %v1483, 96
        %v1559 = vpop.permute.xlu0 %1558
        %1560 = vrot.lane.b32.xlu0 %v1484, 96
        %v1561 = vpop.permute.xlu0 %1560
        %1562 = vrot.lane.b32.xlu0 %v1485, 96
        %v1563 = vpop.permute.xlu0 %1562
        %1564 = vrot.lane.b32.xlu0 %v1486, 96
        %v1565 = vpop.permute.xlu0 %1564
        %1566 = vrot.lane.b32.xlu0 %v1487, 96
        %v1567 = vpop.permute.xlu0 %1566
        %1568 = vrot.lane.b32.xlu0 %v1488, 96
        %v1569 = vpop.permute.xlu0 %1568
        %1570 = vrot.lane.b32.xlu0 %v1489, 96
        %v1571 = vpop.permute.xlu0 %1570
        %1572 = vrot.lane.b32.xlu0 %v1490, 96
        %v1573 = vpop.permute.xlu0 %1572
        %1574 = vrot.lane.b32.xlu0 %v1491, 96
        %v1575 = vpop.permute.xlu0 %1574
        %1576 = vrot.lane.b32.xlu0 %v1492, 96
        %v1577 = vpop.permute.xlu0 %1576
        %1578 = vrot.lane.b32.xlu0 %v1493, 96
        %v1579 = vpop.permute.xlu0 %1578
        %1580 = vrot.lane.b32.xlu0 %v1494, 96
        %v1581 = vpop.permute.xlu0 %1580
        %1582 = vrot.lane.b32.xlu0 %v1495, 96
        %v1583 = vpop.permute.xlu0 %1582
        %1584 = vrot.lane.b32.xlu0 %v1496, 96
        %v1585 = vpop.permute.xlu0 %1584
        %1586 = vrot.lane.b32.xlu0 %v1497, 96
        %v1587 = vpop.permute.xlu0 %1586
        %1588 = vrot.lane.b32.xlu0 %v1498, 96
        %v1589 = vpop.permute.xlu0 %1588
        %1590 = vrot.lane.b32.xlu0 %v1499, 96
        %v1591 = vpop.permute.xlu0 %1590
        %1592 = vrot.lane.b32.xlu0 %v1500, 96
        %v1593 = vpop.permute.xlu0 %1592
        %1594 = vrot.lane.b32.xlu0 %v1501, 96
        %v1595 = vpop.permute.xlu0 %1594
        %1596 = vrot.lane.b32.xlu0 %v1502, 96
        %v1597 = vpop.permute.xlu0 %1596
        %1598 = vrot.lane.b32.xlu0 %v1503, 96
        %v1599 = vpop.permute.xlu0 %1598
        %1632 = vst.msk [vmem:[#allocation3 + $0x8] sm:$0xff] %vm990, %v1537
        %1633 = vst.msk [vmem:[#allocation3 + $0x20] sm:$0xff] %vm990, %v1539
        %1634 = vst.msk [vmem:[#allocation3 + $0x38] sm:$0xff] %vm990, %v1541
        %1635 = vst.msk [vmem:[#allocation3 + $0x50] sm:$0xff] %vm990, %v1543
        %1636 = vst.msk [vmem:[#allocation3 + $0x68] sm:$0xff] %vm990, %v1545
        %1637 = vst.msk [vmem:[#allocation3 + $0x80] sm:$0xff] %vm990, %v1547
        %1638 = vst.msk [vmem:[#allocation3 + $0x98] sm:$0xff] %vm990, %v1549
        %1639 = vst.msk [vmem:[#allocation3 + $0xb0] sm:$0xff] %vm990, %v1551
        %1640 = vst.msk [vmem:[#allocation3 + $0xc8] sm:$0xff] %vm990, %v1553
        %1641 = vst.msk [vmem:[#allocation3 + $0xe0] sm:$0xff] %vm990, %v1555
        %1642 = vst.msk [vmem:[#allocation3 + $0xf8] sm:$0xff] %vm990, %v1557
        %1643 = vst.msk [vmem:[#allocation3 + $0x110] sm:$0xff] %vm990, %v1559
        %1644 = vst.msk [vmem:[#allocation3 + $0x128] sm:$0xff] %vm990, %v1561
        %1645 = vst.msk [vmem:[#allocation3 + $0x140] sm:$0xff] %vm990, %v1563
        %1646 = vst.msk [vmem:[#allocation3 + $0x158] sm:$0xff] %vm990, %v1565
        %1647 = vst.msk [vmem:[#allocation3 + $0x170] sm:$0xff] %vm990, %v1567
        %1648 = vst.msk [vmem:[#allocation3 + $0x188] sm:$0xff] %vm990, %v1569
        %1649 = vst.msk [vmem:[#allocation3 + $0x1a0] sm:$0xff] %vm990, %v1571
        %1650 = vst.msk [vmem:[#allocation3 + $0x1b8] sm:$0xff] %vm990, %v1573
        %1651 = vst.msk [vmem:[#allocation3 + $0x1d0] sm:$0xff] %vm990, %v1575
        %1652 = vst.msk [vmem:[#allocation3 + $0x1e8] sm:$0xff] %vm990, %v1577
        %1653 = vst.msk [vmem:[#allocation3 + $0x200] sm:$0xff] %vm990, %v1579
        %1654 = vst.msk [vmem:[#allocation3 + $0x218] sm:$0xff] %vm990, %v1581
        %1655 = vst.msk [vmem:[#allocation3 + $0x230] sm:$0xff] %vm990, %v1583
        %1656 = vst.msk [vmem:[#allocation3 + $0x248] sm:$0xff] %vm990, %v1585
        %1657 = vst.msk [vmem:[#allocation3 + $0x260] sm:$0xff] %vm990, %v1587
        %1658 = vst.msk [vmem:[#allocation3 + $0x278] sm:$0xff] %vm990, %v1589
        %1659 = vst.msk [vmem:[#allocation3 + $0x290] sm:$0xff] %vm990, %v1591
        %1660 = vst.msk [vmem:[#allocation3 + $0x2a8] sm:$0xff] %vm990, %v1593
        %1661 = vst.msk [vmem:[#allocation3 + $0x2c0] sm:$0xff] %vm990, %v1595
        %1662 = vst.msk [vmem:[#allocation3 + $0x2d8] sm:$0xff] %vm990, %v1597
        %1663 = vst.msk [vmem:[#allocation3 + $0x2f0] sm:$0xff] %vm990, %v1599
        %v1664 = vld [vmem:[%s1279 + $0x2] sm:$0xff]
        %v1665 = vld [vmem:[%s1279 + $0xa] sm:$0xff]
        %v1666 = vld [vmem:[%s1279 + $0x1a] sm:$0xff]
        %v1667 = vld [vmem:[%s1279 + $0x22] sm:$0xff]
        %v1668 = vld [vmem:[%s1279 + $0x32] sm:$0xff]
        %v1669 = vld [vmem:[%s1279 + $0x3a] sm:$0xff]
        %v1670 = vld [vmem:[%s1279 + $0x4a] sm:$0xff]
        %v1671 = vld [vmem:[%s1279 + $0x52] sm:$0xff]
        %v1672 = vld [vmem:[%s1279 + $0x62] sm:$0xff]
        %v1673 = vld [vmem:[%s1279 + $0x6a] sm:$0xff]
        %v1674 = vld [vmem:[%s1279 + $0x7a] sm:$0xff]
        %v1675 = vld [vmem:[%s1279 + $0x82] sm:$0xff]
        %v1676 = vld [vmem:[%s1279 + $0x92] sm:$0xff]
        %v1677 = vld [vmem:[%s1279 + $0x9a] sm:$0xff]
        %v1678 = vld [vmem:[%s1279 + $0xaa] sm:$0xff]
        %v1679 = vld [vmem:[%s1279 + $0xb2] sm:$0xff]
        %v1680 = vld [vmem:[%s1279 + $0xc2] sm:$0xff]
        %v1681 = vld [vmem:[%s1279 + $0xca] sm:$0xff]
        %v1682 = vld [vmem:[%s1279 + $0xda] sm:$0xff]
        %v1683 = vld [vmem:[%s1279 + $0xe2] sm:$0xff]
        %v1684 = vld [vmem:[%s1279 + $0xf2] sm:$0xff]
        %v1685 = vld [vmem:[%s1279 + $0xfa] sm:$0xff]
        %v1686 = vld [vmem:[%s1279 + $0x10a] sm:$0xff]
        %v1687 = vld [vmem:[%s1279 + $0x112] sm:$0xff]
        %v1688 = vld [vmem:[%s1279 + $0x122] sm:$0xff]
        %v1689 = vld [vmem:[%s1279 + $0x12a] sm:$0xff]
        %v1690 = vld [vmem:[%s1279 + $0x13a] sm:$0xff]
        %v1691 = vld [vmem:[%s1279 + $0x142] sm:$0xff]
        %v1692 = vld [vmem:[%s1279 + $0x152] sm:$0xff]
        %v1693 = vld [vmem:[%s1279 + $0x15a] sm:$0xff]
        %v1694 = vld [vmem:[%s1279 + $0x16a] sm:$0xff]
        %v1695 = vld [vmem:[%s1279 + $0x172] sm:$0xff]
        %1696 = vst.msk [vmem:[#allocation3 + $0x10] sm:$0xff] %vm259, %v1664
        %1697 = vst.msk [vmem:[#allocation3 + $0x28] sm:$0xff] %vm259, %v1665
        %1698 = vst.msk [vmem:[#allocation3 + $0x40] sm:$0xff] %vm259, %v1666
        %1699 = vst.msk [vmem:[#allocation3 + $0x58] sm:$0xff] %vm259, %v1667
        %1700 = vst.msk [vmem:[#allocation3 + $0x70] sm:$0xff] %vm259, %v1668
        %1701 = vst.msk [vmem:[#allocation3 + $0x88] sm:$0xff] %vm259, %v1669
        %1702 = vst.msk [vmem:[#allocation3 + $0xa0] sm:$0xff] %vm259, %v1670
        %1703 = vst.msk [vmem:[#allocation3 + $0xb8] sm:$0xff] %vm259, %v1671
        %1704 = vst.msk [vmem:[#allocation3 + $0xd0] sm:$0xff] %vm259, %v1672
        %1705 = vst.msk [vmem:[#allocation3 + $0xe8] sm:$0xff] %vm259, %v1673
        %1706 = vst.msk [vmem:[#allocation3 + $0x100] sm:$0xff] %vm259, %v1674
        %1707 = vst.msk [vmem:[#allocation3 + $0x118] sm:$0xff] %vm259, %v1675
        %1708 = vst.msk [vmem:[#allocation3 + $0x130] sm:$0xff] %vm259, %v1676
        %1709 = vst.msk [vmem:[#allocation3 + $0x148] sm:$0xff] %vm259, %v1677
        %1710 = vst.msk [vmem:[#allocation3 + $0x160] sm:$0xff] %vm259, %v1678
        %1711 = vst.msk [vmem:[#allocation3 + $0x178] sm:$0xff] %vm259, %v1679
        %1712 = vst.msk [vmem:[#allocation3 + $0x190] sm:$0xff] %vm259, %v1680
        %1713 = vst.msk [vmem:[#allocation3 + $0x1a8] sm:$0xff] %vm259, %v1681
        %1714 = vst.msk [vmem:[#allocation3 + $0x1c0] sm:$0xff] %vm259, %v1682
        %1715 = vst.msk [vmem:[#allocation3 + $0x1d8] sm:$0xff] %vm259, %v1683
        %1716 = vst.msk [vmem:[#allocation3 + $0x1f0] sm:$0xff] %vm259, %v1684
        %1717 = vst.msk [vmem:[#allocation3 + $0x208] sm:$0xff] %vm259, %v1685
        %1718 = vst.msk [vmem:[#allocation3 + $0x220] sm:$0xff] %vm259, %v1686
        %1719 = vst.msk [vmem:[#allocation3 + $0x238] sm:$0xff] %vm259, %v1687
        %1720 = vst.msk [vmem:[#allocation3 + $0x250] sm:$0xff] %vm259, %v1688
        %1721 = vst.msk [vmem:[#allocation3 + $0x268] sm:$0xff] %vm259, %v1689
        %1722 = vst.msk [vmem:[#allocation3 + $0x280] sm:$0xff] %vm259, %v1690
        %1723 = vst.msk [vmem:[#allocation3 + $0x298] sm:$0xff] %vm259, %v1691
        %1724 = vst.msk [vmem:[#allocation3 + $0x2b0] sm:$0xff] %vm259, %v1692
        %1725 = vst.msk [vmem:[#allocation3 + $0x2c8] sm:$0xff] %vm259, %v1693
        %1726 = vst.msk [vmem:[#allocation3 + $0x2e0] sm:$0xff] %vm259, %v1694
        %1727 = vst.msk [vmem:[#allocation3 + $0x2f8] sm:$0xff] %vm259, %v1695
        %v1728 = vld [vmem:[#allocation3] sm:$0xff]
        %v1729 = vld [vmem:[#allocation3 + $0x8] sm:$0xff]
        %v1730 = vld [vmem:[#allocation3 + $0x10] sm:$0xff]
        %v1731 = vld [vmem:[#allocation3 + $0x18] sm:$0xff]
        %v1732 = vld [vmem:[#allocation3 + $0x20] sm:$0xff]
        %v1733 = vld [vmem:[#allocation3 + $0x28] sm:$0xff]
        %v1734 = vld [vmem:[#allocation3 + $0x30] sm:$0xff]
        %v1735 = vld [vmem:[#allocation3 + $0x38] sm:$0xff]
        %v1736 = vld [vmem:[#allocation3 + $0x40] sm:$0xff]
        %v1737 = vld [vmem:[#allocation3 + $0x48] sm:$0xff]
        %v1738 = vld [vmem:[#allocation3 + $0x50] sm:$0xff]
        %v1739 = vld [vmem:[#allocation3 + $0x58] sm:$0xff]
        %v1740 = vld [vmem:[#allocation3 + $0x60] sm:$0xff]
        %v1741 = vld [vmem:[#allocation3 + $0x68] sm:$0xff]
        %v1742 = vld [vmem:[#allocation3 + $0x70] sm:$0xff]
        %v1743 = vld [vmem:[#allocation3 + $0x78] sm:$0xff]
        %v1744 = vld [vmem:[#allocation3 + $0x80] sm:$0xff]
        %v1745 = vld [vmem:[#allocation3 + $0x88] sm:$0xff]
        %v1746 = vld [vmem:[#allocation3 + $0x90] sm:$0xff]
        %v1747 = vld [vmem:[#allocation3 + $0x98] sm:$0xff]
        %v1748 = vld [vmem:[#allocation3 + $0xa0] sm:$0xff]
        %v1749 = vld [vmem:[#allocation3 + $0xa8] sm:$0xff]
        %v1750 = vld [vmem:[#allocation3 + $0xb0] sm:$0xff]
        %v1751 = vld [vmem:[#allocation3 + $0xb8] sm:$0xff]
        %v1752 = vld [vmem:[#allocation3 + $0xc0] sm:$0xff]
        %v1753 = vld [vmem:[#allocation3 + $0xc8] sm:$0xff]
        %v1754 = vld [vmem:[#allocation3 + $0xd0] sm:$0xff]
        %v1755 = vld [vmem:[#allocation3 + $0xd8] sm:$0xff]
        %v1756 = vld [vmem:[#allocation3 + $0xe0] sm:$0xff]
        %v1757 = vld [vmem:[#allocation3 + $0xe8] sm:$0xff]
        %v1758 = vld [vmem:[#allocation3 + $0xf0] sm:$0xff]
        %v1759 = vld [vmem:[#allocation3 + $0xf8] sm:$0xff]
        %v1760 = vld [vmem:[#allocation3 + $0x100] sm:$0xff]
        %v1761 = vld [vmem:[#allocation3 + $0x108] sm:$0xff]
        %v1762 = vld [vmem:[#allocation3 + $0x110] sm:$0xff]
        %v1763 = vld [vmem:[#allocation3 + $0x118] sm:$0xff]
        %v1764 = vld [vmem:[#allocation3 + $0x120] sm:$0xff]
        %v1765 = vld [vmem:[#allocation3 + $0x128] sm:$0xff]
        %v1766 = vld [vmem:[#allocation3 + $0x130] sm:$0xff]
        %v1767 = vld [vmem:[#allocation3 + $0x138] sm:$0xff]
        %v1768 = vld [vmem:[#allocation3 + $0x140] sm:$0xff]
        %v1769 = vld [vmem:[#allocation3 + $0x148] sm:$0xff]
        %v1770 = vld [vmem:[#allocation3 + $0x150] sm:$0xff]
        %v1771 = vld [vmem:[#allocation3 + $0x158] sm:$0xff]
        %v1772 = vld [vmem:[#allocation3 + $0x160] sm:$0xff]
        %v1773 = vld [vmem:[#allocation3 + $0x168] sm:$0xff]
        %v1774 = vld [vmem:[#allocation3 + $0x170] sm:$0xff]
        %v1775 = vld [vmem:[#allocation3 + $0x178] sm:$0xff]
        %v1776 = vld [vmem:[#allocation3 + $0x180] sm:$0xff]
        %v1777 = vld [vmem:[#allocation3 + $0x188] sm:$0xff]
        %v1778 = vld [vmem:[#allocation3 + $0x190] sm:$0xff]
        %v1779 = vld [vmem:[#allocation3 + $0x198] sm:$0xff]
        %v1780 = vld [vmem:[#allocation3 + $0x1a0] sm:$0xff]
        %v1781 = vld [vmem:[#allocation3 + $0x1a8] sm:$0xff]
        %v1782 = vld [vmem:[#allocation3 + $0x1b0] sm:$0xff]
        %v1783 = vld [vmem:[#allocation3 + $0x1b8] sm:$0xff]
        %v1784 = vld [vmem:[#allocation3 + $0x1c0] sm:$0xff]
        %v1785 = vld [vmem:[#allocation3 + $0x1c8] sm:$0xff]
        %v1786 = vld [vmem:[#allocation3 + $0x1d0] sm:$0xff]
        %v1787 = vld [vmem:[#allocation3 + $0x1d8] sm:$0xff]
        %v1788 = vld [vmem:[#allocation3 + $0x1e0] sm:$0xff]
        %v1789 = vld [vmem:[#allocation3 + $0x1e8] sm:$0xff]
        %v1790 = vld [vmem:[#allocation3 + $0x1f0] sm:$0xff]
        %v1791 = vld [vmem:[#allocation3 + $0x1f8] sm:$0xff]
        %v1792 = vld [vmem:[#allocation3 + $0x200] sm:$0xff]
        %v1793 = vld [vmem:[#allocation3 + $0x208] sm:$0xff]
        %v1794 = vld [vmem:[#allocation3 + $0x210] sm:$0xff]
        %v1795 = vld [vmem:[#allocation3 + $0x218] sm:$0xff]
        %v1796 = vld [vmem:[#allocation3 + $0x220] sm:$0xff]
        %v1797 = vld [vmem:[#allocation3 + $0x228] sm:$0xff]
        %v1798 = vld [vmem:[#allocation3 + $0x230] sm:$0xff]
        %v1799 = vld [vmem:[#allocation3 + $0x238] sm:$0xff]
        %v1800 = vld [vmem:[#allocation3 + $0x240] sm:$0xff]
        %v1801 = vld [vmem:[#allocation3 + $0x248] sm:$0xff]
        %v1802 = vld [vmem:[#allocation3 + $0x250] sm:$0xff]
        %v1803 = vld [vmem:[#allocation3 + $0x258] sm:$0xff]
        %v1804 = vld [vmem:[#allocation3 + $0x260] sm:$0xff]
        %v1805 = vld [vmem:[#allocation3 + $0x268] sm:$0xff]
        %v1806 = vld [vmem:[#allocation3 + $0x270] sm:$0xff]
        %v1807 = vld [vmem:[#allocation3 + $0x278] sm:$0xff]
        %v1808 = vld [vmem:[#allocation3 + $0x280] sm:$0xff]
        %v1809 = vld [vmem:[#allocation3 + $0x288] sm:$0xff]
        %v1810 = vld [vmem:[#allocation3 + $0x290] sm:$0xff]
        %v1811 = vld [vmem:[#allocation3 + $0x298] sm:$0xff]
        %v1812 = vld [vmem:[#allocation3 + $0x2a0] sm:$0xff]
        %v1813 = vld [vmem:[#allocation3 + $0x2a8] sm:$0xff]
        %v1814 = vld [vmem:[#allocation3 + $0x2b0] sm:$0xff]
        %v1815 = vld [vmem:[#allocation3 + $0x2b8] sm:$0xff]
        %v1816 = vld [vmem:[#allocation3 + $0x2c0] sm:$0xff]
        %v1817 = vld [vmem:[#allocation3 + $0x2c8] sm:$0xff]
        %v1818 = vld [vmem:[#allocation3 + $0x2d0] sm:$0xff]
        %v1819 = vld [vmem:[#allocation3 + $0x2d8] sm:$0xff]
        %v1820 = vld [vmem:[#allocation3 + $0x2e0] sm:$0xff]
        %v1821 = vld [vmem:[#allocation3 + $0x2e8] sm:$0xff]
        %v1822 = vld [vmem:[#allocation3 + $0x2f0] sm:$0xff]
        %v1823 = vld [vmem:[#allocation3 + $0x2f8] sm:$0xff]
        %v1825 = vsel %vm259, %v1730, 0
        %v1828 = vsel %vm259, %v1733, 0
        %v1831 = vsel %vm259, %v1736, 0
        %v1834 = vsel %vm259, %v1739, 0
        %v1837 = vsel %vm259, %v1742, 0
        %v1840 = vsel %vm259, %v1745, 0
        %v1843 = vsel %vm259, %v1748, 0
        %v1846 = vsel %vm259, %v1751, 0
        %v1849 = vsel %vm259, %v1754, 0
        %v1852 = vsel %vm259, %v1757, 0
        %v1855 = vsel %vm259, %v1760, 0
        %v1858 = vsel %vm259, %v1763, 0
        %v1861 = vsel %vm259, %v1766, 0
        %v1864 = vsel %vm259, %v1769, 0
        %v1867 = vsel %vm259, %v1772, 0
        %v1870 = vsel %vm259, %v1775, 0
        %v1873 = vsel %vm259, %v1778, 0
        %v1876 = vsel %vm259, %v1781, 0
        %v1879 = vsel %vm259, %v1784, 0
        %v1882 = vsel %vm259, %v1787, 0
        %v1885 = vsel %vm259, %v1790, 0
        %v1888 = vsel %vm259, %v1793, 0
        %v1891 = vsel %vm259, %v1796, 0
        %v1894 = vsel %vm259, %v1799, 0
        %v1897 = vsel %vm259, %v1802, 0
        %v1900 = vsel %vm259, %v1805, 0
        %v1903 = vsel %vm259, %v1808, 0
        %v1906 = vsel %vm259, %v1811, 0
        %v1909 = vsel %vm259, %v1814, 0
        %v1912 = vsel %vm259, %v1817, 0
        %v1915 = vsel %vm259, %v1820, 0
        %v1918 = vsel %vm259, %v1823, 0
        %1920 = vmatprep.subr.mxu0 0.0
        %1921 = vmatpush1.msra.mxu0 %v189
        %1922 = vmatprep.subr.mxu0 0.0
        %1923 = vmatpush1.msra.mxu0 %v190
        %1924 = vmatprep.subr.mxu0 0.0
        %1925 = vmatpush1.msra.mxu0 %v191
        %1926 = vmatprep.subr.mxu0 0.0
        %1927 = vmatpush1.msra.mxu0 %v192
        %1928 = vmatprep.subr.mxu0 0.0
        %1929 = vmatpush1.msra.mxu0 %v193
        %1930 = vmatprep.subr.mxu0 0.0
        %1931 = vmatpush1.msra.mxu0 %v194
        %1932 = vmatprep.subr.mxu0 0.0
        %1933 = vmatpush1.msra.mxu0 %v195
        %1934 = vmatprep.subr.mxu0 0.0
        %1935 = vmatpush1.msra.mxu0 %v196
        %1936 = vmatprep.subr.mxu0 0.0
        %1937 = vmatpush1.msra.mxu0 %v197
        %1938 = vmatprep.subr.mxu0 0.0
        %1939 = vmatpush1.msra.mxu0 %v198
        %1940 = vmatprep.subr.mxu0 0.0
        %1941 = vmatpush1.msra.mxu0 %v199
        %1942 = vmatprep.subr.mxu0 0.0
        %1943 = vmatpush1.msra.mxu0 %v200
        %1944 = vmatprep.subr.mxu0 0.0
        %1945 = vmatpush1.msra.mxu0 %v201
        %1946 = vmatprep.subr.mxu0 0.0
        %1947 = vmatpush1.msra.mxu0 %v202
        %1948 = vmatprep.subr.mxu0 0.0
        %1949 = vmatpush1.msra.mxu0 %v203
        %1950 = vmatprep.subr.mxu0 0.0
        %1951 = vmatpush1.msra.mxu0 %v204
        %1952 = vmatprep.subr.mxu0 0.0
        %1953 = vmatpush1.msra.mxu0 %v205
        %1954 = vmatprep.subr.mxu0 0.0
        %1955 = vmatpush1.msra.mxu0 %v206
        %1956 = vmatprep.subr.mxu0 0.0
        %1957 = vmatpush1.msra.mxu0 %v207
        %1958 = vmatprep.subr.mxu0 0.0
        %1959 = vmatpush1.msra.mxu0 %v208
        %1960 = vmatprep.subr.mxu0 0.0
        %1961 = vmatpush1.msra.mxu0 %v209
        %1962 = vmatprep.subr.mxu0 0.0
        %1963 = vmatpush1.msra.mxu0 %v210
        %1964 = vmatprep.subr.mxu0 0.0
        %1965 = vmatpush1.msra.mxu0 %v211
        %1966 = vmatprep.subr.mxu0 0.0
        %1967 = vmatpush1.msra.mxu0 %v212
        %1968 = vmatprep.subr.mxu0 0.0
        %1969 = vmatpush1.msra.mxu0 %v213
        %1970 = vmatprep.subr.mxu0 0.0
        %1971 = vmatpush1.msra.mxu0 %v214
        %1972 = vmatprep.subr.mxu0 0.0
        %1973 = vmatpush1.msra.mxu0 %v215
        %1974 = vmatprep.subr.mxu0 0.0
        %1975 = vmatpush1.msra.mxu0 %v216
        %1976 = vmatprep.subr.mxu0 0.0
        %1977 = vmatpush1.msra.mxu0 %v217
        %1978 = vmatprep.subr.mxu0 0.0
        %1979 = vmatpush1.msra.mxu0 %v218
        %1980 = vmatprep.subr.mxu0 0.0
        %1981 = vmatpush1.msra.mxu0 %v219
        %1982 = vmatprep.subr.mxu0 0.0
        %1983 = vmatpush1.msra.mxu0 %v220
        %1984 = vmatprep.mubr.f32.mxu0 %v1729
        %1985 = vmatmul.mubr.f32.gmra.mrb[0].mxu0 %v1728
        %v1986 = vpop.f32.mrb[0].mxu0
        %v1987 = vadd.f32 0.0, %v1986
        %v1988 = vpop.f32.mrb[0].mxu0
        %1989 = vmatprep.mubr.f32.mxu0 %v1732
        %1990 = vmatmul.mubr.f32.gmra.mrb[0].mxu0 %v1731
        %v1991 = vpop.f32.mrb[0].mxu0
        %v1992 = vadd.f32 0.0, %v1991
        %v1993 = vpop.f32.mrb[0].mxu0
        %1994 = vmatprep.mubr.f32.mxu0 %v1735
        %1995 = vmatmul.mubr.f32.gmra.mrb[0].mxu0 %v1734
        %v1996 = vpop.f32.mrb[0].mxu0
        %v1997 = vadd.f32 0.0, %v1996
        %v1998 = vpop.f32.mrb[0].mxu0
        %1999 = vmatprep.mubr.f32.mxu0 %v1738
        %2000 = vmatmul.mubr.f32.gmra.mrb[0].mxu0 %v1737
        %v2001 = vpop.f32.mrb[0].mxu0
        %v2002 = vadd.f32 0.0, %v2001
        %v2003 = vpop.f32.mrb[0].mxu0
        %2004 = vmatprep.mubr.f32.mxu0 %v1741
        %2005 = vmatmul.mubr.f32.gmra.mrb[0].mxu0 %v1740
        %v2006 = vpop.f32.mrb[0].mxu0
        %v2007 = vadd.f32 0.0, %v2006
        %v2008 = vpop.f32.mrb[0].mxu0
        %2009 = vmatprep.mubr.f32.mxu0 %v1744
        %2010 = vmatmul.mubr.f32.gmra.mrb[0].mxu0 %v1743
        %v2011 = vpop.f32.mrb[0].mxu0
        %v2012 = vadd.f32 0.0, %v2011
        %v2013 = vpop.f32.mrb[0].mxu0
        %2014 = vmatprep.mubr.f32.mxu0 %v1747
        %2015 = vmatmul.mubr.f32.gmra.mrb[0].mxu0 %v1746
        %v2016 = vpop.f32.mrb[0].mxu0
        %v2017 = vadd.f32 0.0, %v2016
        %v2018 = vpop.f32.mrb[0].mxu0
        %2019 = vmatprep.mubr.f32.mxu0 %v1750
        %2020 = vmatmul.mubr.f32.gmra.mrb[0].mxu0 %v1749
        %v2021 = vpop.f32.mrb[0].mxu0
        %v2022 = vadd.f32 0.0, %v2021
        %v2023 = vpop.f32.mrb[0].mxu0
        %2024 = vmatprep.mubr.f32.mxu0 %v1753
        %2025 = vmatmul.mubr.f32.gmra.mrb[0].mxu0 %v1752
        %v2026 = vpop.f32.mrb[0].mxu0
        %v2027 = vadd.f32 0.0, %v2026
        %v2028 = vpop.f32.mrb[0].mxu0
        %2029 = vmatprep.mubr.f32.mxu0 %v1756
        %2030 = vmatmul.mubr.f32.gmra.mrb[0].mxu0 %v1755
        %v2031 = vpop.f32.mrb[0].mxu0
        %v2032 = vadd.f32 0.0, %v2031
        %v2033 = vpop.f32.mrb[0].mxu0
        %2034 = vmatprep.mubr.f32.mxu0 %v1759
        %2035 = vmatmul.mubr.f32.gmra.mrb[0].mxu0 %v1758
        %v2036 = vpop.f32.mrb[0].mxu0
        %v2037 = vadd.f32 0.0, %v2036
        %v2038 = vpop.f32.mrb[0].mxu0
        %2039 = vmatprep.mubr.f32.mxu0 %v1762
        %2040 = vmatmul.mubr.f32.gmra.mrb[0].mxu0 %v1761
        %v2041 = vpop.f32.mrb[0].mxu0
        %v2042 = vadd.f32 0.0, %v2041
        %v2043 = vpop.f32.mrb[0].mxu0
        %2044 = vmatprep.mubr.f32.mxu0 %v1765
        %2045 = vmatmul.mubr.f32.gmra.mrb[0].mxu0 %v1764
        %v2046 = vpop.f32.mrb[0].mxu0
        %v2047 = vadd.f32 0.0, %v2046
        %v2048 = vpop.f32.mrb[0].mxu0
        %2049 = vmatprep.mubr.f32.mxu0 %v1768
        %2050 = vmatmul.mubr.f32.gmra.mrb[0].mxu0 %v1767
        %v2051 = vpop.f32.mrb[0].mxu0
        %v2052 = vadd.f32 0.0, %v2051
        %v2053 = vpop.f32.mrb[0].mxu0
        %2054 = vmatprep.mubr.f32.mxu0 %v1771
        %2055 = vmatmul.mubr.f32.gmra.mrb[0].mxu0 %v1770
        %v2056 = vpop.f32.mrb[0].mxu0
        %v2057 = vadd.f32 0.0, %v2056
        %v2058 = vpop.f32.mrb[0].mxu0
        %2059 = vmatprep.mubr.f32.mxu0 %v1774
        %2060 = vmatmul.mubr.f32.gmra.mrb[0].mxu0 %v1773
        %v2061 = vpop.f32.mrb[0].mxu0
        %v2062 = vadd.f32 0.0, %v2061
        %v2063 = vpop.f32.mrb[0].mxu0
        %2064 = vmatprep.mubr.f32.mxu0 %v1777
        %2065 = vmatmul.mubr.f32.gmra.mrb[0].mxu0 %v1776
        %v2066 = vpop.f32.mrb[0].mxu0
        %v2067 = vadd.f32 0.0, %v2066
        %v2068 = vpop.f32.mrb[0].mxu0
        %2069 = vmatprep.mubr.f32.mxu0 %v1780
        %2070 = vmatmul.mubr.f32.gmra.mrb[0].mxu0 %v1779
        %v2071 = vpop.f32.mrb[0].mxu0
        %v2072 = vadd.f32 0.0, %v2071
        %v2073 = vpop.f32.mrb[0].mxu0
        %2074 = vmatprep.mubr.f32.mxu0 %v1783
        %2075 = vmatmul.mubr.f32.gmra.mrb[0].mxu0 %v1782
        %v2076 = vpop.f32.mrb[0].mxu0
        %v2077 = vadd.f32 0.0, %v2076
        %v2078 = vpop.f32.mrb[0].mxu0
        %2079 = vmatprep.mubr.f32.mxu0 %v1786
        %2080 = vmatmul.mubr.f32.gmra.mrb[0].mxu0 %v1785
        %v2081 = vpop.f32.mrb[0].mxu0
        %v2082 = vadd.f32 0.0, %v2081
        %v2083 = vpop.f32.mrb[0].mxu0
        %2084 = vmatprep.mubr.f32.mxu0 %v1789
        %2085 = vmatmul.mubr.f32.gmra.mrb[0].mxu0 %v1788
        %v2086 = vpop.f32.mrb[0].mxu0
        %v2087 = vadd.f32 0.0, %v2086
        %v2088 = vpop.f32.mrb[0].mxu0
        %2089 = vmatprep.mubr.f32.mxu0 %v1792
        %2090 = vmatmul.mubr.f32.gmra.mrb[0].mxu0 %v1791
        %v2091 = vpop.f32.mrb[0].mxu0
        %v2092 = vadd.f32 0.0, %v2091
        %v2093 = vpop.f32.mrb[0].mxu0
        %2094 = vmatprep.mubr.f32.mxu0 %v1795
        %2095 = vmatmul.mubr.f32.gmra.mrb[0].mxu0 %v1794
        %v2096 = vpop.f32.mrb[0].mxu0
        %v2097 = vadd.f32 0.0, %v2096
        %v2098 = vpop.f32.mrb[0].mxu0
        %2099 = vmatprep.mubr.f32.mxu0 %v1798
        %2100 = vmatmul.mubr.f32.gmra.mrb[0].mxu0 %v1797
        %v2101 = vpop.f32.mrb[0].mxu0
        %v2102 = vadd.f32 0.0, %v2101
        %v2103 = vpop.f32.mrb[0].mxu0
        %2104 = vmatprep.mubr.f32.mxu0 %v1801
        %2105 = vmatmul.mubr.f32.gmra.mrb[0].mxu0 %v1800
        %v2106 = vpop.f32.mrb[0].mxu0
        %v2107 = vadd.f32 0.0, %v2106
        %v2108 = vpop.f32.mrb[0].mxu0
        %2109 = vmatprep.mubr.f32.mxu0 %v1804
        %2110 = vmatmul.mubr.f32.gmra.mrb[0].mxu0 %v1803
        %v2111 = vpop.f32.mrb[0].mxu0
        %v2112 = vadd.f32 0.0, %v2111
        %v2113 = vpop.f32.mrb[0].mxu0
        %2114 = vmatprep.mubr.f32.mxu0 %v1807
        %2115 = vmatmul.mubr.f32.gmra.mrb[0].mxu0 %v1806
        %v2116 = vpop.f32.mrb[0].mxu0
        %v2117 = vadd.f32 0.0, %v2116
        %v2118 = vpop.f32.mrb[0].mxu0
        %2119 = vmatprep.mubr.f32.mxu0 %v1810
        %2120 = vmatmul.mubr.f32.gmra.mrb[0].mxu0 %v1809
        %v2121 = vpop.f32.mrb[0].mxu0
        %v2122 = vadd.f32 0.0, %v2121
        %v2123 = vpop.f32.mrb[0].mxu0
        %2124 = vmatprep.mubr.f32.mxu0 %v1813
        %2125 = vmatmul.mubr.f32.gmra.mrb[0].mxu0 %v1812
        %v2126 = vpop.f32.mrb[0].mxu0
        %v2127 = vadd.f32 0.0, %v2126
        %v2128 = vpop.f32.mrb[0].mxu0
        %2129 = vmatprep.mubr.f32.mxu0 %v1816
        %2130 = vmatmul.mubr.f32.gmra.mrb[0].mxu0 %v1815
        %v2131 = vpop.f32.mrb[0].mxu0
        %v2132 = vadd.f32 0.0, %v2131
        %v2133 = vpop.f32.mrb[0].mxu0
        %2134 = vmatprep.mubr.f32.mxu0 %v1819
        %2135 = vmatmul.mubr.f32.gmra.mrb[0].mxu0 %v1818
        %v2136 = vpop.f32.mrb[0].mxu0
        %v2137 = vadd.f32 0.0, %v2136
        %v2138 = vpop.f32.mrb[0].mxu0
        %2139 = vmatprep.mubr.f32.mxu0 %v1822
        %2140 = vmatmul.mubr.f32.gmra.mrb[0].mxu0 %v1821
        %v2141 = vpop.f32.mrb[0].mxu0
        %v2142 = vadd.f32 0.0, %v2141
        %v2143 = vpop.f32.mrb[0].mxu0
        %2144 = vdwg.mxu0
        %2145 = vmatprep.subr.mxu0 0.0
        %2146 = vmatpush1.msra.mxu0 %v221
        %2147 = vmatprep.subr.mxu0 0.0
        %2148 = vmatpush1.msra.mxu0 %v222
        %2149 = vmatprep.subr.mxu0 0.0
        %2150 = vmatpush1.msra.mxu0 %v223
        %2151 = vmatprep.subr.mxu0 0.0
        %2152 = vmatpush1.msra.mxu0 %v224
        %2153 = vmatprep.subr.mxu0 0.0
        %2154 = vmatpush1.msra.mxu0 0.0
        %2155 = vmatprep.subr.mxu0 0.0
        %2156 = vmatpush1.msra.mxu0 0.0
        %2157 = vmatprep.subr.mxu0 0.0
        %2158 = vmatpush1.msra.mxu0 0.0
        %2159 = vmatprep.subr.mxu0 0.0
        %2160 = vmatpush1.msra.mxu0 0.0
        %2161 = vmatprep.subr.mxu0 0.0
        %2162 = vmatpush1.msra.mxu0 0.0
        %2163 = vmatprep.subr.mxu0 0.0
        %2164 = vmatpush1.msra.mxu0 0.0
        %2165 = vmatprep.subr.mxu0 0.0
        %2166 = vmatpush1.msra.mxu0 0.0
        %2167 = vmatprep.subr.mxu0 0.0
        %2168 = vmatpush1.msra.mxu0 0.0
        %2169 = vmatprep.subr.mxu0 0.0
        %2170 = vmatpush1.msra.mxu0 0.0
        %2171 = vmatprep.subr.mxu0 0.0
        %2172 = vmatpush1.msra.mxu0 0.0
        %2173 = vmatprep.subr.mxu0 0.0
        %2174 = vmatpush1.msra.mxu0 0.0
        %2175 = vmatprep.subr.mxu0 0.0
        %2176 = vmatpush1.msra.mxu0 0.0
        %2177 = vmatprep.subr.mxu0 0.0
        %2178 = vmatpush1.msra.mxu0 0.0
        %2179 = vmatprep.subr.mxu0 0.0
        %2180 = vmatpush1.msra.mxu0 0.0
        %2181 = vmatprep.subr.mxu0 0.0
        %2182 = vmatpush1.msra.mxu0 0.0
        %2183 = vmatprep.subr.mxu0 0.0
        %2184 = vmatpush1.msra.mxu0 0.0
        %2185 = vmatprep.subr.mxu0 0.0
        %2186 = vmatpush1.msra.mxu0 0.0
        %2187 = vmatprep.subr.mxu0 0.0
        %2188 = vmatpush1.msra.mxu0 0.0
        %2189 = vmatprep.subr.mxu0 0.0
        %2190 = vmatpush1.msra.mxu0 0.0
        %2191 = vmatprep.subr.mxu0 0.0
        %2192 = vmatpush1.msra.mxu0 0.0
        %2193 = vmatprep.subr.mxu0 0.0
        %2194 = vmatpush1.msra.mxu0 0.0
        %2195 = vmatprep.subr.mxu0 0.0
        %2196 = vmatpush1.msra.mxu0 0.0
        %2197 = vmatprep.subr.mxu0 0.0
        %2198 = vmatpush1.msra.mxu0 0.0
        %2199 = vmatprep.subr.mxu0 0.0
        %2200 = vmatpush1.msra.mxu0 0.0
        %2201 = vmatprep.subr.mxu0 0.0
        %2202 = vmatpush1.msra.mxu0 0.0
        %2203 = vmatprep.subr.mxu0 0.0
        %2204 = vmatpush1.msra.mxu0 0.0
        %2205 = vmatprep.subr.mxu0 0.0
        %2206 = vmatpush1.msra.mxu0 0.0
        %2207 = vmatprep.subr.mxu0 0.0
        %2208 = vmatpush1.msra.mxu0 0.0
        %2209 = vmatprep.mubr.f32.mxu0 0.0
        %2210 = vmatmul.mubr.f32.gmra.mrb[0].mxu0 %v1825
        %v2211 = vpop.f32.mrb[0].mxu0
        %v2212 = vadd.f32 %v1987, %v2211
        %v2213 = vpop.f32.mrb[0].mxu0
        %2214 = vmatprep.mubr.f32.mxu0 0.0
        %2215 = vmatmul.mubr.f32.gmra.mrb[0].mxu0 %v1828
        %v2216 = vpop.f32.mrb[0].mxu0
        %v2217 = vadd.f32 %v1992, %v2216
        %v2218 = vpop.f32.mrb[0].mxu0
        %2219 = vmatprep.mubr.f32.mxu0 0.0
        %2220 = vmatmul.mubr.f32.gmra.mrb[0].mxu0 %v1831
        %v2221 = vpop.f32.mrb[0].mxu0
        %v2222 = vadd.f32 %v1997, %v2221
        %v2223 = vpop.f32.mrb[0].mxu0
        %2224 = vmatprep.mubr.f32.mxu0 0.0
        %2225 = vmatmul.mubr.f32.gmra.mrb[0].mxu0 %v1834
        %v2226 = vpop.f32.mrb[0].mxu0
        %v2227 = vadd.f32 %v2002, %v2226
        %v2228 = vpop.f32.mrb[0].mxu0
        %2229 = vmatprep.mubr.f32.mxu0 0.0
        %2230 = vmatmul.mubr.f32.gmra.mrb[0].mxu0 %v1837
        %v2231 = vpop.f32.mrb[0].mxu0
        %v2232 = vadd.f32 %v2007, %v2231
        %v2233 = vpop.f32.mrb[0].mxu0
        %2234 = vmatprep.mubr.f32.mxu0 0.0
        %2235 = vmatmul.mubr.f32.gmra.mrb[0].mxu0 %v1840
        %v2236 = vpop.f32.mrb[0].mxu0
        %v2237 = vadd.f32 %v2012, %v2236
        %v2238 = vpop.f32.mrb[0].mxu0
        %2239 = vmatprep.mubr.f32.mxu0 0.0
        %2240 = vmatmul.mubr.f32.gmra.mrb[0].mxu0 %v1843
        %v2241 = vpop.f32.mrb[0].mxu0
        %v2242 = vadd.f32 %v2017, %v2241
        %v2243 = vpop.f32.mrb[0].mxu0
        %2244 = vmatprep.mubr.f32.mxu0 0.0
        %2245 = vmatmul.mubr.f32.gmra.mrb[0].mxu0 %v1846
        %v2246 = vpop.f32.mrb[0].mxu0
        %v2247 = vadd.f32 %v2022, %v2246
        %v2248 = vpop.f32.mrb[0].mxu0
        %2249 = vmatprep.mubr.f32.mxu0 0.0
        %2250 = vmatmul.mubr.f32.gmra.mrb[0].mxu0 %v1849
        %v2251 = vpop.f32.mrb[0].mxu0
        %v2252 = vadd.f32 %v2027, %v2251
        %v2253 = vpop.f32.mrb[0].mxu0
        %2254 = vmatprep.mubr.f32.mxu0 0.0
        %2255 = vmatmul.mubr.f32.gmra.mrb[0].mxu0 %v1852
        %v2256 = vpop.f32.mrb[0].mxu0
        %v2257 = vadd.f32 %v2032, %v2256
        %v2258 = vpop.f32.mrb[0].mxu0
        %2259 = vmatprep.mubr.f32.mxu0 0.0
        %2260 = vmatmul.mubr.f32.gmra.mrb[0].mxu0 %v1855
        %v2261 = vpop.f32.mrb[0].mxu0
        %v2262 = vadd.f32 %v2037, %v2261
        %v2263 = vpop.f32.mrb[0].mxu0
        %2264 = vmatprep.mubr.f32.mxu0 0.0
        %2265 = vmatmul.mubr.f32.gmra.mrb[0].mxu0 %v1858
        %v2266 = vpop.f32.mrb[0].mxu0
        %v2267 = vadd.f32 %v2042, %v2266
        %v2268 = vpop.f32.mrb[0].mxu0
        %2269 = vmatprep.mubr.f32.mxu0 0.0
        %2270 = vmatmul.mubr.f32.gmra.mrb[0].mxu0 %v1861
        %v2271 = vpop.f32.mrb[0].mxu0
        %v2272 = vadd.f32 %v2047, %v2271
        %v2273 = vpop.f32.mrb[0].mxu0
        %2274 = vmatprep.mubr.f32.mxu0 0.0
        %2275 = vmatmul.mubr.f32.gmra.mrb[0].mxu0 %v1864
        %v2276 = vpop.f32.mrb[0].mxu0
        %v2277 = vadd.f32 %v2052, %v2276
        %v2278 = vpop.f32.mrb[0].mxu0
        %2279 = vmatprep.mubr.f32.mxu0 0.0
        %2280 = vmatmul.mubr.f32.gmra.mrb[0].mxu0 %v1867
        %v2281 = vpop.f32.mrb[0].mxu0
        %v2282 = vadd.f32 %v2057, %v2281
        %v2283 = vpop.f32.mrb[0].mxu0
        %2284 = vmatprep.mubr.f32.mxu0 0.0
        %2285 = vmatmul.mubr.f32.gmra.mrb[0].mxu0 %v1870
        %v2286 = vpop.f32.mrb[0].mxu0
        %v2287 = vadd.f32 %v2062, %v2286
        %v2288 = vpop.f32.mrb[0].mxu0
        %2289 = vmatprep.mubr.f32.mxu0 0.0
        %2290 = vmatmul.mubr.f32.gmra.mrb[0].mxu0 %v1873
        %v2291 = vpop.f32.mrb[0].mxu0
        %v2292 = vadd.f32 %v2067, %v2291
        %v2293 = vpop.f32.mrb[0].mxu0
        %2294 = vmatprep.mubr.f32.mxu0 0.0
        %2295 = vmatmul.mubr.f32.gmra.mrb[0].mxu0 %v1876
        %v2296 = vpop.f32.mrb[0].mxu0
        %v2297 = vadd.f32 %v2072, %v2296
        %v2298 = vpop.f32.mrb[0].mxu0
        %2299 = vmatprep.mubr.f32.mxu0 0.0
        %2300 = vmatmul.mubr.f32.gmra.mrb[0].mxu0 %v1879
        %v2301 = vpop.f32.mrb[0].mxu0
        %v2302 = vadd.f32 %v2077, %v2301
        %v2303 = vpop.f32.mrb[0].mxu0
        %2304 = vmatprep.mubr.f32.mxu0 0.0
        %2305 = vmatmul.mubr.f32.gmra.mrb[0].mxu0 %v1882
        %v2306 = vpop.f32.mrb[0].mxu0
        %v2307 = vadd.f32 %v2082, %v2306
        %v2308 = vpop.f32.mrb[0].mxu0
        %2309 = vmatprep.mubr.f32.mxu0 0.0
        %2310 = vmatmul.mubr.f32.gmra.mrb[0].mxu0 %v1885
        %v2311 = vpop.f32.mrb[0].mxu0
        %v2312 = vadd.f32 %v2087, %v2311
        %v2313 = vpop.f32.mrb[0].mxu0
        %2314 = vmatprep.mubr.f32.mxu0 0.0
        %2315 = vmatmul.mubr.f32.gmra.mrb[0].mxu0 %v1888
        %v2316 = vpop.f32.mrb[0].mxu0
        %v2317 = vadd.f32 %v2092, %v2316
        %v2318 = vpop.f32.mrb[0].mxu0
        %2319 = vmatprep.mubr.f32.mxu0 0.0
        %2320 = vmatmul.mubr.f32.gmra.mrb[0].mxu0 %v1891
        %v2321 = vpop.f32.mrb[0].mxu0
        %v2322 = vadd.f32 %v2097, %v2321
        %v2323 = vpop.f32.mrb[0].mxu0
        %2324 = vmatprep.mubr.f32.mxu0 0.0
        %2325 = vmatmul.mubr.f32.gmra.mrb[0].mxu0 %v1894
        %v2326 = vpop.f32.mrb[0].mxu0
        %v2327 = vadd.f32 %v2102, %v2326
        %v2328 = vpop.f32.mrb[0].mxu0
        %2329 = vmatprep.mubr.f32.mxu0 0.0
        %2330 = vmatmul.mubr.f32.gmra.mrb[0].mxu0 %v1897
        %v2331 = vpop.f32.mrb[0].mxu0
        %v2332 = vadd.f32 %v2107, %v2331
        %v2333 = vpop.f32.mrb[0].mxu0
        %2334 = vmatprep.mubr.f32.mxu0 0.0
        %2335 = vmatmul.mubr.f32.gmra.mrb[0].mxu0 %v1900
        %v2336 = vpop.f32.mrb[0].mxu0
        %v2337 = vadd.f32 %v2112, %v2336
        %v2338 = vpop.f32.mrb[0].mxu0
        %2339 = vmatprep.mubr.f32.mxu0 0.0
        %2340 = vmatmul.mubr.f32.gmra.mrb[0].mxu0 %v1903
        %v2341 = vpop.f32.mrb[0].mxu0
        %v2342 = vadd.f32 %v2117, %v2341
        %v2343 = vpop.f32.mrb[0].mxu0
        %2344 = vmatprep.mubr.f32.mxu0 0.0
        %2345 = vmatmul.mubr.f32.gmra.mrb[0].mxu0 %v1906
        %v2346 = vpop.f32.mrb[0].mxu0
        %v2347 = vadd.f32 %v2122, %v2346
        %v2348 = vpop.f32.mrb[0].mxu0
        %2349 = vmatprep.mubr.f32.mxu0 0.0
        %2350 = vmatmul.mubr.f32.gmra.mrb[0].mxu0 %v1909
        %v2351 = vpop.f32.mrb[0].mxu0
        %v2352 = vadd.f32 %v2127, %v2351
        %v2353 = vpop.f32.mrb[0].mxu0
        %2354 = vmatprep.mubr.f32.mxu0 0.0
        %2355 = vmatmul.mubr.f32.gmra.mrb[0].mxu0 %v1912
        %v2356 = vpop.f32.mrb[0].mxu0
        %v2357 = vadd.f32 %v2132, %v2356
        %v2358 = vpop.f32.mrb[0].mxu0
        %2359 = vmatprep.mubr.f32.mxu0 0.0
        %2360 = vmatmul.mubr.f32.gmra.mrb[0].mxu0 %v1915
        %v2361 = vpop.f32.mrb[0].mxu0
        %v2362 = vadd.f32 %v2137, %v2361
        %v2363 = vpop.f32.mrb[0].mxu0
        %2364 = vmatprep.mubr.f32.mxu0 0.0
        %2365 = vmatmul.mubr.f32.gmra.mrb[0].mxu0 %v1918
        %v2366 = vpop.f32.mrb[0].mxu0
        %v2367 = vadd.f32 %v2142, %v2366
        %v2368 = vpop.f32.mrb[0].mxu0
        %2369 = vdwg.mxu0
        %v2370 = vmax.f32 %v2212, 0.0
        %v2371 = vmax.f32 %v2217, 0.0
        %v2372 = vmax.f32 %v2222, 0.0
        %v2373 = vmax.f32 %v2227, 0.0
        %v2374 = vmax.f32 %v2232, 0.0
        %v2375 = vmax.f32 %v2237, 0.0
        %v2376 = vmax.f32 %v2242, 0.0
        %v2377 = vmax.f32 %v2247, 0.0
        %v2378 = vmax.f32 %v2252, 0.0
        %v2379 = vmax.f32 %v2257, 0.0
        %v2380 = vmax.f32 %v2262, 0.0
        %v2381 = vmax.f32 %v2267, 0.0
        %v2382 = vmax.f32 %v2272, 0.0
        %v2383 = vmax.f32 %v2277, 0.0
        %v2384 = vmax.f32 %v2282, 0.0
        %v2385 = vmax.f32 %v2287, 0.0
        %v2386 = vmax.f32 %v2292, 0.0
        %v2387 = vmax.f32 %v2297, 0.0
        %v2388 = vmax.f32 %v2302, 0.0
        %v2389 = vmax.f32 %v2307, 0.0
        %v2390 = vmax.f32 %v2312, 0.0
        %v2391 = vmax.f32 %v2317, 0.0
        %v2392 = vmax.f32 %v2322, 0.0
        %v2393 = vmax.f32 %v2327, 0.0
        %v2394 = vmax.f32 %v2332, 0.0
        %v2395 = vmax.f32 %v2337, 0.0
        %v2396 = vmax.f32 %v2342, 0.0
        %v2397 = vmax.f32 %v2347, 0.0
        %v2398 = vmax.f32 %v2352, 0.0
        %v2399 = vmax.f32 %v2357, 0.0
        %v2400 = vmax.f32 %v2362, 0.0
        %v2401 = vmax.f32 %v2367, 0.0
        %vm2402 = vcmask 130048
        %v2404 = vsel %vm2402, %v2370, 0
        %v2407 = vsel %vm2402, %v2371, 0
        %v2410 = vsel %vm2402, %v2372, 0
        %v2413 = vsel %vm2402, %v2373, 0
        %v2416 = vsel %vm2402, %v2374, 0
        %v2419 = vsel %vm2402, %v2375, 0
        %v2422 = vsel %vm2402, %v2376, 0
        %v2425 = vsel %vm2402, %v2377, 0
        %v2428 = vsel %vm2402, %v2378, 0
        %v2431 = vsel %vm2402, %v2379, 0
        %v2434 = vsel %vm2402, %v2380, 0
        %v2437 = vsel %vm2402, %v2381, 0
        %v2440 = vsel %vm2402, %v2382, 0
        %v2443 = vsel %vm2402, %v2383, 0
        %v2446 = vsel %vm2402, %v2384, 0
        %v2449 = vsel %vm2402, %v2385, 0
        %v2452 = vsel %vm2402, %v2386, 0
        %v2455 = vsel %vm2402, %v2387, 0
        %v2458 = vsel %vm2402, %v2388, 0
        %v2461 = vsel %vm2402, %v2389, 0
        %v2464 = vsel %vm2402, %v2390, 0
        %v2467 = vsel %vm2402, %v2391, 0
        %v2470 = vsel %vm2402, %v2392, 0
        %v2473 = vsel %vm2402, %v2393, 0
        %v2476 = vsel %vm2402, %v2394, 0
        %v2479 = vsel %vm2402, %v2395, 0
        %v2482 = vsel %vm2402, %v2396, 0
        %v2485 = vsel %vm2402, %v2397, 0
        %v2488 = vsel %vm2402, %v2398, 0
        %v2491 = vsel %vm2402, %v2399, 0
        %v2494 = vsel %vm2402, %v2400, 0
        %v2497 = vsel %vm2402, %v2401, 0
        %2499 = vmatprep.subr.mxu0 0.0
        %2500 = vmatpush1.msra.mxu0 %v225
        %2501 = vmatprep.subr.mxu0 0.0
        %2502 = vmatpush1.msra.mxu0 %v226
        %2503 = vmatprep.subr.mxu0 0.0
        %2504 = vmatpush1.msra.mxu0 0.0
        %2505 = vmatprep.subr.mxu0 0.0
        %2506 = vmatpush1.msra.mxu0 0.0
        %2507 = vmatprep.subr.mxu0 0.0
        %2508 = vmatpush1.msra.mxu0 0.0
        %2509 = vmatprep.subr.mxu0 0.0
        %2510 = vmatpush1.msra.mxu0 0.0
        %2511 = vmatprep.subr.mxu0 0.0
        %2512 = vmatpush1.msra.mxu0 0.0
        %2513 = vmatprep.subr.mxu0 0.0
        %2514 = vmatpush1.msra.mxu0 0.0
        %2515 = vmatprep.subr.mxu0 0.0
        %2516 = vmatpush1.msra.mxu0 0.0
        %2517 = vmatprep.subr.mxu0 0.0
        %2518 = vmatpush1.msra.mxu0 0.0
        %2519 = vmatprep.subr.mxu0 0.0
        %2520 = vmatpush1.msra.mxu0 0.0
        %2521 = vmatprep.subr.mxu0 0.0
        %2522 = vmatpush1.msra.mxu0 0.0
        %2523 = vmatprep.subr.mxu0 0.0
        %2524 = vmatpush1.msra.mxu0 0.0
        %2525 = vmatprep.subr.mxu0 0.0
        %2526 = vmatpush1.msra.mxu0 0.0
        %2527 = vmatprep.subr.mxu0 0.0
        %2528 = vmatpush1.msra.mxu0 0.0
        %2529 = vmatprep.subr.mxu0 0.0
        %2530 = vmatpush1.msra.mxu0 0.0
        %2531 = vmatprep.subr.mxu0 0.0
        %2532 = vmatpush1.msra.mxu0 0.0
        %2533 = vmatprep.subr.mxu0 0.0
        %2534 = vmatpush1.msra.mxu0 0.0
        %2535 = vmatprep.subr.mxu0 0.0
        %2536 = vmatpush1.msra.mxu0 0.0
        %2537 = vmatprep.subr.mxu0 0.0
        %2538 = vmatpush1.msra.mxu0 0.0
        %2539 = vmatprep.subr.mxu0 0.0
        %2540 = vmatpush1.msra.mxu0 0.0
        %2541 = vmatprep.subr.mxu0 0.0
        %2542 = vmatpush1.msra.mxu0 0.0
        %2543 = vmatprep.subr.mxu0 0.0
        %2544 = vmatpush1.msra.mxu0 0.0
        %2545 = vmatprep.subr.mxu0 0.0
        %2546 = vmatpush1.msra.mxu0 0.0
        %2547 = vmatprep.subr.mxu0 0.0
        %2548 = vmatpush1.msra.mxu0 0.0
        %2549 = vmatprep.subr.mxu0 0.0
        %2550 = vmatpush1.msra.mxu0 0.0
        %2551 = vmatprep.subr.mxu0 0.0
        %2552 = vmatpush1.msra.mxu0 0.0
        %2553 = vmatprep.subr.mxu0 0.0
        %2554 = vmatpush1.msra.mxu0 0.0
        %2555 = vmatprep.subr.mxu0 0.0
        %2556 = vmatpush1.msra.mxu0 0.0
        %2557 = vmatprep.subr.mxu0 0.0
        %2558 = vmatpush1.msra.mxu0 0.0
        %2559 = vmatprep.subr.mxu0 0.0
        %2560 = vmatpush1.msra.mxu0 0.0
        %2561 = vmatprep.subr.mxu0 0.0
        %2562 = vmatpush1.msra.mxu0 0.0
        %2563 = vmatprep.mubr.f32.mxu0 0.0
        %2564 = vmatmul.mubr.f32.gmra.mrb[0].mxu0 %v2404
        %v2565 = vpop.f32.mrb[0].mxu0
        %v2566 = vadd.f32 0.0, %v2565
        %v2567 = vpop.f32.mrb[0].mxu0
        %2568 = vmatprep.mubr.f32.mxu0 0.0
        %2569 = vmatmul.mubr.f32.gmra.mrb[0].mxu0 %v2407
        %v2570 = vpop.f32.mrb[0].mxu0
        %v2571 = vadd.f32 0.0, %v2570
        %v2572 = vpop.f32.mrb[0].mxu0
        %2573 = vmatprep.mubr.f32.mxu0 0.0
        %2574 = vmatmul.mubr.f32.gmra.mrb[0].mxu0 %v2410
        %v2575 = vpop.f32.mrb[0].mxu0
        %v2576 = vadd.f32 0.0, %v2575
        %v2577 = vpop.f32.mrb[0].mxu0
        %2578 = vmatprep.mubr.f32.mxu0 0.0
        %2579 = vmatmul.mubr.f32.gmra.mrb[0].mxu0 %v2413
        %v2580 = vpop.f32.mrb[0].mxu0
        %v2581 = vadd.f32 0.0, %v2580
        %v2582 = vpop.f32.mrb[0].mxu0
        %2583 = vmatprep.mubr.f32.mxu0 0.0
        %2584 = vmatmul.mubr.f32.gmra.mrb[0].mxu0 %v2416
        %v2585 = vpop.f32.mrb[0].mxu0
        %v2586 = vadd.f32 0.0, %v2585
        %v2587 = vpop.f32.mrb[0].mxu0
        %2588 = vmatprep.mubr.f32.mxu0 0.0
        %2589 = vmatmul.mubr.f32.gmra.mrb[0].mxu0 %v2419
        %v2590 = vpop.f32.mrb[0].mxu0
        %v2591 = vadd.f32 0.0, %v2590
        %v2592 = vpop.f32.mrb[0].mxu0
        %2593 = vmatprep.mubr.f32.mxu0 0.0
        %2594 = vmatmul.mubr.f32.gmra.mrb[0].mxu0 %v2422
        %v2595 = vpop.f32.mrb[0].mxu0
        %v2596 = vadd.f32 0.0, %v2595
        %v2597 = vpop.f32.mrb[0].mxu0
        %2598 = vmatprep.mubr.f32.mxu0 0.0
        %2599 = vmatmul.mubr.f32.gmra.mrb[0].mxu0 %v2425
        %v2600 = vpop.f32.mrb[0].mxu0
        %v2601 = vadd.f32 0.0, %v2600
        %v2602 = vpop.f32.mrb[0].mxu0
        %2603 = vmatprep.mubr.f32.mxu0 0.0
        %2604 = vmatmul.mubr.f32.gmra.mrb[0].mxu0 %v2428
        %v2605 = vpop.f32.mrb[0].mxu0
        %v2606 = vadd.f32 0.0, %v2605
        %v2607 = vpop.f32.mrb[0].mxu0
        %2608 = vmatprep.mubr.f32.mxu0 0.0
        %2609 = vmatmul.mubr.f32.gmra.mrb[0].mxu0 %v2431
        %v2610 = vpop.f32.mrb[0].mxu0
        %v2611 = vadd.f32 0.0, %v2610
        %v2612 = vpop.f32.mrb[0].mxu0
        %2613 = vmatprep.mubr.f32.mxu0 0.0
        %2614 = vmatmul.mubr.f32.gmra.mrb[0].mxu0 %v2434
        %v2615 = vpop.f32.mrb[0].mxu0
        %v2616 = vadd.f32 0.0, %v2615
        %v2617 = vpop.f32.mrb[0].mxu0
        %2618 = vmatprep.mubr.f32.mxu0 0.0
        %2619 = vmatmul.mubr.f32.gmra.mrb[0].mxu0 %v2437
        %v2620 = vpop.f32.mrb[0].mxu0
        %v2621 = vadd.f32 0.0, %v2620
        %v2622 = vpop.f32.mrb[0].mxu0
        %2623 = vmatprep.mubr.f32.mxu0 0.0
        %2624 = vmatmul.mubr.f32.gmra.mrb[0].mxu0 %v2440
        %v2625 = vpop.f32.mrb[0].mxu0
        %v2626 = vadd.f32 0.0, %v2625
        %v2627 = vpop.f32.mrb[0].mxu0
        %2628 = vmatprep.mubr.f32.mxu0 0.0
        %2629 = vmatmul.mubr.f32.gmra.mrb[0].mxu0 %v2443
        %v2630 = vpop.f32.mrb[0].mxu0
        %v2631 = vadd.f32 0.0, %v2630
        %v2632 = vpop.f32.mrb[0].mxu0
        %2633 = vmatprep.mubr.f32.mxu0 0.0
        %2634 = vmatmul.mubr.f32.gmra.mrb[0].mxu0 %v2446
        %v2635 = vpop.f32.mrb[0].mxu0
        %v2636 = vadd.f32 0.0, %v2635
        %v2637 = vpop.f32.mrb[0].mxu0
        %2638 = vmatprep.mubr.f32.mxu0 0.0
        %2639 = vmatmul.mubr.f32.gmra.mrb[0].mxu0 %v2449
        %v2640 = vpop.f32.mrb[0].mxu0
        %v2641 = vadd.f32 0.0, %v2640
        %v2642 = vpop.f32.mrb[0].mxu0
        %2643 = vmatprep.mubr.f32.mxu0 0.0
        %2644 = vmatmul.mubr.f32.gmra.mrb[0].mxu0 %v2452
        %v2645 = vpop.f32.mrb[0].mxu0
        %v2646 = vadd.f32 0.0, %v2645
        %v2647 = vpop.f32.mrb[0].mxu0
        %2648 = vmatprep.mubr.f32.mxu0 0.0
        %2649 = vmatmul.mubr.f32.gmra.mrb[0].mxu0 %v2455
        %v2650 = vpop.f32.mrb[0].mxu0
        %v2651 = vadd.f32 0.0, %v2650
        %v2652 = vpop.f32.mrb[0].mxu0
        %2653 = vmatprep.mubr.f32.mxu0 0.0
        %2654 = vmatmul.mubr.f32.gmra.mrb[0].mxu0 %v2458
        %v2655 = vpop.f32.mrb[0].mxu0
        %v2656 = vadd.f32 0.0, %v2655
        %v2657 = vpop.f32.mrb[0].mxu0
        %2658 = vmatprep.mubr.f32.mxu0 0.0
        %2659 = vmatmul.mubr.f32.gmra.mrb[0].mxu0 %v2461
        %v2660 = vpop.f32.mrb[0].mxu0
        %v2661 = vadd.f32 0.0, %v2660
        %v2662 = vpop.f32.mrb[0].mxu0
        %2663 = vmatprep.mubr.f32.mxu0 0.0
        %2664 = vmatmul.mubr.f32.gmra.mrb[0].mxu0 %v2464
        %v2665 = vpop.f32.mrb[0].mxu0
        %v2666 = vadd.f32 0.0, %v2665
        %v2667 = vpop.f32.mrb[0].mxu0
        %2668 = vmatprep.mubr.f32.mxu0 0.0
        %2669 = vmatmul.mubr.f32.gmra.mrb[0].mxu0 %v2467
        %v2670 = vpop.f32.mrb[0].mxu0
        %v2671 = vadd.f32 0.0, %v2670
        %v2672 = vpop.f32.mrb[0].mxu0
        %2673 = vmatprep.mubr.f32.mxu0 0.0
        %2674 = vmatmul.mubr.f32.gmra.mrb[0].mxu0 %v2470
        %v2675 = vpop.f32.mrb[0].mxu0
        %v2676 = vadd.f32 0.0, %v2675
        %v2677 = vpop.f32.mrb[0].mxu0
        %2678 = vmatprep.mubr.f32.mxu0 0.0
        %2679 = vmatmul.mubr.f32.gmra.mrb[0].mxu0 %v2473
        %v2680 = vpop.f32.mrb[0].mxu0
        %v2681 = vadd.f32 0.0, %v2680
        %v2682 = vpop.f32.mrb[0].mxu0
        %2683 = vmatprep.mubr.f32.mxu0 0.0
        %2684 = vmatmul.mubr.f32.gmra.mrb[0].mxu0 %v2476
        %v2685 = vpop.f32.mrb[0].mxu0
        %v2686 = vadd.f32 0.0, %v2685
        %v2687 = vpop.f32.mrb[0].mxu0
        %2688 = vmatprep.mubr.f32.mxu0 0.0
        %2689 = vmatmul.mubr.f32.gmra.mrb[0].mxu0 %v2479
        %v2690 = vpop.f32.mrb[0].mxu0
        %v2691 = vadd.f32 0.0, %v2690
        %v2692 = vpop.f32.mrb[0].mxu0
        %2693 = vmatprep.mubr.f32.mxu0 0.0
        %2694 = vmatmul.mubr.f32.gmra.mrb[0].mxu0 %v2482
        %v2695 = vpop.f32.mrb[0].mxu0
        %v2696 = vadd.f32 0.0, %v2695
        %v2697 = vpop.f32.mrb[0].mxu0
        %2698 = vmatprep.mubr.f32.mxu0 0.0
        %2699 = vmatmul.mubr.f32.gmra.mrb[0].mxu0 %v2485
        %v2700 = vpop.f32.mrb[0].mxu0
        %v2701 = vadd.f32 0.0, %v2700
        %v2702 = vpop.f32.mrb[0].mxu0
        %2703 = vmatprep.mubr.f32.mxu0 0.0
        %2704 = vmatmul.mubr.f32.gmra.mrb[0].mxu0 %v2488
        %v2705 = vpop.f32.mrb[0].mxu0
        %v2706 = vadd.f32 0.0, %v2705
        %v2707 = vpop.f32.mrb[0].mxu0
        %2708 = vmatprep.mubr.f32.mxu0 0.0
        %2709 = vmatmul.mubr.f32.gmra.mrb[0].mxu0 %v2491
        %v2710 = vpop.f32.mrb[0].mxu0
        %v2711 = vadd.f32 0.0, %v2710
        %v2712 = vpop.f32.mrb[0].mxu0
        %2713 = vmatprep.mubr.f32.mxu0 0.0
        %2714 = vmatmul.mubr.f32.gmra.mrb[0].mxu0 %v2494
        %v2715 = vpop.f32.mrb[0].mxu0
        %v2716 = vadd.f32 0.0, %v2715
        %v2717 = vpop.f32.mrb[0].mxu0
        %2718 = vmatprep.mubr.f32.mxu0 0.0
        %2719 = vmatmul.mubr.f32.gmra.mrb[0].mxu0 %v2497
        %v2720 = vpop.f32.mrb[0].mxu0
        %v2721 = vadd.f32 0.0, %v2720
        %v2722 = vpop.f32.mrb[0].mxu0
        %2723 = vdwg.mxu0
        %v2724 = vadd.f32 %v227, %v2566
        %v2725 = vadd.f32 %v228, %v2571
        %v2726 = vadd.f32 %v229, %v2576
        %v2727 = vadd.f32 %v230, %v2581
        %v2728 = vadd.f32 %v231, %v2586
        %v2729 = vadd.f32 %v232, %v2591
        %v2730 = vadd.f32 %v233, %v2596
        %v2731 = vadd.f32 %v234, %v2601
        %v2732 = vadd.f32 %v235, %v2606
        %v2733 = vadd.f32 %v236, %v2611
        %v2734 = vadd.f32 %v237, %v2616
        %v2735 = vadd.f32 %v238, %v2621
        %v2736 = vadd.f32 %v239, %v2626
        %v2737 = vadd.f32 %v240, %v2631
        %v2738 = vadd.f32 %v241, %v2636
        %v2739 = vadd.f32 %v242, %v2641
        %v2740 = vadd.f32 %v243, %v2646
        %v2741 = vadd.f32 %v244, %v2651
        %v2742 = vadd.f32 %v245, %v2656
        %v2743 = vadd.f32 %v246, %v2661
        %v2744 = vadd.f32 %v247, %v2666
        %v2745 = vadd.f32 %v248, %v2671
        %v2746 = vadd.f32 %v249, %v2676
        %v2747 = vadd.f32 %v250, %v2681
        %v2748 = vadd.f32 %v251, %v2686
        %v2749 = vadd.f32 %v252, %v2691
        %v2750 = vadd.f32 %v253, %v2696
        %v2751 = vadd.f32 %v254, %v2701
        %v2752 = vadd.f32 %v255, %v2706
        %v2753 = vadd.f32 %v256, %v2711
        %v2754 = vadd.f32 %v257, %v2716
        %v2755 = vadd.f32 %v258, %v2721
        %v2756 = vmax.f32 %v2724, 0.0
        %v2757 = vmax.f32 %v2725, 0.0
        %v2758 = vmax.f32 %v2726, 0.0
        %v2759 = vmax.f32 %v2727, 0.0
        %v2760 = vmax.f32 %v2728, 0.0
        %v2761 = vmax.f32 %v2729, 0.0
        %v2762 = vmax.f32 %v2730, 0.0
        %v2763 = vmax.f32 %v2731, 0.0
        %v2764 = vmax.f32 %v2732, 0.0
        %v2765 = vmax.f32 %v2733, 0.0
        %v2766 = vmax.f32 %v2734, 0.0
        %v2767 = vmax.f32 %v2735, 0.0
        %v2768 = vmax.f32 %v2736, 0.0
        %v2769 = vmax.f32 %v2737, 0.0
        %v2770 = vmax.f32 %v2738, 0.0
        %v2771 = vmax.f32 %v2739, 0.0
        %v2772 = vmax.f32 %v2740, 0.0
        %v2773 = vmax.f32 %v2741, 0.0
        %v2774 = vmax.f32 %v2742, 0.0
        %v2775 = vmax.f32 %v2743, 0.0
        %v2776 = vmax.f32 %v2744, 0.0
        %v2777 = vmax.f32 %v2745, 0.0
        %v2778 = vmax.f32 %v2746, 0.0
        %v2779 = vmax.f32 %v2747, 0.0
        %v2780 = vmax.f32 %v2748, 0.0
        %v2781 = vmax.f32 %v2749, 0.0
        %v2782 = vmax.f32 %v2750, 0.0
        %v2783 = vmax.f32 %v2751, 0.0
        %v2784 = vmax.f32 %v2752, 0.0
        %v2785 = vmax.f32 %v2753, 0.0
        %v2786 = vmax.f32 %v2754, 0.0
        %v2787 = vmax.f32 %v2755, 0.0
        %2788 = vst.msk [vmem:[%s347 + $0x1] sm:$0xff] %vm259, %v2756
        %2789 = vst.msk [vmem:[%s347 + $0x9] sm:$0xff] %vm259, %v2757
        %2790 = vst.msk [vmem:[%s347 + $0x19] sm:$0xff] %vm259, %v2758
        %2791 = vst.msk [vmem:[%s347 + $0x21] sm:$0xff] %vm259, %v2759
        %2792 = vst.msk [vmem:[%s347 + $0x31] sm:$0xff] %vm259, %v2760
        %2793 = vst.msk [vmem:[%s347 + $0x39] sm:$0xff] %vm259, %v2761
        %2794 = vst.msk [vmem:[%s347 + $0x49] sm:$0xff] %vm259, %v2762
        %2795 = vst.msk [vmem:[%s347 + $0x51] sm:$0xff] %vm259, %v2763
        %2796 = vst.msk [vmem:[%s347 + $0x61] sm:$0xff] %vm259, %v2764
        %2797 = vst.msk [vmem:[%s347 + $0x69] sm:$0xff] %vm259, %v2765
        %2798 = vst.msk [vmem:[%s347 + $0x79] sm:$0xff] %vm259, %v2766
        %2799 = vst.msk [vmem:[%s347 + $0x81] sm:$0xff] %vm259, %v2767
        %2800 = vst.msk [vmem:[%s347 + $0x91] sm:$0xff] %vm259, %v2768
        %2801 = vst.msk [vmem:[%s347 + $0x99] sm:$0xff] %vm259, %v2769
        %2802 = vst.msk [vmem:[%s347 + $0xa9] sm:$0xff] %vm259, %v2770
        %2803 = vst.msk [vmem:[%s347 + $0xb1] sm:$0xff] %vm259, %v2771
        %2804 = vst.msk [vmem:[%s347 + $0xc1] sm:$0xff] %vm259, %v2772
        %2805 = vst.msk [vmem:[%s347 + $0xc9] sm:$0xff] %vm259, %v2773
        %2806 = vst.msk [vmem:[%s347 + $0xd9] sm:$0xff] %vm259, %v2774
        %2807 = vst.msk [vmem:[%s347 + $0xe1] sm:$0xff] %vm259, %v2775
        %2808 = vst.msk [vmem:[%s347 + $0xf1] sm:$0xff] %vm259, %v2776
        %2809 = vst.msk [vmem:[%s347 + $0xf9] sm:$0xff] %vm259, %v2777
        %2810 = vst.msk [vmem:[%s347 + $0x109] sm:$0xff] %vm259, %v2778
        %2811 = vst.msk [vmem:[%s347 + $0x111] sm:$0xff] %vm259, %v2779
        %2812 = vst.msk [vmem:[%s347 + $0x121] sm:$0xff] %vm259, %v2780
        %2813 = vst.msk [vmem:[%s347 + $0x129] sm:$0xff] %vm259, %v2781
        %2814 = vst.msk [vmem:[%s347 + $0x139] sm:$0xff] %vm259, %v2782
        %2815 = vst.msk [vmem:[%s347 + $0x141] sm:$0xff] %vm259, %v2783
        %2816 = vst.msk [vmem:[%s347 + $0x151] sm:$0xff] %vm259, %v2784
        %2817 = vst.msk [vmem:[%s347 + $0x159] sm:$0xff] %vm259, %v2785
        %2818 = vst.msk [vmem:[%s347 + $0x169] sm:$0xff] %vm259, %v2786
        %2819 = vst.msk [vmem:[%s347 + $0x171] sm:$0xff] %vm259, %v2787
        %v2820 = vld [vmem:[#allocation2] sm:$0xff]
        %v2821 = vld [vmem:[#allocation2 + $0x8] sm:$0xff]
        %v2822 = vld [vmem:[#allocation2 + $0x18] sm:$0xff]
        %v2823 = vld [vmem:[#allocation2 + $0x20] sm:$0xff]
        %v2824 = vld [vmem:[#allocation2 + $0x30] sm:$0xff]
        %v2825 = vld [vmem:[#allocation2 + $0x38] sm:$0xff]
        %v2826 = vld [vmem:[#allocation2 + $0x48] sm:$0xff]
        %v2827 = vld [vmem:[#allocation2 + $0x50] sm:$0xff]
        %v2828 = vld [vmem:[#allocation2 + $0x60] sm:$0xff]
        %v2829 = vld [vmem:[#allocation2 + $0x68] sm:$0xff]
        %v2830 = vld [vmem:[#allocation2 + $0x78] sm:$0xff]
        %v2831 = vld [vmem:[#allocation2 + $0x80] sm:$0xff]
        %v2832 = vld [vmem:[#allocation2 + $0x90] sm:$0xff]
        %v2833 = vld [vmem:[#allocation2 + $0x98] sm:$0xff]
        %v2834 = vld [vmem:[#allocation2 + $0xa8] sm:$0xff]
        %v2835 = vld [vmem:[#allocation2 + $0xb0] sm:$0xff]
        %v2836 = vld [vmem:[#allocation2 + $0xc0] sm:$0xff]
        %v2837 = vld [vmem:[#allocation2 + $0xc8] sm:$0xff]
        %v2838 = vld [vmem:[#allocation2 + $0xd8] sm:$0xff]
        %v2839 = vld [vmem:[#allocation2 + $0xe0] sm:$0xff]
        %v2840 = vld [vmem:[#allocation2 + $0xf0] sm:$0xff]
        %v2841 = vld [vmem:[#allocation2 + $0xf8] sm:$0xff]
        %v2842 = vld [vmem:[#allocation2 + $0x108] sm:$0xff]
        %v2843 = vld [vmem:[#allocation2 + $0x110] sm:$0xff]
        %v2844 = vld [vmem:[#allocation2 + $0x120] sm:$0xff]
        %v2845 = vld [vmem:[#allocation2 + $0x128] sm:$0xff]
        %v2846 = vld [vmem:[#allocation2 + $0x138] sm:$0xff]
        %v2847 = vld [vmem:[#allocation2 + $0x140] sm:$0xff]
        %v2848 = vld [vmem:[#allocation2 + $0x150] sm:$0xff]
        %v2849 = vld [vmem:[#allocation2 + $0x158] sm:$0xff]
        %v2850 = vld [vmem:[#allocation2 + $0x168] sm:$0xff]
        %v2851 = vld [vmem:[#allocation2 + $0x170] sm:$0xff]
        %2852 = vst.msk [vmem:[#allocation3] sm:$0xff] %vm259, %v2820
        %2853 = vst.msk [vmem:[#allocation3 + $0x18] sm:$0xff] %vm259, %v2821
        %2854 = vst.msk [vmem:[#allocation3 + $0x30] sm:$0xff] %vm259, %v2822
        %2855 = vst.msk [vmem:[#allocation3 + $0x48] sm:$0xff] %vm259, %v2823
        %2856 = vst.msk [vmem:[#allocation3 + $0x60] sm:$0xff] %vm259, %v2824
        %2857 = vst.msk [vmem:[#allocation3 + $0x78] sm:$0xff] %vm259, %v2825
        %2858 = vst.msk [vmem:[#allocation3 + $0x90] sm:$0xff] %vm259, %v2826
        %2859 = vst.msk [vmem:[#allocation3 + $0xa8] sm:$0xff] %vm259, %v2827
        %2860 = vst.msk [vmem:[#allocation3 + $0xc0] sm:$0xff] %vm259, %v2828
        %2861 = vst.msk [vmem:[#allocation3 + $0xd8] sm:$0xff] %vm259, %v2829
        %2862 = vst.msk [vmem:[#allocation3 + $0xf0] sm:$0xff] %vm259, %v2830
        %2863 = vst.msk [vmem:[#allocation3 + $0x108] sm:$0xff] %vm259, %v2831
        %2864 = vst.msk [vmem:[#allocation3 + $0x120] sm:$0xff] %vm259, %v2832
        %2865 = vst.msk [vmem:[#allocation3 + $0x138] sm:$0xff] %vm259, %v2833
        %2866 = vst.msk [vmem:[#allocation3 + $0x150] sm:$0xff] %vm259, %v2834
        %2867 = vst.msk [vmem:[#allocation3 + $0x168] sm:$0xff] %vm259, %v2835
        %2868 = vst.msk [vmem:[#allocation3 + $0x180] sm:$0xff] %vm259, %v2836
        %2869 = vst.msk [vmem:[#allocation3 + $0x198] sm:$0xff] %vm259, %v2837
        %2870 = vst.msk [vmem:[#allocation3 + $0x1b0] sm:$0xff] %vm259, %v2838
        %2871 = vst.msk [vmem:[#allocation3 + $0x1c8] sm:$0xff] %vm259, %v2839
        %2872 = vst.msk [vmem:[#allocation3 + $0x1e0] sm:$0xff] %vm259, %v2840
        %2873 = vst.msk [vmem:[#allocation3 + $0x1f8] sm:$0xff] %vm259, %v2841
        %2874 = vst.msk [vmem:[#allocation3 + $0x210] sm:$0xff] %vm259, %v2842
        %2875 = vst.msk [vmem:[#allocation3 + $0x228] sm:$0xff] %vm259, %v2843
        %2876 = vst.msk [vmem:[#allocation3 + $0x240] sm:$0xff] %vm259, %v2844
        %2877 = vst.msk [vmem:[#allocation3 + $0x258] sm:$0xff] %vm259, %v2845
        %2878 = vst.msk [vmem:[#allocation3 + $0x270] sm:$0xff] %vm259, %v2846
        %2879 = vst.msk [vmem:[#allocation3 + $0x288] sm:$0xff] %vm259, %v2847
        %2880 = vst.msk [vmem:[#allocation3 + $0x2a0] sm:$0xff] %vm259, %v2848
        %2881 = vst.msk [vmem:[#allocation3 + $0x2b8] sm:$0xff] %vm259, %v2849
        %2882 = vst.msk [vmem:[#allocation3 + $0x2d0] sm:$0xff] %vm259, %v2850
        %2883 = vst.msk [vmem:[#allocation3 + $0x2e8] sm:$0xff] %vm259, %v2851
        %v2884 = vld [vmem:[#allocation2 + $0x1] sm:$0xff]
        %v2885 = vld [vmem:[#allocation2 + $0x9] sm:$0xff]
        %v2886 = vld [vmem:[#allocation2 + $0x19] sm:$0xff]
        %v2887 = vld [vmem:[#allocation2 + $0x21] sm:$0xff]
        %v2888 = vld [vmem:[#allocation2 + $0x31] sm:$0xff]
        %v2889 = vld [vmem:[#allocation2 + $0x39] sm:$0xff]
        %v2890 = vld [vmem:[#allocation2 + $0x49] sm:$0xff]
        %v2891 = vld [vmem:[#allocation2 + $0x51] sm:$0xff]
        %v2892 = vld [vmem:[#allocation2 + $0x61] sm:$0xff]
        %v2893 = vld [vmem:[#allocation2 + $0x69] sm:$0xff]
        %v2894 = vld [vmem:[#allocation2 + $0x79] sm:$0xff]
        %v2895 = vld [vmem:[#allocation2 + $0x81] sm:$0xff]
        %v2896 = vld [vmem:[#allocation2 + $0x91] sm:$0xff]
        %v2897 = vld [vmem:[#allocation2 + $0x99] sm:$0xff]
        %v2898 = vld [vmem:[#allocation2 + $0xa9] sm:$0xff]
        %v2899 = vld [vmem:[#allocation2 + $0xb1] sm:$0xff]
        %v2900 = vld [vmem:[#allocation2 + $0xc1] sm:$0xff]
        %v2901 = vld [vmem:[#allocation2 + $0xc9] sm:$0xff]
        %v2902 = vld [vmem:[#allocation2 + $0xd9] sm:$0xff]
        %v2903 = vld [vmem:[#allocation2 + $0xe1] sm:$0xff]
        %v2904 = vld [vmem:[#allocation2 + $0xf1] sm:$0xff]
        %v2905 = vld [vmem:[#allocation2 + $0xf9] sm:$0xff]
        %v2906 = vld [vmem:[#allocation2 + $0x109] sm:$0xff]
        %v2907 = vld [vmem:[#allocation2 + $0x111] sm:$0xff]
        %v2908 = vld [vmem:[#allocation2 + $0x121] sm:$0xff]
        %v2909 = vld [vmem:[#allocation2 + $0x129] sm:$0xff]
        %v2910 = vld [vmem:[#allocation2 + $0x139] sm:$0xff]
        %v2911 = vld [vmem:[#allocation2 + $0x141] sm:$0xff]
        %v2912 = vld [vmem:[#allocation2 + $0x151] sm:$0xff]
        %v2913 = vld [vmem:[#allocation2 + $0x159] sm:$0xff]
        %v2914 = vld [vmem:[#allocation2 + $0x169] sm:$0xff]
        %v2915 = vld [vmem:[#allocation2 + $0x171] sm:$0xff]
        %2948 = vrot.lane.b32.xlu0 %v2884, 32
        %v2949 = vpop.permute.xlu0 %2948
        %2950 = vrot.lane.b32.xlu0 %v2885, 32
        %v2951 = vpop.permute.xlu0 %2950
        %2952 = vrot.lane.b32.xlu0 %v2886, 32
        %v2953 = vpop.permute.xlu0 %2952
        %2954 = vrot.lane.b32.xlu0 %v2887, 32
        %v2955 = vpop.permute.xlu0 %2954
        %2956 = vrot.lane.b32.xlu0 %v2888, 32
        %v2957 = vpop.permute.xlu0 %2956
        %2958 = vrot.lane.b32.xlu0 %v2889, 32
        %v2959 = vpop.permute.xlu0 %2958
        %2960 = vrot.lane.b32.xlu0 %v2890, 32
        %v2961 = vpop.permute.xlu0 %2960
        %2962 = vrot.lane.b32.xlu0 %v2891, 32
        %v2963 = vpop.permute.xlu0 %2962
        %2964 = vrot.lane.b32.xlu0 %v2892, 32
        %v2965 = vpop.permute.xlu0 %2964
        %2966 = vrot.lane.b32.xlu0 %v2893, 32
        %v2967 = vpop.permute.xlu0 %2966
        %2968 = vrot.lane.b32.xlu0 %v2894, 32
        %v2969 = vpop.permute.xlu0 %2968
        %2970 = vrot.lane.b32.xlu0 %v2895, 32
        %v2971 = vpop.permute.xlu0 %2970
        %2972 = vrot.lane.b32.xlu0 %v2896, 32
        %v2973 = vpop.permute.xlu0 %2972
        %2974 = vrot.lane.b32.xlu0 %v2897, 32
        %v2975 = vpop.permute.xlu0 %2974
        %2976 = vrot.lane.b32.xlu0 %v2898, 32
        %v2977 = vpop.permute.xlu0 %2976
        %2978 = vrot.lane.b32.xlu0 %v2899, 32
        %v2979 = vpop.permute.xlu0 %2978
        %2980 = vrot.lane.b32.xlu0 %v2900, 32
        %v2981 = vpop.permute.xlu0 %2980
        %2982 = vrot.lane.b32.xlu0 %v2901, 32
        %v2983 = vpop.permute.xlu0 %2982
        %2984 = vrot.lane.b32.xlu0 %v2902, 32
        %v2985 = vpop.permute.xlu0 %2984
        %2986 = vrot.lane.b32.xlu0 %v2903, 32
        %v2987 = vpop.permute.xlu0 %2986
        %2988 = vrot.lane.b32.xlu0 %v2904, 32
        %v2989 = vpop.permute.xlu0 %2988
        %2990 = vrot.lane.b32.xlu0 %v2905, 32
        %v2991 = vpop.permute.xlu0 %2990
        %2992 = vrot.lane.b32.xlu0 %v2906, 32
        %v2993 = vpop.permute.xlu0 %2992
        %2994 = vrot.lane.b32.xlu0 %v2907, 32
        %v2995 = vpop.permute.xlu0 %2994
        %2996 = vrot.lane.b32.xlu0 %v2908, 32
        %v2997 = vpop.permute.xlu0 %2996
        %2998 = vrot.lane.b32.xlu0 %v2909, 32
        %v2999 = vpop.permute.xlu0 %2998
        %3000 = vrot.lane.b32.xlu0 %v2910, 32
        %v3001 = vpop.permute.xlu0 %3000
        %3002 = vrot.lane.b32.xlu0 %v2911, 32
        %v3003 = vpop.permute.xlu0 %3002
        %3004 = vrot.lane.b32.xlu0 %v2912, 32
        %v3005 = vpop.permute.xlu0 %3004
        %3006 = vrot.lane.b32.xlu0 %v2913, 32
        %v3007 = vpop.permute.xlu0 %3006
        %3008 = vrot.lane.b32.xlu0 %v2914, 32
        %v3009 = vpop.permute.xlu0 %3008
        %3010 = vrot.lane.b32.xlu0 %v2915, 32
        %v3011 = vpop.permute.xlu0 %3010
        %3044 = vst.msk [vmem:[#allocation3] sm:$0xff] %vm604, %v2949
        %3045 = vst.msk [vmem:[#allocation3 + $0x18] sm:$0xff] %vm604, %v2951
        %3046 = vst.msk [vmem:[#allocation3 + $0x30] sm:$0xff] %vm604, %v2953
        %3047 = vst.msk [vmem:[#allocation3 + $0x48] sm:$0xff] %vm604, %v2955
        %3048 = vst.msk [vmem:[#allocation3 + $0x60] sm:$0xff] %vm604, %v2957
        %3049 = vst.msk [vmem:[#allocation3 + $0x78] sm:$0xff] %vm604, %v2959
        %3050 = vst.msk [vmem:[#allocation3 + $0x90] sm:$0xff] %vm604, %v2961
        %3051 = vst.msk [vmem:[#allocation3 + $0xa8] sm:$0xff] %vm604, %v2963
        %3052 = vst.msk [vmem:[#allocation3 + $0xc0] sm:$0xff] %vm604, %v2965
        %3053 = vst.msk [vmem:[#allocation3 + $0xd8] sm:$0xff] %vm604, %v2967
        %3054 = vst.msk [vmem:[#allocation3 + $0xf0] sm:$0xff] %vm604, %v2969
        %3055 = vst.msk [vmem:[#allocation3 + $0x108] sm:$0xff] %vm604, %v2971
        %3056 = vst.msk [vmem:[#allocation3 + $0x120] sm:$0xff] %vm604, %v2973
        %3057 = vst.msk [vmem:[#allocation3 + $0x138] sm:$0xff] %vm604, %v2975
        %3058 = vst.msk [vmem:[#allocation3 + $0x150] sm:$0xff] %vm604, %v2977
        %3059 = vst.msk [vmem:[#allocation3 + $0x168] sm:$0xff] %vm604, %v2979
        %3060 = vst.msk [vmem:[#allocation3 + $0x180] sm:$0xff] %vm604, %v2981
        %3061 = vst.msk [vmem:[#allocation3 + $0x198] sm:$0xff] %vm604, %v2983
        %3062 = vst.msk [vmem:[#allocation3 + $0x1b0] sm:$0xff] %vm604, %v2985
        %3063 = vst.msk [vmem:[#allocation3 + $0x1c8] sm:$0xff] %vm604, %v2987
        %3064 = vst.msk [vmem:[#allocation3 + $0x1e0] sm:$0xff] %vm604, %v2989
        %3065 = vst.msk [vmem:[#allocation3 + $0x1f8] sm:$0xff] %vm604, %v2991
        %3066 = vst.msk [vmem:[#allocation3 + $0x210] sm:$0xff] %vm604, %v2993
        %3067 = vst.msk [vmem:[#allocation3 + $0x228] sm:$0xff] %vm604, %v2995
        %3068 = vst.msk [vmem:[#allocation3 + $0x240] sm:$0xff] %vm604, %v2997
        %3069 = vst.msk [vmem:[#allocation3 + $0x258] sm:$0xff] %vm604, %v2999
        %3070 = vst.msk [vmem:[#allocation3 + $0x270] sm:$0xff] %vm604, %v3001
        %3071 = vst.msk [vmem:[#allocation3 + $0x288] sm:$0xff] %vm604, %v3003
        %3072 = vst.msk [vmem:[#allocation3 + $0x2a0] sm:$0xff] %vm604, %v3005
        %3073 = vst.msk [vmem:[#allocation3 + $0x2b8] sm:$0xff] %vm604, %v3007
        %3074 = vst.msk [vmem:[#allocation3 + $0x2d0] sm:$0xff] %vm604, %v3009
        %3075 = vst.msk [vmem:[#allocation3 + $0x2e8] sm:$0xff] %vm604, %v3011
        %v3076 = vld [vmem:[#allocation2 + $0x2] sm:$0xff]
        %v3077 = vld [vmem:[#allocation2 + $0xa] sm:$0xff]
        %v3078 = vld [vmem:[#allocation2 + $0x1a] sm:$0xff]
        %v3079 = vld [vmem:[#allocation2 + $0x22] sm:$0xff]
        %v3080 = vld [vmem:[#allocation2 + $0x32] sm:$0xff]
        %v3081 = vld [vmem:[#allocation2 + $0x3a] sm:$0xff]
        %v3082 = vld [vmem:[#allocation2 + $0x4a] sm:$0xff]
        %v3083 = vld [vmem:[#allocation2 + $0x52] sm:$0xff]
        %v3084 = vld [vmem:[#allocation2 + $0x62] sm:$0xff]
        %v3085 = vld [vmem:[#allocation2 + $0x6a] sm:$0xff]
        %v3086 = vld [vmem:[#allocation2 + $0x7a] sm:$0xff]
        %v3087 = vld [vmem:[#allocation2 + $0x82] sm:$0xff]
        %v3088 = vld [vmem:[#allocation2 + $0x92] sm:$0xff]
        %v3089 = vld [vmem:[#allocation2 + $0x9a] sm:$0xff]
        %v3090 = vld [vmem:[#allocation2 + $0xaa] sm:$0xff]
        %v3091 = vld [vmem:[#allocation2 + $0xb2] sm:$0xff]
        %v3092 = vld [vmem:[#allocation2 + $0xc2] sm:$0xff]
        %v3093 = vld [vmem:[#allocation2 + $0xca] sm:$0xff]
        %v3094 = vld [vmem:[#allocation2 + $0xda] sm:$0xff]
        %v3095 = vld [vmem:[#allocation2 + $0xe2] sm:$0xff]
        %v3096 = vld [vmem:[#allocation2 + $0xf2] sm:$0xff]
        %v3097 = vld [vmem:[#allocation2 + $0xfa] sm:$0xff]
        %v3098 = vld [vmem:[#allocation2 + $0x10a] sm:$0xff]
        %v3099 = vld [vmem:[#allocation2 + $0x112] sm:$0xff]
        %v3100 = vld [vmem:[#allocation2 + $0x122] sm:$0xff]
        %v3101 = vld [vmem:[#allocation2 + $0x12a] sm:$0xff]
        %v3102 = vld [vmem:[#allocation2 + $0x13a] sm:$0xff]
        %v3103 = vld [vmem:[#allocation2 + $0x142] sm:$0xff]
        %v3104 = vld [vmem:[#allocation2 + $0x152] sm:$0xff]
        %v3105 = vld [vmem:[#allocation2 + $0x15a] sm:$0xff]
        %v3106 = vld [vmem:[#allocation2 + $0x16a] sm:$0xff]
        %v3107 = vld [vmem:[#allocation2 + $0x172] sm:$0xff]
        %3140 = vrot.lane.b32.xlu0 %v3076, 64
        %v3141 = vpop.permute.xlu0 %3140
        %3142 = vrot.lane.b32.xlu0 %v3077, 64
        %v3143 = vpop.permute.xlu0 %3142
        %3144 = vrot.lane.b32.xlu0 %v3078, 64
        %v3145 = vpop.permute.xlu0 %3144
        %3146 = vrot.lane.b32.xlu0 %v3079, 64
        %v3147 = vpop.permute.xlu0 %3146
        %3148 = vrot.lane.b32.xlu0 %v3080, 64
        %v3149 = vpop.permute.xlu0 %3148
        %3150 = vrot.lane.b32.xlu0 %v3081, 64
        %v3151 = vpop.permute.xlu0 %3150
        %3152 = vrot.lane.b32.xlu0 %v3082, 64
        %v3153 = vpop.permute.xlu0 %3152
        %3154 = vrot.lane.b32.xlu0 %v3083, 64
        %v3155 = vpop.permute.xlu0 %3154
        %3156 = vrot.lane.b32.xlu0 %v3084, 64
        %v3157 = vpop.permute.xlu0 %3156
        %3158 = vrot.lane.b32.xlu0 %v3085, 64
        %v3159 = vpop.permute.xlu0 %3158
        %3160 = vrot.lane.b32.xlu0 %v3086, 64
        %v3161 = vpop.permute.xlu0 %3160
        %3162 = vrot.lane.b32.xlu0 %v3087, 64
        %v3163 = vpop.permute.xlu0 %3162
        %3164 = vrot.lane.b32.xlu0 %v3088, 64
        %v3165 = vpop.permute.xlu0 %3164
        %3166 = vrot.lane.b32.xlu0 %v3089, 64
        %v3167 = vpop.permute.xlu0 %3166
        %3168 = vrot.lane.b32.xlu0 %v3090, 64
        %v3169 = vpop.permute.xlu0 %3168
        %3170 = vrot.lane.b32.xlu0 %v3091, 64
        %v3171 = vpop.permute.xlu0 %3170
        %3172 = vrot.lane.b32.xlu0 %v3092, 64
        %v3173 = vpop.permute.xlu0 %3172
        %3174 = vrot.lane.b32.xlu0 %v3093, 64
        %v3175 = vpop.permute.xlu0 %3174
        %3176 = vrot.lane.b32.xlu0 %v3094, 64
        %v3177 = vpop.permute.xlu0 %3176
        %3178 = vrot.lane.b32.xlu0 %v3095, 64
        %v3179 = vpop.permute.xlu0 %3178
        %3180 = vrot.lane.b32.xlu0 %v3096, 64
        %v3181 = vpop.permute.xlu0 %3180
        %3182 = vrot.lane.b32.xlu0 %v3097, 64
        %v3183 = vpop.permute.xlu0 %3182
        %3184 = vrot.lane.b32.xlu0 %v3098, 64
        %v3185 = vpop.permute.xlu0 %3184
        %3186 = vrot.lane.b32.xlu0 %v3099, 64
        %v3187 = vpop.permute.xlu0 %3186
        %3188 = vrot.lane.b32.xlu0 %v3100, 64
        %v3189 = vpop.permute.xlu0 %3188
        %3190 = vrot.lane.b32.xlu0 %v3101, 64
        %v3191 = vpop.permute.xlu0 %3190
        %3192 = vrot.lane.b32.xlu0 %v3102, 64
        %v3193 = vpop.permute.xlu0 %3192
        %3194 = vrot.lane.b32.xlu0 %v3103, 64
        %v3195 = vpop.permute.xlu0 %3194
        %3196 = vrot.lane.b32.xlu0 %v3104, 64
        %v3197 = vpop.permute.xlu0 %3196
        %3198 = vrot.lane.b32.xlu0 %v3105, 64
        %v3199 = vpop.permute.xlu0 %3198
        %3200 = vrot.lane.b32.xlu0 %v3106, 64
        %v3201 = vpop.permute.xlu0 %3200
        %3202 = vrot.lane.b32.xlu0 %v3107, 64
        %v3203 = vpop.permute.xlu0 %3202
        %3236 = vst.msk [vmem:[#allocation3] sm:$0xff] %vm797, %v3141
        %3237 = vst.msk [vmem:[#allocation3 + $0x18] sm:$0xff] %vm797, %v3143
        %3238 = vst.msk [vmem:[#allocation3 + $0x30] sm:$0xff] %vm797, %v3145
        %3239 = vst.msk [vmem:[#allocation3 + $0x48] sm:$0xff] %vm797, %v3147
        %3240 = vst.msk [vmem:[#allocation3 + $0x60] sm:$0xff] %vm797, %v3149
        %3241 = vst.msk [vmem:[#allocation3 + $0x78] sm:$0xff] %vm797, %v3151
        %3242 = vst.msk [vmem:[#allocation3 + $0x90] sm:$0xff] %vm797, %v3153
        %3243 = vst.msk [vmem:[#allocation3 + $0xa8] sm:$0xff] %vm797, %v3155
        %3244 = vst.msk [vmem:[#allocation3 + $0xc0] sm:$0xff] %vm797, %v3157
        %3245 = vst.msk [vmem:[#allocation3 + $0xd8] sm:$0xff] %vm797, %v3159
        %3246 = vst.msk [vmem:[#allocation3 + $0xf0] sm:$0xff] %vm797, %v3161
        %3247 = vst.msk [vmem:[#allocation3 + $0x108] sm:$0xff] %vm797, %v3163
        %3248 = vst.msk [vmem:[#allocation3 + $0x120] sm:$0xff] %vm797, %v3165
        %3249 = vst.msk [vmem:[#allocation3 + $0x138] sm:$0xff] %vm797, %v3167
        %3250 = vst.msk [vmem:[#allocation3 + $0x150] sm:$0xff] %vm797, %v3169
        %3251 = vst.msk [vmem:[#allocation3 + $0x168] sm:$0xff] %vm797, %v3171
        %3252 = vst.msk [vmem:[#allocation3 + $0x180] sm:$0xff] %vm797, %v3173
        %3253 = vst.msk [vmem:[#allocation3 + $0x198] sm:$0xff] %vm797, %v3175
        %3254 = vst.msk [vmem:[#allocation3 + $0x1b0] sm:$0xff] %vm797, %v3177
        %3255 = vst.msk [vmem:[#allocation3 + $0x1c8] sm:$0xff] %vm797, %v3179
        %3256 = vst.msk [vmem:[#allocation3 + $0x1e0] sm:$0xff] %vm797, %v3181
        %3257 = vst.msk [vmem:[#allocation3 + $0x1f8] sm:$0xff] %vm797, %v3183
        %3258 = vst.msk [vmem:[#allocation3 + $0x210] sm:$0xff] %vm797, %v3185
        %3259 = vst.msk [vmem:[#allocation3 + $0x228] sm:$0xff] %vm797, %v3187
        %3260 = vst.msk [vmem:[#allocation3 + $0x240] sm:$0xff] %vm797, %v3189
        %3261 = vst.msk [vmem:[#allocation3 + $0x258] sm:$0xff] %vm797, %v3191
        %3262 = vst.msk [vmem:[#allocation3 + $0x270] sm:$0xff] %vm797, %v3193
        %3263 = vst.msk [vmem:[#allocation3 + $0x288] sm:$0xff] %vm797, %v3195
        %3264 = vst.msk [vmem:[#allocation3 + $0x2a0] sm:$0xff] %vm797, %v3197
        %3265 = vst.msk [vmem:[#allocation3 + $0x2b8] sm:$0xff] %vm797, %v3199
        %3266 = vst.msk [vmem:[#allocation3 + $0x2d0] sm:$0xff] %vm797, %v3201
        %3267 = vst.msk [vmem:[#allocation3 + $0x2e8] sm:$0xff] %vm797, %v3203
        %v3268 = vld [vmem:[%s347] sm:$0xff]
        %v3269 = vld [vmem:[%s347 + $0x8] sm:$0xff]
        %v3270 = vld [vmem:[%s347 + $0x18] sm:$0xff]
        %v3271 = vld [vmem:[%s347 + $0x20] sm:$0xff]
        %v3272 = vld [vmem:[%s347 + $0x30] sm:$0xff]
        %v3273 = vld [vmem:[%s347 + $0x38] sm:$0xff]
        %v3274 = vld [vmem:[%s347 + $0x48] sm:$0xff]
        %v3275 = vld [vmem:[%s347 + $0x50] sm:$0xff]
        %v3276 = vld [vmem:[%s347 + $0x60] sm:$0xff]
        %v3277 = vld [vmem:[%s347 + $0x68] sm:$0xff]
        %v3278 = vld [vmem:[%s347 + $0x78] sm:$0xff]
        %v3279 = vld [vmem:[%s347 + $0x80] sm:$0xff]
        %v3280 = vld [vmem:[%s347 + $0x90] sm:$0xff]
        %v3281 = vld [vmem:[%s347 + $0x98] sm:$0xff]
        %v3282 = vld [vmem:[%s347 + $0xa8] sm:$0xff]
        %v3283 = vld [vmem:[%s347 + $0xb0] sm:$0xff]
        %v3284 = vld [vmem:[%s347 + $0xc0] sm:$0xff]
        %v3285 = vld [vmem:[%s347 + $0xc8] sm:$0xff]
        %v3286 = vld [vmem:[%s347 + $0xd8] sm:$0xff]
        %v3287 = vld [vmem:[%s347 + $0xe0] sm:$0xff]
        %v3288 = vld [vmem:[%s347 + $0xf0] sm:$0xff]
        %v3289 = vld [vmem:[%s347 + $0xf8] sm:$0xff]
        %v3290 = vld [vmem:[%s347 + $0x108] sm:$0xff]
        %v3291 = vld [vmem:[%s347 + $0x110] sm:$0xff]
        %v3292 = vld [vmem:[%s347 + $0x120] sm:$0xff]
        %v3293 = vld [vmem:[%s347 + $0x128] sm:$0xff]
        %v3294 = vld [vmem:[%s347 + $0x138] sm:$0xff]
        %v3295 = vld [vmem:[%s347 + $0x140] sm:$0xff]
        %v3296 = vld [vmem:[%s347 + $0x150] sm:$0xff]
        %v3297 = vld [vmem:[%s347 + $0x158] sm:$0xff]
        %v3298 = vld [vmem:[%s347 + $0x168] sm:$0xff]
        %v3299 = vld [vmem:[%s347 + $0x170] sm:$0xff]
        %3332 = vrot.lane.b32.xlu0 %v3268, 96
        %v3333 = vpop.permute.xlu0 %3332
        %3334 = vrot.lane.b32.xlu0 %v3269, 96
        %v3335 = vpop.permute.xlu0 %3334
        %3336 = vrot.lane.b32.xlu0 %v3270, 96
        %v3337 = vpop.permute.xlu0 %3336
        %3338 = vrot.lane.b32.xlu0 %v3271, 96
        %v3339 = vpop.permute.xlu0 %3338
        %3340 = vrot.lane.b32.xlu0 %v3272, 96
        %v3341 = vpop.permute.xlu0 %3340
        %3342 = vrot.lane.b32.xlu0 %v3273, 96
        %v3343 = vpop.permute.xlu0 %3342
        %3344 = vrot.lane.b32.xlu0 %v3274, 96
        %v3345 = vpop.permute.xlu0 %3344
        %3346 = vrot.lane.b32.xlu0 %v3275, 96
        %v3347 = vpop.permute.xlu0 %3346
        %3348 = vrot.lane.b32.xlu0 %v3276, 96
        %v3349 = vpop.permute.xlu0 %3348
        %3350 = vrot.lane.b32.xlu0 %v3277, 96
        %v3351 = vpop.permute.xlu0 %3350
        %3352 = vrot.lane.b32.xlu0 %v3278, 96
        %v3353 = vpop.permute.xlu0 %3352
        %3354 = vrot.lane.b32.xlu0 %v3279, 96
        %v3355 = vpop.permute.xlu0 %3354
        %3356 = vrot.lane.b32.xlu0 %v3280, 96
        %v3357 = vpop.permute.xlu0 %3356
        %3358 = vrot.lane.b32.xlu0 %v3281, 96
        %v3359 = vpop.permute.xlu0 %3358
        %3360 = vrot.lane.b32.xlu0 %v3282, 96
        %v3361 = vpop.permute.xlu0 %3360
        %3362 = vrot.lane.b32.xlu0 %v3283, 96
        %v3363 = vpop.permute.xlu0 %3362
        %3364 = vrot.lane.b32.xlu0 %v3284, 96
        %v3365 = vpop.permute.xlu0 %3364
        %3366 = vrot.lane.b32.xlu0 %v3285, 96
        %v3367 = vpop.permute.xlu0 %3366
        %3368 = vrot.lane.b32.xlu0 %v3286, 96
        %v3369 = vpop.permute.xlu0 %3368
        %3370 = vrot.lane.b32.xlu0 %v3287, 96
        %v3371 = vpop.permute.xlu0 %3370
        %3372 = vrot.lane.b32.xlu0 %v3288, 96
        %v3373 = vpop.permute.xlu0 %3372
        %3374 = vrot.lane.b32.xlu0 %v3289, 96
        %v3375 = vpop.permute.xlu0 %3374
        %3376 = vrot.lane.b32.xlu0 %v3290, 96
        %v3377 = vpop.permute.xlu0 %3376
        %3378 = vrot.lane.b32.xlu0 %v3291, 96
        %v3379 = vpop.permute.xlu0 %3378
        %3380 = vrot.lane.b32.xlu0 %v3292, 96
        %v3381 = vpop.permute.xlu0 %3380
        %3382 = vrot.lane.b32.xlu0 %v3293, 96
        %v3383 = vpop.permute.xlu0 %3382
        %3384 = vrot.lane.b32.xlu0 %v3294, 96
        %v3385 = vpop.permute.xlu0 %3384
        %3386 = vrot.lane.b32.xlu0 %v3295, 96
        %v3387 = vpop.permute.xlu0 %3386
        %3388 = vrot.lane.b32.xlu0 %v3296, 96
        %v3389 = vpop.permute.xlu0 %3388
        %3390 = vrot.lane.b32.xlu0 %v3297, 96
        %v3391 = vpop.permute.xlu0 %3390
        %3392 = vrot.lane.b32.xlu0 %v3298, 96
        %v3393 = vpop.permute.xlu0 %3392
        %3394 = vrot.lane.b32.xlu0 %v3299, 96
        %v3395 = vpop.permute.xlu0 %3394
        %3428 = vst.msk [vmem:[#allocation3] sm:$0xff] %vm990, %v3333
        %3429 = vst.msk [vmem:[#allocation3 + $0x18] sm:$0xff] %vm990, %v3335
        %3430 = vst.msk [vmem:[#allocation3 + $0x30] sm:$0xff] %vm990, %v3337
        %3431 = vst.msk [vmem:[#allocation3 + $0x48] sm:$0xff] %vm990, %v3339
        %3432 = vst.msk [vmem:[#allocation3 + $0x60] sm:$0xff] %vm990, %v3341
        %3433 = vst.msk [vmem:[#allocation3 + $0x78] sm:$0xff] %vm990, %v3343
        %3434 = vst.msk [vmem:[#allocation3 + $0x90] sm:$0xff] %vm990, %v3345
        %3435 = vst.msk [vmem:[#allocation3 + $0xa8] sm:$0xff] %vm990, %v3347
        %3436 = vst.msk [vmem:[#allocation3 + $0xc0] sm:$0xff] %vm990, %v3349
        %3437 = vst.msk [vmem:[#allocation3 + $0xd8] sm:$0xff] %vm990, %v3351
        %3438 = vst.msk [vmem:[#allocation3 + $0xf0] sm:$0xff] %vm990, %v3353
        %3439 = vst.msk [vmem:[#allocation3 + $0x108] sm:$0xff] %vm990, %v3355
        %3440 = vst.msk [vmem:[#allocation3 + $0x120] sm:$0xff] %vm990, %v3357
        %3441 = vst.msk [vmem:[#allocation3 + $0x138] sm:$0xff] %vm990, %v3359
        %3442 = vst.msk [vmem:[#allocation3 + $0x150] sm:$0xff] %vm990, %v3361
        %3443 = vst.msk [vmem:[#allocation3 + $0x168] sm:$0xff] %vm990, %v3363
        %3444 = vst.msk [vmem:[#allocation3 + $0x180] sm:$0xff] %vm990, %v3365
        %3445 = vst.msk [vmem:[#allocation3 + $0x198] sm:$0xff] %vm990, %v3367
        %3446 = vst.msk [vmem:[#allocation3 + $0x1b0] sm:$0xff] %vm990, %v3369
        %3447 = vst.msk [vmem:[#allocation3 + $0x1c8] sm:$0xff] %vm990, %v3371
        %3448 = vst.msk [vmem:[#allocation3 + $0x1e0] sm:$0xff] %vm990, %v3373
        %3449 = vst.msk [vmem:[#allocation3 + $0x1f8] sm:$0xff] %vm990, %v3375
        %3450 = vst.msk [vmem:[#allocation3 + $0x210] sm:$0xff] %vm990, %v3377
        %3451 = vst.msk [vmem:[#allocation3 + $0x228] sm:$0xff] %vm990, %v3379
        %3452 = vst.msk [vmem:[#allocation3 + $0x240] sm:$0xff] %vm990, %v3381
        %3453 = vst.msk [vmem:[#allocation3 + $0x258] sm:$0xff] %vm990, %v3383
        %3454 = vst.msk [vmem:[#allocation3 + $0x270] sm:$0xff] %vm990, %v3385
        %3455 = vst.msk [vmem:[#allocation3 + $0x288] sm:$0xff] %vm990, %v3387
        %3456 = vst.msk [vmem:[#allocation3 + $0x2a0] sm:$0xff] %vm990, %v3389
        %3457 = vst.msk [vmem:[#allocation3 + $0x2b8] sm:$0xff] %vm990, %v3391
        %3458 = vst.msk [vmem:[#allocation3 + $0x2d0] sm:$0xff] %vm990, %v3393
        %3459 = vst.msk [vmem:[#allocation3 + $0x2e8] sm:$0xff] %vm990, %v3395
        %v3460 = vld [vmem:[%s347 + $0x1] sm:$0xff]
        %v3461 = vld [vmem:[%s347 + $0x9] sm:$0xff]
        %v3462 = vld [vmem:[%s347 + $0x19] sm:$0xff]
        %v3463 = vld [vmem:[%s347 + $0x21] sm:$0xff]
        %v3464 = vld [vmem:[%s347 + $0x31] sm:$0xff]
        %v3465 = vld [vmem:[%s347 + $0x39] sm:$0xff]
        %v3466 = vld [vmem:[%s347 + $0x49] sm:$0xff]
        %v3467 = vld [vmem:[%s347 + $0x51] sm:$0xff]
        %v3468 = vld [vmem:[%s347 + $0x61] sm:$0xff]
        %v3469 = vld [vmem:[%s347 + $0x69] sm:$0xff]
        %v3470 = vld [vmem:[%s347 + $0x79] sm:$0xff]
        %v3471 = vld [vmem:[%s347 + $0x81] sm:$0xff]
        %v3472 = vld [vmem:[%s347 + $0x91] sm:$0xff]
        %v3473 = vld [vmem:[%s347 + $0x99] sm:$0xff]
        %v3474 = vld [vmem:[%s347 + $0xa9] sm:$0xff]
        %v3475 = vld [vmem:[%s347 + $0xb1] sm:$0xff]
        %v3476 = vld [vmem:[%s347 + $0xc1] sm:$0xff]
        %v3477 = vld [vmem:[%s347 + $0xc9] sm:$0xff]
        %v3478 = vld [vmem:[%s347 + $0xd9] sm:$0xff]
        %v3479 = vld [vmem:[%s347 + $0xe1] sm:$0xff]
        %v3480 = vld [vmem:[%s347 + $0xf1] sm:$0xff]
        %v3481 = vld [vmem:[%s347 + $0xf9] sm:$0xff]
        %v3482 = vld [vmem:[%s347 + $0x109] sm:$0xff]
        %v3483 = vld [vmem:[%s347 + $0x111] sm:$0xff]
        %v3484 = vld [vmem:[%s347 + $0x121] sm:$0xff]
        %v3485 = vld [vmem:[%s347 + $0x129] sm:$0xff]
        %v3486 = vld [vmem:[%s347 + $0x139] sm:$0xff]
        %v3487 = vld [vmem:[%s347 + $0x141] sm:$0xff]
        %v3488 = vld [vmem:[%s347 + $0x151] sm:$0xff]
        %v3489 = vld [vmem:[%s347 + $0x159] sm:$0xff]
        %v3490 = vld [vmem:[%s347 + $0x169] sm:$0xff]
        %v3491 = vld [vmem:[%s347 + $0x171] sm:$0xff]
        %3492 = vst.msk [vmem:[#allocation3 + $0x8] sm:$0xff] %vm259, %v3460
        %3493 = vst.msk [vmem:[#allocation3 + $0x20] sm:$0xff] %vm259, %v3461
        %3494 = vst.msk [vmem:[#allocation3 + $0x38] sm:$0xff] %vm259, %v3462
        %3495 = vst.msk [vmem:[#allocation3 + $0x50] sm:$0xff] %vm259, %v3463
        %3496 = vst.msk [vmem:[#allocation3 + $0x68] sm:$0xff] %vm259, %v3464
        %3497 = vst.msk [vmem:[#allocation3 + $0x80] sm:$0xff] %vm259, %v3465
        %3498 = vst.msk [vmem:[#allocation3 + $0x98] sm:$0xff] %vm259, %v3466
        %3499 = vst.msk [vmem:[#allocation3 + $0xb0] sm:$0xff] %vm259, %v3467
        %3500 = vst.msk [vmem:[#allocation3 + $0xc8] sm:$0xff] %vm259, %v3468
        %3501 = vst.msk [vmem:[#allocation3 + $0xe0] sm:$0xff] %vm259, %v3469
        %3502 = vst.msk [vmem:[#allocation3 + $0xf8] sm:$0xff] %vm259, %v3470
        %3503 = vst.msk [vmem:[#allocation3 + $0x110] sm:$0xff] %vm259, %v3471
        %3504 = vst.msk [vmem:[#allocation3 + $0x128] sm:$0xff] %vm259, %v3472
        %3505 = vst.msk [vmem:[#allocation3 + $0x140] sm:$0xff] %vm259, %v3473
        %3506 = vst.msk [vmem:[#allocation3 + $0x158] sm:$0xff] %vm259, %v3474
        %3507 = vst.msk [vmem:[#allocation3 + $0x170] sm:$0xff] %vm259, %v3475
        %3508 = vst.msk [vmem:[#allocation3 + $0x188] sm:$0xff] %vm259, %v3476
        %3509 = vst.msk [vmem:[#allocation3 + $0x1a0] sm:$0xff] %vm259, %v3477
        %3510 = vst.msk [vmem:[#allocation3 + $0x1b8] sm:$0xff] %vm259, %v3478
        %3511 = vst.msk [vmem:[#allocation3 + $0x1d0] sm:$0xff] %vm259, %v3479
        %3512 = vst.msk [vmem:[#allocation3 + $0x1e8] sm:$0xff] %vm259, %v3480
        %3513 = vst.msk [vmem:[#allocation3 + $0x200] sm:$0xff] %vm259, %v3481
        %3514 = vst.msk [vmem:[#allocation3 + $0x218] sm:$0xff] %vm259, %v3482
        %3515 = vst.msk [vmem:[#allocation3 + $0x230] sm:$0xff] %vm259, %v3483
        %3516 = vst.msk [vmem:[#allocation3 + $0x248] sm:$0xff] %vm259, %v3484
        %3517 = vst.msk [vmem:[#allocation3 + $0x260] sm:$0xff] %vm259, %v3485
        %3518 = vst.msk [vmem:[#allocation3 + $0x278] sm:$0xff] %vm259, %v3486
        %3519 = vst.msk [vmem:[#allocation3 + $0x290] sm:$0xff] %vm259, %v3487
        %3520 = vst.msk [vmem:[#allocation3 + $0x2a8] sm:$0xff] %vm259, %v3488
        %3521 = vst.msk [vmem:[#allocation3 + $0x2c0] sm:$0xff] %vm259, %v3489
        %3522 = vst.msk [vmem:[#allocation3 + $0x2d8] sm:$0xff] %vm259, %v3490
        %3523 = vst.msk [vmem:[#allocation3 + $0x2f0] sm:$0xff] %vm259, %v3491
        %v3524 = vld [vmem:[%s347 + $0x2] sm:$0xff]
        %v3525 = vld [vmem:[%s347 + $0xa] sm:$0xff]
        %v3526 = vld [vmem:[%s347 + $0x1a] sm:$0xff]
        %v3527 = vld [vmem:[%s347 + $0x22] sm:$0xff]
        %v3528 = vld [vmem:[%s347 + $0x32] sm:$0xff]
        %v3529 = vld [vmem:[%s347 + $0x3a] sm:$0xff]
        %v3530 = vld [vmem:[%s347 + $0x4a] sm:$0xff]
        %v3531 = vld [vmem:[%s347 + $0x52] sm:$0xff]
        %v3532 = vld [vmem:[%s347 + $0x62] sm:$0xff]
        %v3533 = vld [vmem:[%s347 + $0x6a] sm:$0xff]
        %v3534 = vld [vmem:[%s347 + $0x7a] sm:$0xff]
        %v3535 = vld [vmem:[%s347 + $0x82] sm:$0xff]
        %v3536 = vld [vmem:[%s347 + $0x92] sm:$0xff]
        %v3537 = vld [vmem:[%s347 + $0x9a] sm:$0xff]
        %v3538 = vld [vmem:[%s347 + $0xaa] sm:$0xff]
        %v3539 = vld [vmem:[%s347 + $0xb2] sm:$0xff]
        %v3540 = vld [vmem:[%s347 + $0xc2] sm:$0xff]
        %v3541 = vld [vmem:[%s347 + $0xca] sm:$0xff]
        %v3542 = vld [vmem:[%s347 + $0xda] sm:$0xff]
        %v3543 = vld [vmem:[%s347 + $0xe2] sm:$0xff]
        %v3544 = vld [vmem:[%s347 + $0xf2] sm:$0xff]
        %v3545 = vld [vmem:[%s347 + $0xfa] sm:$0xff]
        %v3546 = vld [vmem:[%s347 + $0x10a] sm:$0xff]
        %v3547 = vld [vmem:[%s347 + $0x112] sm:$0xff]
        %v3548 = vld [vmem:[%s347 + $0x122] sm:$0xff]
        %v3549 = vld [vmem:[%s347 + $0x12a] sm:$0xff]
        %v3550 = vld [vmem:[%s347 + $0x13a] sm:$0xff]
        %v3551 = vld [vmem:[%s347 + $0x142] sm:$0xff]
        %v3552 = vld [vmem:[%s347 + $0x152] sm:$0xff]
        %v3553 = vld [vmem:[%s347 + $0x15a] sm:$0xff]
        %v3554 = vld [vmem:[%s347 + $0x16a] sm:$0xff]
        %v3555 = vld [vmem:[%s347 + $0x172] sm:$0xff]
        %3588 = vrot.lane.b32.xlu0 %v3524, 32
        %v3589 = vpop.permute.xlu0 %3588
        %3590 = vrot.lane.b32.xlu0 %v3525, 32
        %v3591 = vpop.permute.xlu0 %3590
        %3592 = vrot.lane.b32.xlu0 %v3526, 32
        %v3593 = vpop.permute.xlu0 %3592
        %3594 = vrot.lane.b32.xlu0 %v3527, 32
        %v3595 = vpop.permute.xlu0 %3594
        %3596 = vrot.lane.b32.xlu0 %v3528, 32
        %v3597 = vpop.permute.xlu0 %3596
        %3598 = vrot.lane.b32.xlu0 %v3529, 32
        %v3599 = vpop.permute.xlu0 %3598
        %3600 = vrot.lane.b32.xlu0 %v3530, 32
        %v3601 = vpop.permute.xlu0 %3600
        %3602 = vrot.lane.b32.xlu0 %v3531, 32
        %v3603 = vpop.permute.xlu0 %3602
        %3604 = vrot.lane.b32.xlu0 %v3532, 32
        %v3605 = vpop.permute.xlu0 %3604
        %3606 = vrot.lane.b32.xlu0 %v3533, 32
        %v3607 = vpop.permute.xlu0 %3606
        %3608 = vrot.lane.b32.xlu0 %v3534, 32
        %v3609 = vpop.permute.xlu0 %3608
        %3610 = vrot.lane.b32.xlu0 %v3535, 32
        %v3611 = vpop.permute.xlu0 %3610
        %3612 = vrot.lane.b32.xlu0 %v3536, 32
        %v3613 = vpop.permute.xlu0 %3612
        %3614 = vrot.lane.b32.xlu0 %v3537, 32
        %v3615 = vpop.permute.xlu0 %3614
        %3616 = vrot.lane.b32.xlu0 %v3538, 32
        %v3617 = vpop.permute.xlu0 %3616
        %3618 = vrot.lane.b32.xlu0 %v3539, 32
        %v3619 = vpop.permute.xlu0 %3618
        %3620 = vrot.lane.b32.xlu0 %v3540, 32
        %v3621 = vpop.permute.xlu0 %3620
        %3622 = vrot.lane.b32.xlu0 %v3541, 32
        %v3623 = vpop.permute.xlu0 %3622
        %3624 = vrot.lane.b32.xlu0 %v3542, 32
        %v3625 = vpop.permute.xlu0 %3624
        %3626 = vrot.lane.b32.xlu0 %v3543, 32
        %v3627 = vpop.permute.xlu0 %3626
        %3628 = vrot.lane.b32.xlu0 %v3544, 32
        %v3629 = vpop.permute.xlu0 %3628
        %3630 = vrot.lane.b32.xlu0 %v3545, 32
        %v3631 = vpop.permute.xlu0 %3630
        %3632 = vrot.lane.b32.xlu0 %v3546, 32
        %v3633 = vpop.permute.xlu0 %3632
        %3634 = vrot.lane.b32.xlu0 %v3547, 32
        %v3635 = vpop.permute.xlu0 %3634
        %3636 = vrot.lane.b32.xlu0 %v3548, 32
        %v3637 = vpop.permute.xlu0 %3636
        %3638 = vrot.lane.b32.xlu0 %v3549, 32
        %v3639 = vpop.permute.xlu0 %3638
        %3640 = vrot.lane.b32.xlu0 %v3550, 32
        %v3641 = vpop.permute.xlu0 %3640
        %3642 = vrot.lane.b32.xlu0 %v3551, 32
        %v3643 = vpop.permute.xlu0 %3642
        %3644 = vrot.lane.b32.xlu0 %v3552, 32
        %v3645 = vpop.permute.xlu0 %3644
        %3646 = vrot.lane.b32.xlu0 %v3553, 32
        %v3647 = vpop.permute.xlu0 %3646
        %3648 = vrot.lane.b32.xlu0 %v3554, 32
        %v3649 = vpop.permute.xlu0 %3648
        %3650 = vrot.lane.b32.xlu0 %v3555, 32
        %v3651 = vpop.permute.xlu0 %3650
        %3684 = vst.msk [vmem:[#allocation3 + $0x8] sm:$0xff] %vm604, %v3589
        %3685 = vst.msk [vmem:[#allocation3 + $0x20] sm:$0xff] %vm604, %v3591
        %3686 = vst.msk [vmem:[#allocation3 + $0x38] sm:$0xff] %vm604, %v3593
        %3687 = vst.msk [vmem:[#allocation3 + $0x50] sm:$0xff] %vm604, %v3595
        %3688 = vst.msk [vmem:[#allocation3 + $0x68] sm:$0xff] %vm604, %v3597
        %3689 = vst.msk [vmem:[#allocation3 + $0x80] sm:$0xff] %vm604, %v3599
        %3690 = vst.msk [vmem:[#allocation3 + $0x98] sm:$0xff] %vm604, %v3601
        %3691 = vst.msk [vmem:[#allocation3 + $0xb0] sm:$0xff] %vm604, %v3603
        %3692 = vst.msk [vmem:[#allocation3 + $0xc8] sm:$0xff] %vm604, %v3605
        %3693 = vst.msk [vmem:[#allocation3 + $0xe0] sm:$0xff] %vm604, %v3607
        %3694 = vst.msk [vmem:[#allocation3 + $0xf8] sm:$0xff] %vm604, %v3609
        %3695 = vst.msk [vmem:[#allocation3 + $0x110] sm:$0xff] %vm604, %v3611
        %3696 = vst.msk [vmem:[#allocation3 + $0x128] sm:$0xff] %vm604, %v3613
        %3697 = vst.msk [vmem:[#allocation3 + $0x140] sm:$0xff] %vm604, %v3615
        %3698 = vst.msk [vmem:[#allocation3 + $0x158] sm:$0xff] %vm604, %v3617
        %3699 = vst.msk [vmem:[#allocation3 + $0x170] sm:$0xff] %vm604, %v3619
        %3700 = vst.msk [vmem:[#allocation3 + $0x188] sm:$0xff] %vm604, %v3621
        %3701 = vst.msk [vmem:[#allocation3 + $0x1a0] sm:$0xff] %vm604, %v3623
        %3702 = vst.msk [vmem:[#allocation3 + $0x1b8] sm:$0xff] %vm604, %v3625
        %3703 = vst.msk [vmem:[#allocation3 + $0x1d0] sm:$0xff] %vm604, %v3627
        %3704 = vst.msk [vmem:[#allocation3 + $0x1e8] sm:$0xff] %vm604, %v3629
        %3705 = vst.msk [vmem:[#allocation3 + $0x200] sm:$0xff] %vm604, %v3631
        %3706 = vst.msk [vmem:[#allocation3 + $0x218] sm:$0xff] %vm604, %v3633
        %3707 = vst.msk [vmem:[#allocation3 + $0x230] sm:$0xff] %vm604, %v3635
        %3708 = vst.msk [vmem:[#allocation3 + $0x248] sm:$0xff] %vm604, %v3637
        %3709 = vst.msk [vmem:[#allocation3 + $0x260] sm:$0xff] %vm604, %v3639
        %3710 = vst.msk [vmem:[#allocation3 + $0x278] sm:$0xff] %vm604, %v3641
        %3711 = vst.msk [vmem:[#allocation3 + $0x290] sm:$0xff] %vm604, %v3643
        %3712 = vst.msk [vmem:[#allocation3 + $0x2a8] sm:$0xff] %vm604, %v3645
        %3713 = vst.msk [vmem:[#allocation3 + $0x2c0] sm:$0xff] %vm604, %v3647
        %3714 = vst.msk [vmem:[#allocation3 + $0x2d8] sm:$0xff] %vm604, %v3649
        %3715 = vst.msk [vmem:[#allocation3 + $0x2f0] sm:$0xff] %vm604, %v3651
        %v3716 = vld [vmem:[%s1279] sm:$0xff]
        %v3717 = vld [vmem:[%s1279 + $0x8] sm:$0xff]
        %v3718 = vld [vmem:[%s1279 + $0x18] sm:$0xff]
        %v3719 = vld [vmem:[%s1279 + $0x20] sm:$0xff]
        %v3720 = vld [vmem:[%s1279 + $0x30] sm:$0xff]
        %v3721 = vld [vmem:[%s1279 + $0x38] sm:$0xff]
        %v3722 = vld [vmem:[%s1279 + $0x48] sm:$0xff]
        %v3723 = vld [vmem:[%s1279 + $0x50] sm:$0xff]
        %v3724 = vld [vmem:[%s1279 + $0x60] sm:$0xff]
        %v3725 = vld [vmem:[%s1279 + $0x68] sm:$0xff]
        %v3726 = vld [vmem:[%s1279 + $0x78] sm:$0xff]
        %v3727 = vld [vmem:[%s1279 + $0x80] sm:$0xff]
        %v3728 = vld [vmem:[%s1279 + $0x90] sm:$0xff]
        %v3729 = vld [vmem:[%s1279 + $0x98] sm:$0xff]
        %v3730 = vld [vmem:[%s1279 + $0xa8] sm:$0xff]
        %v3731 = vld [vmem:[%s1279 + $0xb0] sm:$0xff]
        %v3732 = vld [vmem:[%s1279 + $0xc0] sm:$0xff]
        %v3733 = vld [vmem:[%s1279 + $0xc8] sm:$0xff]
        %v3734 = vld [vmem:[%s1279 + $0xd8] sm:$0xff]
        %v3735 = vld [vmem:[%s1279 + $0xe0] sm:$0xff]
        %v3736 = vld [vmem:[%s1279 + $0xf0] sm:$0xff]
        %v3737 = vld [vmem:[%s1279 + $0xf8] sm:$0xff]
        %v3738 = vld [vmem:[%s1279 + $0x108] sm:$0xff]
        %v3739 = vld [vmem:[%s1279 + $0x110] sm:$0xff]
        %v3740 = vld [vmem:[%s1279 + $0x120] sm:$0xff]
        %v3741 = vld [vmem:[%s1279 + $0x128] sm:$0xff]
        %v3742 = vld [vmem:[%s1279 + $0x138] sm:$0xff]
        %v3743 = vld [vmem:[%s1279 + $0x140] sm:$0xff]
        %v3744 = vld [vmem:[%s1279 + $0x150] sm:$0xff]
        %v3745 = vld [vmem:[%s1279 + $0x158] sm:$0xff]
        %v3746 = vld [vmem:[%s1279 + $0x168] sm:$0xff]
        %v3747 = vld [vmem:[%s1279 + $0x170] sm:$0xff]
        %3780 = vrot.lane.b32.xlu0 %v3716, 64
        %v3781 = vpop.permute.xlu0 %3780
        %3782 = vrot.lane.b32.xlu0 %v3717, 64
        %v3783 = vpop.permute.xlu0 %3782
        %3784 = vrot.lane.b32.xlu0 %v3718, 64
        %v3785 = vpop.permute.xlu0 %3784
        %3786 = vrot.lane.b32.xlu0 %v3719, 64
        %v3787 = vpop.permute.xlu0 %3786
        %3788 = vrot.lane.b32.xlu0 %v3720, 64
        %v3789 = vpop.permute.xlu0 %3788
        %3790 = vrot.lane.b32.xlu0 %v3721, 64
        %v3791 = vpop.permute.xlu0 %3790
        %3792 = vrot.lane.b32.xlu0 %v3722, 64
        %v3793 = vpop.permute.xlu0 %3792
        %3794 = vrot.lane.b32.xlu0 %v3723, 64
        %v3795 = vpop.permute.xlu0 %3794
        %3796 = vrot.lane.b32.xlu0 %v3724, 64
        %v3797 = vpop.permute.xlu0 %3796
        %3798 = vrot.lane.b32.xlu0 %v3725, 64
        %v3799 = vpop.permute.xlu0 %3798
        %3800 = vrot.lane.b32.xlu0 %v3726, 64
        %v3801 = vpop.permute.xlu0 %3800
        %3802 = vrot.lane.b32.xlu0 %v3727, 64
        %v3803 = vpop.permute.xlu0 %3802
        %3804 = vrot.lane.b32.xlu0 %v3728, 64
        %v3805 = vpop.permute.xlu0 %3804
        %3806 = vrot.lane.b32.xlu0 %v3729, 64
        %v3807 = vpop.permute.xlu0 %3806
        %3808 = vrot.lane.b32.xlu0 %v3730, 64
        %v3809 = vpop.permute.xlu0 %3808
        %3810 = vrot.lane.b32.xlu0 %v3731, 64
        %v3811 = vpop.permute.xlu0 %3810
        %3812 = vrot.lane.b32.xlu0 %v3732, 64
        %v3813 = vpop.permute.xlu0 %3812
        %3814 = vrot.lane.b32.xlu0 %v3733, 64
        %v3815 = vpop.permute.xlu0 %3814
        %3816 = vrot.lane.b32.xlu0 %v3734, 64
        %v3817 = vpop.permute.xlu0 %3816
        %3818 = vrot.lane.b32.xlu0 %v3735, 64
        %v3819 = vpop.permute.xlu0 %3818
        %3820 = vrot.lane.b32.xlu0 %v3736, 64
        %v3821 = vpop.permute.xlu0 %3820
        %3822 = vrot.lane.b32.xlu0 %v3737, 64
        %v3823 = vpop.permute.xlu0 %3822
        %3824 = vrot.lane.b32.xlu0 %v3738, 64
        %v3825 = vpop.permute.xlu0 %3824
        %3826 = vrot.lane.b32.xlu0 %v3739, 64
        %v3827 = vpop.permute.xlu0 %3826
        %3828 = vrot.lane.b32.xlu0 %v3740, 64
        %v3829 = vpop.permute.xlu0 %3828
        %3830 = vrot.lane.b32.xlu0 %v3741, 64
        %v3831 = vpop.permute.xlu0 %3830
        %3832 = vrot.lane.b32.xlu0 %v3742, 64
        %v3833 = vpop.permute.xlu0 %3832
        %3834 = vrot.lane.b32.xlu0 %v3743, 64
        %v3835 = vpop.permute.xlu0 %3834
        %3836 = vrot.lane.b32.xlu0 %v3744, 64
        %v3837 = vpop.permute.xlu0 %3836
        %3838 = vrot.lane.b32.xlu0 %v3745, 64
        %v3839 = vpop.permute.xlu0 %3838
        %3840 = vrot.lane.b32.xlu0 %v3746, 64
        %v3841 = vpop.permute.xlu0 %3840
        %3842 = vrot.lane.b32.xlu0 %v3747, 64
        %v3843 = vpop.permute.xlu0 %3842
        %3876 = vst.msk [vmem:[#allocation3 + $0x8] sm:$0xff] %vm797, %v3781
        %3877 = vst.msk [vmem:[#allocation3 + $0x20] sm:$0xff] %vm797, %v3783
        %3878 = vst.msk [vmem:[#allocation3 + $0x38] sm:$0xff] %vm797, %v3785
        %3879 = vst.msk [vmem:[#allocation3 + $0x50] sm:$0xff] %vm797, %v3787
        %3880 = vst.msk [vmem:[#allocation3 + $0x68] sm:$0xff] %vm797, %v3789
        %3881 = vst.msk [vmem:[#allocation3 + $0x80] sm:$0xff] %vm797, %v3791
        %3882 = vst.msk [vmem:[#allocation3 + $0x98] sm:$0xff] %vm797, %v3793
        %3883 = vst.msk [vmem:[#allocation3 + $0xb0] sm:$0xff] %vm797, %v3795
        %3884 = vst.msk [vmem:[#allocation3 + $0xc8] sm:$0xff] %vm797, %v3797
        %3885 = vst.msk [vmem:[#allocation3 + $0xe0] sm:$0xff] %vm797, %v3799
        %3886 = vst.msk [vmem:[#allocation3 + $0xf8] sm:$0xff] %vm797, %v3801
        %3887 = vst.msk [vmem:[#allocation3 + $0x110] sm:$0xff] %vm797, %v3803
        %3888 = vst.msk [vmem:[#allocation3 + $0x128] sm:$0xff] %vm797, %v3805
        %3889 = vst.msk [vmem:[#allocation3 + $0x140] sm:$0xff] %vm797, %v3807
        %3890 = vst.msk [vmem:[#allocation3 + $0x158] sm:$0xff] %vm797, %v3809
        %3891 = vst.msk [vmem:[#allocation3 + $0x170] sm:$0xff] %vm797, %v3811
        %3892 = vst.msk [vmem:[#allocation3 + $0x188] sm:$0xff] %vm797, %v3813
        %3893 = vst.msk [vmem:[#allocation3 + $0x1a0] sm:$0xff] %vm797, %v3815
        %3894 = vst.msk [vmem:[#allocation3 + $0x1b8] sm:$0xff] %vm797, %v3817
        %3895 = vst.msk [vmem:[#allocation3 + $0x1d0] sm:$0xff] %vm797, %v3819
        %3896 = vst.msk [vmem:[#allocation3 + $0x1e8] sm:$0xff] %vm797, %v3821
        %3897 = vst.msk [vmem:[#allocation3 + $0x200] sm:$0xff] %vm797, %v3823
        %3898 = vst.msk [vmem:[#allocation3 + $0x218] sm:$0xff] %vm797, %v3825
        %3899 = vst.msk [vmem:[#allocation3 + $0x230] sm:$0xff] %vm797, %v3827
        %3900 = vst.msk [vmem:[#allocation3 + $0x248] sm:$0xff] %vm797, %v3829
        %3901 = vst.msk [vmem:[#allocation3 + $0x260] sm:$0xff] %vm797, %v3831
        %3902 = vst.msk [vmem:[#allocation3 + $0x278] sm:$0xff] %vm797, %v3833
        %3903 = vst.msk [vmem:[#allocation3 + $0x290] sm:$0xff] %vm797, %v3835
        %3904 = vst.msk [vmem:[#allocation3 + $0x2a8] sm:$0xff] %vm797, %v3837
        %3905 = vst.msk [vmem:[#allocation3 + $0x2c0] sm:$0xff] %vm797, %v3839
        %3906 = vst.msk [vmem:[#allocation3 + $0x2d8] sm:$0xff] %vm797, %v3841
        %3907 = vst.msk [vmem:[#allocation3 + $0x2f0] sm:$0xff] %vm797, %v3843
        %v3908 = vld [vmem:[%s1279 + $0x1] sm:$0xff]
        %v3909 = vld [vmem:[%s1279 + $0x9] sm:$0xff]
        %v3910 = vld [vmem:[%s1279 + $0x19] sm:$0xff]
        %v3911 = vld [vmem:[%s1279 + $0x21] sm:$0xff]
        %v3912 = vld [vmem:[%s1279 + $0x31] sm:$0xff]
        %v3913 = vld [vmem:[%s1279 + $0x39] sm:$0xff]
        %v3914 = vld [vmem:[%s1279 + $0x49] sm:$0xff]
        %v3915 = vld [vmem:[%s1279 + $0x51] sm:$0xff]
        %v3916 = vld [vmem:[%s1279 + $0x61] sm:$0xff]
        %v3917 = vld [vmem:[%s1279 + $0x69] sm:$0xff]
        %v3918 = vld [vmem:[%s1279 + $0x79] sm:$0xff]
        %v3919 = vld [vmem:[%s1279 + $0x81] sm:$0xff]
        %v3920 = vld [vmem:[%s1279 + $0x91] sm:$0xff]
        %v3921 = vld [vmem:[%s1279 + $0x99] sm:$0xff]
        %v3922 = vld [vmem:[%s1279 + $0xa9] sm:$0xff]
        %v3923 = vld [vmem:[%s1279 + $0xb1] sm:$0xff]
        %v3924 = vld [vmem:[%s1279 + $0xc1] sm:$0xff]
        %v3925 = vld [vmem:[%s1279 + $0xc9] sm:$0xff]
        %v3926 = vld [vmem:[%s1279 + $0xd9] sm:$0xff]
        %v3927 = vld [vmem:[%s1279 + $0xe1] sm:$0xff]
        %v3928 = vld [vmem:[%s1279 + $0xf1] sm:$0xff]
        %v3929 = vld [vmem:[%s1279 + $0xf9] sm:$0xff]
        %v3930 = vld [vmem:[%s1279 + $0x109] sm:$0xff]
        %v3931 = vld [vmem:[%s1279 + $0x111] sm:$0xff]
        %v3932 = vld [vmem:[%s1279 + $0x121] sm:$0xff]
        %v3933 = vld [vmem:[%s1279 + $0x129] sm:$0xff]
        %v3934 = vld [vmem:[%s1279 + $0x139] sm:$0xff]
        %v3935 = vld [vmem:[%s1279 + $0x141] sm:$0xff]
        %v3936 = vld [vmem:[%s1279 + $0x151] sm:$0xff]
        %v3937 = vld [vmem:[%s1279 + $0x159] sm:$0xff]
        %v3938 = vld [vmem:[%s1279 + $0x169] sm:$0xff]
        %v3939 = vld [vmem:[%s1279 + $0x171] sm:$0xff]
        %3972 = vrot.lane.b32.xlu0 %v3908, 96
        %v3973 = vpop.permute.xlu0 %3972
        %3974 = vrot.lane.b32.xlu0 %v3909, 96
        %v3975 = vpop.permute.xlu0 %3974
        %3976 = vrot.lane.b32.xlu0 %v3910, 96
        %v3977 = vpop.permute.xlu0 %3976
        %3978 = vrot.lane.b32.xlu0 %v3911, 96
        %v3979 = vpop.permute.xlu0 %3978
        %3980 = vrot.lane.b32.xlu0 %v3912, 96
        %v3981 = vpop.permute.xlu0 %3980
        %3982 = vrot.lane.b32.xlu0 %v3913, 96
        %v3983 = vpop.permute.xlu0 %3982
        %3984 = vrot.lane.b32.xlu0 %v3914, 96
        %v3985 = vpop.permute.xlu0 %3984
        %3986 = vrot.lane.b32.xlu0 %v3915, 96
        %v3987 = vpop.permute.xlu0 %3986
        %3988 = vrot.lane.b32.xlu0 %v3916, 96
        %v3989 = vpop.permute.xlu0 %3988
        %3990 = vrot.lane.b32.xlu0 %v3917, 96
        %v3991 = vpop.permute.xlu0 %3990
        %3992 = vrot.lane.b32.xlu0 %v3918, 96
        %v3993 = vpop.permute.xlu0 %3992
        %3994 = vrot.lane.b32.xlu0 %v3919, 96
        %v3995 = vpop.permute.xlu0 %3994
        %3996 = vrot.lane.b32.xlu0 %v3920, 96
        %v3997 = vpop.permute.xlu0 %3996
        %3998 = vrot.lane.b32.xlu0 %v3921, 96
        %v3999 = vpop.permute.xlu0 %3998
        %4000 = vrot.lane.b32.xlu0 %v3922, 96
        %v4001 = vpop.permute.xlu0 %4000
        %4002 = vrot.lane.b32.xlu0 %v3923, 96
        %v4003 = vpop.permute.xlu0 %4002
        %4004 = vrot.lane.b32.xlu0 %v3924, 96
        %v4005 = vpop.permute.xlu0 %4004
        %4006 = vrot.lane.b32.xlu0 %v3925, 96
        %v4007 = vpop.permute.xlu0 %4006
        %4008 = vrot.lane.b32.xlu0 %v3926, 96
        %v4009 = vpop.permute.xlu0 %4008
        %4010 = vrot.lane.b32.xlu0 %v3927, 96
        %v4011 = vpop.permute.xlu0 %4010
        %4012 = vrot.lane.b32.xlu0 %v3928, 96
        %v4013 = vpop.permute.xlu0 %4012
        %4014 = vrot.lane.b32.xlu0 %v3929, 96
        %v4015 = vpop.permute.xlu0 %4014
        %4016 = vrot.lane.b32.xlu0 %v3930, 96
        %v4017 = vpop.permute.xlu0 %4016
        %4018 = vrot.lane.b32.xlu0 %v3931, 96
        %v4019 = vpop.permute.xlu0 %4018
        %4020 = vrot.lane.b32.xlu0 %v3932, 96
        %v4021 = vpop.permute.xlu0 %4020
        %4022 = vrot.lane.b32.xlu0 %v3933, 96
        %v4023 = vpop.permute.xlu0 %4022
        %4024 = vrot.lane.b32.xlu0 %v3934, 96
        %v4025 = vpop.permute.xlu0 %4024
        %4026 = vrot.lane.b32.xlu0 %v3935, 96
        %v4027 = vpop.permute.xlu0 %4026
        %4028 = vrot.lane.b32.xlu0 %v3936, 96
        %v4029 = vpop.permute.xlu0 %4028
        %4030 = vrot.lane.b32.xlu0 %v3937, 96
        %v4031 = vpop.permute.xlu0 %4030
        %4032 = vrot.lane.b32.xlu0 %v3938, 96
        %v4033 = vpop.permute.xlu0 %4032
        %4034 = vrot.lane.b32.xlu0 %v3939, 96
        %v4035 = vpop.permute.xlu0 %4034
        %4068 = vst.msk [vmem:[#allocation3 + $0x8] sm:$0xff] %vm990, %v3973
        %4069 = vst.msk [vmem:[#allocation3 + $0x20] sm:$0xff] %vm990, %v3975
        %4070 = vst.msk [vmem:[#allocation3 + $0x38] sm:$0xff] %vm990, %v3977
        %4071 = vst.msk [vmem:[#allocation3 + $0x50] sm:$0xff] %vm990, %v3979
        %4072 = vst.msk [vmem:[#allocation3 + $0x68] sm:$0xff] %vm990, %v3981
        %4073 = vst.msk [vmem:[#allocation3 + $0x80] sm:$0xff] %vm990, %v3983
        %4074 = vst.msk [vmem:[#allocation3 + $0x98] sm:$0xff] %vm990, %v3985
        %4075 = vst.msk [vmem:[#allocation3 + $0xb0] sm:$0xff] %vm990, %v3987
        %4076 = vst.msk [vmem:[#allocation3 + $0xc8] sm:$0xff] %vm990, %v3989
        %4077 = vst.msk [vmem:[#allocation3 + $0xe0] sm:$0xff] %vm990, %v3991
        %4078 = vst.msk [vmem:[#allocation3 + $0xf8] sm:$0xff] %vm990, %v3993
        %4079 = vst.msk [vmem:[#allocation3 + $0x110] sm:$0xff] %vm990, %v3995
        %4080 = vst.msk [vmem:[#allocation3 + $0x128] sm:$0xff] %vm990, %v3997
        %4081 = vst.msk [vmem:[#allocation3 + $0x140] sm:$0xff] %vm990, %v3999
        %4082 = vst.msk [vmem:[#allocation3 + $0x158] sm:$0xff] %vm990, %v4001
        %4083 = vst.msk [vmem:[#allocation3 + $0x170] sm:$0xff] %vm990, %v4003
        %4084 = vst.msk [vmem:[#allocation3 + $0x188] sm:$0xff] %vm990, %v4005
        %4085 = vst.msk [vmem:[#allocation3 + $0x1a0] sm:$0xff] %vm990, %v4007
        %4086 = vst.msk [vmem:[#allocation3 + $0x1b8] sm:$0xff] %vm990, %v4009
        %4087 = vst.msk [vmem:[#allocation3 + $0x1d0] sm:$0xff] %vm990, %v4011
        %4088 = vst.msk [vmem:[#allocation3 + $0x1e8] sm:$0xff] %vm990, %v4013
        %4089 = vst.msk [vmem:[#allocation3 + $0x200] sm:$0xff] %vm990, %v4015
        %4090 = vst.msk [vmem:[#allocation3 + $0x218] sm:$0xff] %vm990, %v4017
        %4091 = vst.msk [vmem:[#allocation3 + $0x230] sm:$0xff] %vm990, %v4019
        %4092 = vst.msk [vmem:[#allocation3 + $0x248] sm:$0xff] %vm990, %v4021
        %4093 = vst.msk [vmem:[#allocation3 + $0x260] sm:$0xff] %vm990, %v4023
        %4094 = vst.msk [vmem:[#allocation3 + $0x278] sm:$0xff] %vm990, %v4025
        %4095 = vst.msk [vmem:[#allocation3 + $0x290] sm:$0xff] %vm990, %v4027
        %4096 = vst.msk [vmem:[#allocation3 + $0x2a8] sm:$0xff] %vm990, %v4029
        %4097 = vst.msk [vmem:[#allocation3 + $0x2c0] sm:$0xff] %vm990, %v4031
        %4098 = vst.msk [vmem:[#allocation3 + $0x2d8] sm:$0xff] %vm990, %v4033
        %4099 = vst.msk [vmem:[#allocation3 + $0x2f0] sm:$0xff] %vm990, %v4035
        %v4100 = vld [vmem:[%s1279 + $0x2] sm:$0xff]
        %v4101 = vld [vmem:[%s1279 + $0xa] sm:$0xff]
        %v4102 = vld [vmem:[%s1279 + $0x1a] sm:$0xff]
        %v4103 = vld [vmem:[%s1279 + $0x22] sm:$0xff]
        %v4104 = vld [vmem:[%s1279 + $0x32] sm:$0xff]
        %v4105 = vld [vmem:[%s1279 + $0x3a] sm:$0xff]
        %v4106 = vld [vmem:[%s1279 + $0x4a] sm:$0xff]
        %v4107 = vld [vmem:[%s1279 + $0x52] sm:$0xff]
        %v4108 = vld [vmem:[%s1279 + $0x62] sm:$0xff]
        %v4109 = vld [vmem:[%s1279 + $0x6a] sm:$0xff]
        %v4110 = vld [vmem:[%s1279 + $0x7a] sm:$0xff]
        %v4111 = vld [vmem:[%s1279 + $0x82] sm:$0xff]
        %v4112 = vld [vmem:[%s1279 + $0x92] sm:$0xff]
        %v4113 = vld [vmem:[%s1279 + $0x9a] sm:$0xff]
        %v4114 = vld [vmem:[%s1279 + $0xaa] sm:$0xff]
        %v4115 = vld [vmem:[%s1279 + $0xb2] sm:$0xff]
        %v4116 = vld [vmem:[%s1279 + $0xc2] sm:$0xff]
        %v4117 = vld [vmem:[%s1279 + $0xca] sm:$0xff]
        %v4118 = vld [vmem:[%s1279 + $0xda] sm:$0xff]
        %v4119 = vld [vmem:[%s1279 + $0xe2] sm:$0xff]
        %v4120 = vld [vmem:[%s1279 + $0xf2] sm:$0xff]
        %v4121 = vld [vmem:[%s1279 + $0xfa] sm:$0xff]
        %v4122 = vld [vmem:[%s1279 + $0x10a] sm:$0xff]
        %v4123 = vld [vmem:[%s1279 + $0x112] sm:$0xff]
        %v4124 = vld [vmem:[%s1279 + $0x122] sm:$0xff]
        %v4125 = vld [vmem:[%s1279 + $0x12a] sm:$0xff]
        %v4126 = vld [vmem:[%s1279 + $0x13a] sm:$0xff]
        %v4127 = vld [vmem:[%s1279 + $0x142] sm:$0xff]
        %v4128 = vld [vmem:[%s1279 + $0x152] sm:$0xff]
        %v4129 = vld [vmem:[%s1279 + $0x15a] sm:$0xff]
        %v4130 = vld [vmem:[%s1279 + $0x16a] sm:$0xff]
        %v4131 = vld [vmem:[%s1279 + $0x172] sm:$0xff]
        %4132 = vst.msk [vmem:[#allocation3 + $0x10] sm:$0xff] %vm259, %v4100
        %4133 = vst.msk [vmem:[#allocation3 + $0x28] sm:$0xff] %vm259, %v4101
        %4134 = vst.msk [vmem:[#allocation3 + $0x40] sm:$0xff] %vm259, %v4102
        %4135 = vst.msk [vmem:[#allocation3 + $0x58] sm:$0xff] %vm259, %v4103
        %4136 = vst.msk [vmem:[#allocation3 + $0x70] sm:$0xff] %vm259, %v4104
        %4137 = vst.msk [vmem:[#allocation3 + $0x88] sm:$0xff] %vm259, %v4105
        %4138 = vst.msk [vmem:[#allocation3 + $0xa0] sm:$0xff] %vm259, %v4106
        %4139 = vst.msk [vmem:[#allocation3 + $0xb8] sm:$0xff] %vm259, %v4107
        %4140 = vst.msk [vmem:[#allocation3 + $0xd0] sm:$0xff] %vm259, %v4108
        %4141 = vst.msk [vmem:[#allocation3 + $0xe8] sm:$0xff] %vm259, %v4109
        %4142 = vst.msk [vmem:[#allocation3 + $0x100] sm:$0xff] %vm259, %v4110
        %4143 = vst.msk [vmem:[#allocation3 + $0x118] sm:$0xff] %vm259, %v4111
        %4144 = vst.msk [vmem:[#allocation3 + $0x130] sm:$0xff] %vm259, %v4112
        %4145 = vst.msk [vmem:[#allocation3 + $0x148] sm:$0xff] %vm259, %v4113
        %4146 = vst.msk [vmem:[#allocation3 + $0x160] sm:$0xff] %vm259, %v4114
        %4147 = vst.msk [vmem:[#allocation3 + $0x178] sm:$0xff] %vm259, %v4115
        %4148 = vst.msk [vmem:[#allocation3 + $0x190] sm:$0xff] %vm259, %v4116
        %4149 = vst.msk [vmem:[#allocation3 + $0x1a8] sm:$0xff] %vm259, %v4117
        %4150 = vst.msk [vmem:[#allocation3 + $0x1c0] sm:$0xff] %vm259, %v4118
        %4151 = vst.msk [vmem:[#allocation3 + $0x1d8] sm:$0xff] %vm259, %v4119
        %4152 = vst.msk [vmem:[#allocation3 + $0x1f0] sm:$0xff] %vm259, %v4120
        %4153 = vst.msk [vmem:[#allocation3 + $0x208] sm:$0xff] %vm259, %v4121
        %4154 = vst.msk [vmem:[#allocation3 + $0x220] sm:$0xff] %vm259, %v4122
        %4155 = vst.msk [vmem:[#allocation3 + $0x238] sm:$0xff] %vm259, %v4123
        %4156 = vst.msk [vmem:[#allocation3 + $0x250] sm:$0xff] %vm259, %v4124
        %4157 = vst.msk [vmem:[#allocation3 + $0x268] sm:$0xff] %vm259, %v4125
        %4158 = vst.msk [vmem:[#allocation3 + $0x280] sm:$0xff] %vm259, %v4126
        %4159 = vst.msk [vmem:[#allocation3 + $0x298] sm:$0xff] %vm259, %v4127
        %4160 = vst.msk [vmem:[#allocation3 + $0x2b0] sm:$0xff] %vm259, %v4128
        %4161 = vst.msk [vmem:[#allocation3 + $0x2c8] sm:$0xff] %vm259, %v4129
        %4162 = vst.msk [vmem:[#allocation3 + $0x2e0] sm:$0xff] %vm259, %v4130
        %4163 = vst.msk [vmem:[#allocation3 + $0x2f8] sm:$0xff] %vm259, %v4131
        %v4164 = vld [vmem:[#allocation3] sm:$0xff]
        %v4165 = vld [vmem:[#allocation3 + $0x8] sm:$0xff]
        %v4166 = vld [vmem:[#allocation3 + $0x10] sm:$0xff]
        %v4167 = vld [vmem:[#allocation3 + $0x18] sm:$0xff]
        %v4168 = vld [vmem:[#allocation3 + $0x20] sm:$0xff]
        %v4169 = vld [vmem:[#allocation3 + $0x28] sm:$0xff]
        %v4170 = vld [vmem:[#allocation3 + $0x30] sm:$0xff]
        %v4171 = vld [vmem:[#allocation3 + $0x38] sm:$0xff]
        %v4172 = vld [vmem:[#allocation3 + $0x40] sm:$0xff]
        %v4173 = vld [vmem:[#allocation3 + $0x48] sm:$0xff]
        %v4174 = vld [vmem:[#allocation3 + $0x50] sm:$0xff]
        %v4175 = vld [vmem:[#allocation3 + $0x58] sm:$0xff]
        %v4176 = vld [vmem:[#allocation3 + $0x60] sm:$0xff]
        %v4177 = vld [vmem:[#allocation3 + $0x68] sm:$0xff]
        %v4178 = vld [vmem:[#allocation3 + $0x70] sm:$0xff]
        %v4179 = vld [vmem:[#allocation3 + $0x78] sm:$0xff]
        %v4180 = vld [vmem:[#allocation3 + $0x80] sm:$0xff]
        %v4181 = vld [vmem:[#allocation3 + $0x88] sm:$0xff]
        %v4182 = vld [vmem:[#allocation3 + $0x90] sm:$0xff]
        %v4183 = vld [vmem:[#allocation3 + $0x98] sm:$0xff]
        %v4184 = vld [vmem:[#allocation3 + $0xa0] sm:$0xff]
        %v4185 = vld [vmem:[#allocation3 + $0xa8] sm:$0xff]
        %v4186 = vld [vmem:[#allocation3 + $0xb0] sm:$0xff]
        %v4187 = vld [vmem:[#allocation3 + $0xb8] sm:$0xff]
        %v4188 = vld [vmem:[#allocation3 + $0xc0] sm:$0xff]
        %v4189 = vld [vmem:[#allocation3 + $0xc8] sm:$0xff]
        %v4190 = vld [vmem:[#allocation3 + $0xd0] sm:$0xff]
        %v4191 = vld [vmem:[#allocation3 + $0xd8] sm:$0xff]
        %v4192 = vld [vmem:[#allocation3 + $0xe0] sm:$0xff]
        %v4193 = vld [vmem:[#allocation3 + $0xe8] sm:$0xff]
        %v4194 = vld [vmem:[#allocation3 + $0xf0] sm:$0xff]
        %v4195 = vld [vmem:[#allocation3 + $0xf8] sm:$0xff]
        %v4196 = vld [vmem:[#allocation3 + $0x100] sm:$0xff]
        %v4197 = vld [vmem:[#allocation3 + $0x108] sm:$0xff]
        %v4198 = vld [vmem:[#allocation3 + $0x110] sm:$0xff]
        %v4199 = vld [vmem:[#allocation3 + $0x118] sm:$0xff]
        %v4200 = vld [vmem:[#allocation3 + $0x120] sm:$0xff]
        %v4201 = vld [vmem:[#allocation3 + $0x128] sm:$0xff]
        %v4202 = vld [vmem:[#allocation3 + $0x130] sm:$0xff]
        %v4203 = vld [vmem:[#allocation3 + $0x138] sm:$0xff]
        %v4204 = vld [vmem:[#allocation3 + $0x140] sm:$0xff]
        %v4205 = vld [vmem:[#allocation3 + $0x148] sm:$0xff]
        %v4206 = vld [vmem:[#allocation3 + $0x150] sm:$0xff]
        %v4207 = vld [vmem:[#allocation3 + $0x158] sm:$0xff]
        %v4208 = vld [vmem:[#allocation3 + $0x160] sm:$0xff]
        %v4209 = vld [vmem:[#allocation3 + $0x168] sm:$0xff]
        %v4210 = vld [vmem:[#allocation3 + $0x170] sm:$0xff]
        %v4211 = vld [vmem:[#allocation3 + $0x178] sm:$0xff]
        %v4212 = vld [vmem:[#allocation3 + $0x180] sm:$0xff]
        %v4213 = vld [vmem:[#allocation3 + $0x188] sm:$0xff]
        %v4214 = vld [vmem:[#allocation3 + $0x190] sm:$0xff]
        %v4215 = vld [vmem:[#allocation3 + $0x198] sm:$0xff]
        %v4216 = vld [vmem:[#allocation3 + $0x1a0] sm:$0xff]
        %v4217 = vld [vmem:[#allocation3 + $0x1a8] sm:$0xff]
        %v4218 = vld [vmem:[#allocation3 + $0x1b0] sm:$0xff]
        %v4219 = vld [vmem:[#allocation3 + $0x1b8] sm:$0xff]
        %v4220 = vld [vmem:[#allocation3 + $0x1c0] sm:$0xff]
        %v4221 = vld [vmem:[#allocation3 + $0x1c8] sm:$0xff]
        %v4222 = vld [vmem:[#allocation3 + $0x1d0] sm:$0xff]
        %v4223 = vld [vmem:[#allocation3 + $0x1d8] sm:$0xff]
        %v4224 = vld [vmem:[#allocation3 + $0x1e0] sm:$0xff]
        %v4225 = vld [vmem:[#allocation3 + $0x1e8] sm:$0xff]
        %v4226 = vld [vmem:[#allocation3 + $0x1f0] sm:$0xff]
        %v4227 = vld [vmem:[#allocation3 + $0x1f8] sm:$0xff]
        %v4228 = vld [vmem:[#allocation3 + $0x200] sm:$0xff]
        %v4229 = vld [vmem:[#allocation3 + $0x208] sm:$0xff]
        %v4230 = vld [vmem:[#allocation3 + $0x210] sm:$0xff]
        %v4231 = vld [vmem:[#allocation3 + $0x218] sm:$0xff]
        %v4232 = vld [vmem:[#allocation3 + $0x220] sm:$0xff]
        %v4233 = vld [vmem:[#allocation3 + $0x228] sm:$0xff]
        %v4234 = vld [vmem:[#allocation3 + $0x230] sm:$0xff]
        %v4235 = vld [vmem:[#allocation3 + $0x238] sm:$0xff]
        %v4236 = vld [vmem:[#allocation3 + $0x240] sm:$0xff]
        %v4237 = vld [vmem:[#allocation3 + $0x248] sm:$0xff]
        %v4238 = vld [vmem:[#allocation3 + $0x250] sm:$0xff]
        %v4239 = vld [vmem:[#allocation3 + $0x258] sm:$0xff]
        %v4240 = vld [vmem:[#allocation3 + $0x260] sm:$0xff]
        %v4241 = vld [vmem:[#allocation3 + $0x268] sm:$0xff]
        %v4242 = vld [vmem:[#allocation3 + $0x270] sm:$0xff]
        %v4243 = vld [vmem:[#allocation3 + $0x278] sm:$0xff]
        %v4244 = vld [vmem:[#allocation3 + $0x280] sm:$0xff]
        %v4245 = vld [vmem:[#allocation3 + $0x288] sm:$0xff]
        %v4246 = vld [vmem:[#allocation3 + $0x290] sm:$0xff]
        %v4247 = vld [vmem:[#allocation3 + $0x298] sm:$0xff]
        %v4248 = vld [vmem:[#allocation3 + $0x2a0] sm:$0xff]
        %v4249 = vld [vmem:[#allocation3 + $0x2a8] sm:$0xff]
        %v4250 = vld [vmem:[#allocation3 + $0x2b0] sm:$0xff]
        %v4251 = vld [vmem:[#allocation3 + $0x2b8] sm:$0xff]
        %v4252 = vld [vmem:[#allocation3 + $0x2c0] sm:$0xff]
        %v4253 = vld [vmem:[#allocation3 + $0x2c8] sm:$0xff]
        %v4254 = vld [vmem:[#allocation3 + $0x2d0] sm:$0xff]
        %v4255 = vld [vmem:[#allocation3 + $0x2d8] sm:$0xff]
        %v4256 = vld [vmem:[#allocation3 + $0x2e0] sm:$0xff]
        %v4257 = vld [vmem:[#allocation3 + $0x2e8] sm:$0xff]
        %v4258 = vld [vmem:[#allocation3 + $0x2f0] sm:$0xff]
        %v4259 = vld [vmem:[#allocation3 + $0x2f8] sm:$0xff]
        %v4261 = vsel %vm259, %v4166, 0
        %v4264 = vsel %vm259, %v4169, 0
        %v4267 = vsel %vm259, %v4172, 0
        %v4270 = vsel %vm259, %v4175, 0
        %v4273 = vsel %vm259, %v4178, 0
        %v4276 = vsel %vm259, %v4181, 0
        %v4279 = vsel %vm259, %v4184, 0
        %v4282 = vsel %vm259, %v4187, 0
        %v4285 = vsel %vm259, %v4190, 0
        %v4288 = vsel %vm259, %v4193, 0
        %v4291 = vsel %vm259, %v4196, 0
        %v4294 = vsel %vm259, %v4199, 0
        %v4297 = vsel %vm259, %v4202, 0
        %v4300 = vsel %vm259, %v4205, 0
        %v4303 = vsel %vm259, %v4208, 0
        %v4306 = vsel %vm259, %v4211, 0
        %v4309 = vsel %vm259, %v4214, 0
        %v4312 = vsel %vm259, %v4217, 0
        %v4315 = vsel %vm259, %v4220, 0
        %v4318 = vsel %vm259, %v4223, 0
        %v4321 = vsel %vm259, %v4226, 0
        %v4324 = vsel %vm259, %v4229, 0
        %v4327 = vsel %vm259, %v4232, 0
        %v4330 = vsel %vm259, %v4235, 0
        %v4333 = vsel %vm259, %v4238, 0
        %v4336 = vsel %vm259, %v4241, 0
        %v4339 = vsel %vm259, %v4244, 0
        %v4342 = vsel %vm259, %v4247, 0
        %v4345 = vsel %vm259, %v4250, 0
        %v4348 = vsel %vm259, %v4253, 0
        %v4351 = vsel %vm259, %v4256, 0
        %v4354 = vsel %vm259, %v4259, 0
        %4356 = vmatprep.subr.mxu0 0.0
        %4357 = vmatpush1.msra.mxu0 %v189
        %4358 = vmatprep.subr.mxu0 0.0
        %4359 = vmatpush1.msra.mxu0 %v190
        %4360 = vmatprep.subr.mxu0 0.0
        %4361 = vmatpush1.msra.mxu0 %v191
        %4362 = vmatprep.subr.mxu0 0.0
        %4363 = vmatpush1.msra.mxu0 %v192
        %4364 = vmatprep.subr.mxu0 0.0
        %4365 = vmatpush1.msra.mxu0 %v193
        %4366 = vmatprep.subr.mxu0 0.0
        %4367 = vmatpush1.msra.mxu0 %v194
        %4368 = vmatprep.subr.mxu0 0.0
        %4369 = vmatpush1.msra.mxu0 %v195
        %4370 = vmatprep.subr.mxu0 0.0
        %4371 = vmatpush1.msra.mxu0 %v196
        %4372 = vmatprep.subr.mxu0 0.0
        %4373 = vmatpush1.msra.mxu0 %v197
        %4374 = vmatprep.subr.mxu0 0.0
        %4375 = vmatpush1.msra.mxu0 %v198
        %4376 = vmatprep.subr.mxu0 0.0
        %4377 = vmatpush1.msra.mxu0 %v199
        %4378 = vmatprep.subr.mxu0 0.0
        %4379 = vmatpush1.msra.mxu0 %v200
        %4380 = vmatprep.subr.mxu0 0.0
        %4381 = vmatpush1.msra.mxu0 %v201
        %4382 = vmatprep.subr.mxu0 0.0
        %4383 = vmatpush1.msra.mxu0 %v202
        %4384 = vmatprep.subr.mxu0 0.0
        %4385 = vmatpush1.msra.mxu0 %v203
        %4386 = vmatprep.subr.mxu0 0.0
        %4387 = vmatpush1.msra.mxu0 %v204
        %4388 = vmatprep.subr.mxu0 0.0
        %4389 = vmatpush1.msra.mxu0 %v205
        %4390 = vmatprep.subr.mxu0 0.0
        %4391 = vmatpush1.msra.mxu0 %v206
        %4392 = vmatprep.subr.mxu0 0.0
        %4393 = vmatpush1.msra.mxu0 %v207
        %4394 = vmatprep.subr.mxu0 0.0
        %4395 = vmatpush1.msra.mxu0 %v208
        %4396 = vmatprep.subr.mxu0 0.0
        %4397 = vmatpush1.msra.mxu0 %v209
        %4398 = vmatprep.subr.mxu0 0.0
        %4399 = vmatpush1.msra.mxu0 %v210
        %4400 = vmatprep.subr.mxu0 0.0
        %4401 = vmatpush1.msra.mxu0 %v211
        %4402 = vmatprep.subr.mxu0 0.0
        %4403 = vmatpush1.msra.mxu0 %v212
        %4404 = vmatprep.subr.mxu0 0.0
        %4405 = vmatpush1.msra.mxu0 %v213
        %4406 = vmatprep.subr.mxu0 0.0
        %4407 = vmatpush1.msra.mxu0 %v214
        %4408 = vmatprep.subr.mxu0 0.0
        %4409 = vmatpush1.msra.mxu0 %v215
        %4410 = vmatprep.subr.mxu0 0.0
        %4411 = vmatpush1.msra.mxu0 %v216
        %4412 = vmatprep.subr.mxu0 0.0
        %4413 = vmatpush1.msra.mxu0 %v217
        %4414 = vmatprep.subr.mxu0 0.0
        %4415 = vmatpush1.msra.mxu0 %v218
        %4416 = vmatprep.subr.mxu0 0.0
        %4417 = vmatpush1.msra.mxu0 %v219
        %4418 = vmatprep.subr.mxu0 0.0
        %4419 = vmatpush1.msra.mxu0 %v220
        %4420 = vmatprep.mubr.f32.mxu0 %v4165
        %4421 = vmatmul.mubr.f32.gmra.mrb[0].mxu0 %v4164
        %v4422 = vpop.f32.mrb[0].mxu0
        %v4423 = vadd.f32 0.0, %v4422
        %v4424 = vpop.f32.mrb[0].mxu0
        %4425 = vmatprep.mubr.f32.mxu0 %v4168
        %4426 = vmatmul.mubr.f32.gmra.mrb[0].mxu0 %v4167
        %v4427 = vpop.f32.mrb[0].mxu0
        %v4428 = vadd.f32 0.0, %v4427
        %v4429 = vpop.f32.mrb[0].mxu0
        %4430 = vmatprep.mubr.f32.mxu0 %v4171
        %4431 = vmatmul.mubr.f32.gmra.mrb[0].mxu0 %v4170
        %v4432 = vpop.f32.mrb[0].mxu0
        %v4433 = vadd.f32 0.0, %v4432
        %v4434 = vpop.f32.mrb[0].mxu0
        %4435 = vmatprep.mubr.f32.mxu0 %v4174
        %4436 = vmatmul.mubr.f32.gmra.mrb[0].mxu0 %v4173
        %v4437 = vpop.f32.mrb[0].mxu0
        %v4438 = vadd.f32 0.0, %v4437
        %v4439 = vpop.f32.mrb[0].mxu0
        %4440 = vmatprep.mubr.f32.mxu0 %v4177
        %4441 = vmatmul.mubr.f32.gmra.mrb[0].mxu0 %v4176
        %v4442 = vpop.f32.mrb[0].mxu0
        %v4443 = vadd.f32 0.0, %v4442
        %v4444 = vpop.f32.mrb[0].mxu0
        %4445 = vmatprep.mubr.f32.mxu0 %v4180
        %4446 = vmatmul.mubr.f32.gmra.mrb[0].mxu0 %v4179
        %v4447 = vpop.f32.mrb[0].mxu0
        %v4448 = vadd.f32 0.0, %v4447
        %v4449 = vpop.f32.mrb[0].mxu0
        %4450 = vmatprep.mubr.f32.mxu0 %v4183
        %4451 = vmatmul.mubr.f32.gmra.mrb[0].mxu0 %v4182
        %v4452 = vpop.f32.mrb[0].mxu0
        %v4453 = vadd.f32 0.0, %v4452
        %v4454 = vpop.f32.mrb[0].mxu0
        %4455 = vmatprep.mubr.f32.mxu0 %v4186
        %4456 = vmatmul.mubr.f32.gmra.mrb[0].mxu0 %v4185
        %v4457 = vpop.f32.mrb[0].mxu0
        %v4458 = vadd.f32 0.0, %v4457
        %v4459 = vpop.f32.mrb[0].mxu0
        %4460 = vmatprep.mubr.f32.mxu0 %v4189
        %4461 = vmatmul.mubr.f32.gmra.mrb[0].mxu0 %v4188
        %v4462 = vpop.f32.mrb[0].mxu0
        %v4463 = vadd.f32 0.0, %v4462
        %v4464 = vpop.f32.mrb[0].mxu0
        %4465 = vmatprep.mubr.f32.mxu0 %v4192
        %4466 = vmatmul.mubr.f32.gmra.mrb[0].mxu0 %v4191
        %v4467 = vpop.f32.mrb[0].mxu0
        %v4468 = vadd.f32 0.0, %v4467
        %v4469 = vpop.f32.mrb[0].mxu0
        %4470 = vmatprep.mubr.f32.mxu0 %v4195
        %4471 = vmatmul.mubr.f32.gmra.mrb[0].mxu0 %v4194
        %v4472 = vpop.f32.mrb[0].mxu0
        %v4473 = vadd.f32 0.0, %v4472
        %v4474 = vpop.f32.mrb[0].mxu0
        %4475 = vmatprep.mubr.f32.mxu0 %v4198
        %4476 = vmatmul.mubr.f32.gmra.mrb[0].mxu0 %v4197
        %v4477 = vpop.f32.mrb[0].mxu0
        %v4478 = vadd.f32 0.0, %v4477
        %v4479 = vpop.f32.mrb[0].mxu0
        %4480 = vmatprep.mubr.f32.mxu0 %v4201
        %4481 = vmatmul.mubr.f32.gmra.mrb[0].mxu0 %v4200
        %v4482 = vpop.f32.mrb[0].mxu0
        %v4483 = vadd.f32 0.0, %v4482
        %v4484 = vpop.f32.mrb[0].mxu0
        %4485 = vmatprep.mubr.f32.mxu0 %v4204
        %4486 = vmatmul.mubr.f32.gmra.mrb[0].mxu0 %v4203
        %v4487 = vpop.f32.mrb[0].mxu0
        %v4488 = vadd.f32 0.0, %v4487
        %v4489 = vpop.f32.mrb[0].mxu0
        %4490 = vmatprep.mubr.f32.mxu0 %v4207
        %4491 = vmatmul.mubr.f32.gmra.mrb[0].mxu0 %v4206
        %v4492 = vpop.f32.mrb[0].mxu0
        %v4493 = vadd.f32 0.0, %v4492
        %v4494 = vpop.f32.mrb[0].mxu0
        %4495 = vmatprep.mubr.f32.mxu0 %v4210
        %4496 = vmatmul.mubr.f32.gmra.mrb[0].mxu0 %v4209
        %v4497 = vpop.f32.mrb[0].mxu0
        %v4498 = vadd.f32 0.0, %v4497
        %v4499 = vpop.f32.mrb[0].mxu0
        %4500 = vmatprep.mubr.f32.mxu0 %v4213
        %4501 = vmatmul.mubr.f32.gmra.mrb[0].mxu0 %v4212
        %v4502 = vpop.f32.mrb[0].mxu0
        %v4503 = vadd.f32 0.0, %v4502
        %v4504 = vpop.f32.mrb[0].mxu0
        %4505 = vmatprep.mubr.f32.mxu0 %v4216
        %4506 = vmatmul.mubr.f32.gmra.mrb[0].mxu0 %v4215
        %v4507 = vpop.f32.mrb[0].mxu0
        %v4508 = vadd.f32 0.0, %v4507
        %v4509 = vpop.f32.mrb[0].mxu0
        %4510 = vmatprep.mubr.f32.mxu0 %v4219
        %4511 = vmatmul.mubr.f32.gmra.mrb[0].mxu0 %v4218
        %v4512 = vpop.f32.mrb[0].mxu0
        %v4513 = vadd.f32 0.0, %v4512
        %v4514 = vpop.f32.mrb[0].mxu0
        %4515 = vmatprep.mubr.f32.mxu0 %v4222
        %4516 = vmatmul.mubr.f32.gmra.mrb[0].mxu0 %v4221
        %v4517 = vpop.f32.mrb[0].mxu0
        %v4518 = vadd.f32 0.0, %v4517
        %v4519 = vpop.f32.mrb[0].mxu0
        %4520 = vmatprep.mubr.f32.mxu0 %v4225
        %4521 = vmatmul.mubr.f32.gmra.mrb[0].mxu0 %v4224
        %v4522 = vpop.f32.mrb[0].mxu0
        %v4523 = vadd.f32 0.0, %v4522
        %v4524 = vpop.f32.mrb[0].mxu0
        %4525 = vmatprep.mubr.f32.mxu0 %v4228
        %4526 = vmatmul.mubr.f32.gmra.mrb[0].mxu0 %v4227
        %v4527 = vpop.f32.mrb[0].mxu0
        %v4528 = vadd.f32 0.0, %v4527
        %v4529 = vpop.f32.mrb[0].mxu0
        %4530 = vmatprep.mubr.f32.mxu0 %v4231
        %4531 = vmatmul.mubr.f32.gmra.mrb[0].mxu0 %v4230
        %v4532 = vpop.f32.mrb[0].mxu0
        %v4533 = vadd.f32 0.0, %v4532
        %v4534 = vpop.f32.mrb[0].mxu0
        %4535 = vmatprep.mubr.f32.mxu0 %v4234
        %4536 = vmatmul.mubr.f32.gmra.mrb[0].mxu0 %v4233
        %v4537 = vpop.f32.mrb[0].mxu0
        %v4538 = vadd.f32 0.0, %v4537
        %v4539 = vpop.f32.mrb[0].mxu0
        %4540 = vmatprep.mubr.f32.mxu0 %v4237
        %4541 = vmatmul.mubr.f32.gmra.mrb[0].mxu0 %v4236
        %v4542 = vpop.f32.mrb[0].mxu0
        %v4543 = vadd.f32 0.0, %v4542
        %v4544 = vpop.f32.mrb[0].mxu0
        %4545 = vmatprep.mubr.f32.mxu0 %v4240
        %4546 = vmatmul.mubr.f32.gmra.mrb[0].mxu0 %v4239
        %v4547 = vpop.f32.mrb[0].mxu0
        %v4548 = vadd.f32 0.0, %v4547
        %v4549 = vpop.f32.mrb[0].mxu0
        %4550 = vmatprep.mubr.f32.mxu0 %v4243
        %4551 = vmatmul.mubr.f32.gmra.mrb[0].mxu0 %v4242
        %v4552 = vpop.f32.mrb[0].mxu0
        %v4553 = vadd.f32 0.0, %v4552
        %v4554 = vpop.f32.mrb[0].mxu0
        %4555 = vmatprep.mubr.f32.mxu0 %v4246
        %4556 = vmatmul.mubr.f32.gmra.mrb[0].mxu0 %v4245
        %v4557 = vpop.f32.mrb[0].mxu0
        %v4558 = vadd.f32 0.0, %v4557
        %v4559 = vpop.f32.mrb[0].mxu0
        %4560 = vmatprep.mubr.f32.mxu0 %v4249
        %4561 = vmatmul.mubr.f32.gmra.mrb[0].mxu0 %v4248
        %v4562 = vpop.f32.mrb[0].mxu0
        %v4563 = vadd.f32 0.0, %v4562
        %v4564 = vpop.f32.mrb[0].mxu0
        %4565 = vmatprep.mubr.f32.mxu0 %v4252
        %4566 = vmatmul.mubr.f32.gmra.mrb[0].mxu0 %v4251
        %v4567 = vpop.f32.mrb[0].mxu0
        %v4568 = vadd.f32 0.0, %v4567
        %v4569 = vpop.f32.mrb[0].mxu0
        %4570 = vmatprep.mubr.f32.mxu0 %v4255
        %4571 = vmatmul.mubr.f32.gmra.mrb[0].mxu0 %v4254
        %v4572 = vpop.f32.mrb[0].mxu0
        %v4573 = vadd.f32 0.0, %v4572
        %v4574 = vpop.f32.mrb[0].mxu0
        %4575 = vmatprep.mubr.f32.mxu0 %v4258
        %4576 = vmatmul.mubr.f32.gmra.mrb[0].mxu0 %v4257
        %v4577 = vpop.f32.mrb[0].mxu0
        %v4578 = vadd.f32 0.0, %v4577
        %v4579 = vpop.f32.mrb[0].mxu0
        %4580 = vdwg.mxu0
        %4581 = vmatprep.subr.mxu0 0.0
        %4582 = vmatpush1.msra.mxu0 %v221
        %4583 = vmatprep.subr.mxu0 0.0
        %4584 = vmatpush1.msra.mxu0 %v222
        %4585 = vmatprep.subr.mxu0 0.0
        %4586 = vmatpush1.msra.mxu0 %v223
        %4587 = vmatprep.subr.mxu0 0.0
        %4588 = vmatpush1.msra.mxu0 %v224
        %4589 = vmatprep.subr.mxu0 0.0
        %4590 = vmatpush1.msra.mxu0 0.0
        %4591 = vmatprep.subr.mxu0 0.0
        %4592 = vmatpush1.msra.mxu0 0.0
        %4593 = vmatprep.subr.mxu0 0.0
        %4594 = vmatpush1.msra.mxu0 0.0
        %4595 = vmatprep.subr.mxu0 0.0
        %4596 = vmatpush1.msra.mxu0 0.0
        %4597 = vmatprep.subr.mxu0 0.0
        %4598 = vmatpush1.msra.mxu0 0.0
        %4599 = vmatprep.subr.mxu0 0.0
        %4600 = vmatpush1.msra.mxu0 0.0
        %4601 = vmatprep.subr.mxu0 0.0
        %4602 = vmatpush1.msra.mxu0 0.0
        %4603 = vmatprep.subr.mxu0 0.0
        %4604 = vmatpush1.msra.mxu0 0.0
        %4605 = vmatprep.subr.mxu0 0.0
        %4606 = vmatpush1.msra.mxu0 0.0
        %4607 = vmatprep.subr.mxu0 0.0
        %4608 = vmatpush1.msra.mxu0 0.0
        %4609 = vmatprep.subr.mxu0 0.0
        %4610 = vmatpush1.msra.mxu0 0.0
        %4611 = vmatprep.subr.mxu0 0.0
        %4612 = vmatpush1.msra.mxu0 0.0
        %4613 = vmatprep.subr.mxu0 0.0
        %4614 = vmatpush1.msra.mxu0 0.0
        %4615 = vmatprep.subr.mxu0 0.0
        %4616 = vmatpush1.msra.mxu0 0.0
        %4617 = vmatprep.subr.mxu0 0.0
        %4618 = vmatpush1.msra.mxu0 0.0
        %4619 = vmatprep.subr.mxu0 0.0
        %4620 = vmatpush1.msra.mxu0 0.0
        %4621 = vmatprep.subr.mxu0 0.0
        %4622 = vmatpush1.msra.mxu0 0.0
        %4623 = vmatprep.subr.mxu0 0.0
        %4624 = vmatpush1.msra.mxu0 0.0
        %4625 = vmatprep.subr.mxu0 0.0
        %4626 = vmatpush1.msra.mxu0 0.0
        %4627 = vmatprep.subr.mxu0 0.0
        %4628 = vmatpush1.msra.mxu0 0.0
        %4629 = vmatprep.subr.mxu0 0.0
        %4630 = vmatpush1.msra.mxu0 0.0
        %4631 = vmatprep.subr.mxu0 0.0
        %4632 = vmatpush1.msra.mxu0 0.0
        %4633 = vmatprep.subr.mxu0 0.0
        %4634 = vmatpush1.msra.mxu0 0.0
        %4635 = vmatprep.subr.mxu0 0.0
        %4636 = vmatpush1.msra.mxu0 0.0
        %4637 = vmatprep.subr.mxu0 0.0
        %4638 = vmatpush1.msra.mxu0 0.0
        %4639 = vmatprep.subr.mxu0 0.0
        %4640 = vmatpush1.msra.mxu0 0.0
        %4641 = vmatprep.subr.mxu0 0.0
        %4642 = vmatpush1.msra.mxu0 0.0
        %4643 = vmatprep.subr.mxu0 0.0
        %4644 = vmatpush1.msra.mxu0 0.0
        %4645 = vmatprep.mubr.f32.mxu0 0.0
        %4646 = vmatmul.mubr.f32.gmra.mrb[0].mxu0 %v4261
        %v4647 = vpop.f32.mrb[0].mxu0
        %v4648 = vadd.f32 %v4423, %v4647
        %v4649 = vpop.f32.mrb[0].mxu0
        %4650 = vmatprep.mubr.f32.mxu0 0.0
        %4651 = vmatmul.mubr.f32.gmra.mrb[0].mxu0 %v4264
        %v4652 = vpop.f32.mrb[0].mxu0
        %v4653 = vadd.f32 %v4428, %v4652
        %v4654 = vpop.f32.mrb[0].mxu0
        %4655 = vmatprep.mubr.f32.mxu0 0.0
        %4656 = vmatmul.mubr.f32.gmra.mrb[0].mxu0 %v4267
        %v4657 = vpop.f32.mrb[0].mxu0
        %v4658 = vadd.f32 %v4433, %v4657
        %v4659 = vpop.f32.mrb[0].mxu0
        %4660 = vmatprep.mubr.f32.mxu0 0.0
        %4661 = vmatmul.mubr.f32.gmra.mrb[0].mxu0 %v4270
        %v4662 = vpop.f32.mrb[0].mxu0
        %v4663 = vadd.f32 %v4438, %v4662
        %v4664 = vpop.f32.mrb[0].mxu0
        %4665 = vmatprep.mubr.f32.mxu0 0.0
        %4666 = vmatmul.mubr.f32.gmra.mrb[0].mxu0 %v4273
        %v4667 = vpop.f32.mrb[0].mxu0
        %v4668 = vadd.f32 %v4443, %v4667
        %v4669 = vpop.f32.mrb[0].mxu0
        %4670 = vmatprep.mubr.f32.mxu0 0.0
        %4671 = vmatmul.mubr.f32.gmra.mrb[0].mxu0 %v4276
        %v4672 = vpop.f32.mrb[0].mxu0
        %v4673 = vadd.f32 %v4448, %v4672
        %v4674 = vpop.f32.mrb[0].mxu0
        %4675 = vmatprep.mubr.f32.mxu0 0.0
        %4676 = vmatmul.mubr.f32.gmra.mrb[0].mxu0 %v4279
        %v4677 = vpop.f32.mrb[0].mxu0
        %v4678 = vadd.f32 %v4453, %v4677
        %v4679 = vpop.f32.mrb[0].mxu0
        %4680 = vmatprep.mubr.f32.mxu0 0.0
        %4681 = vmatmul.mubr.f32.gmra.mrb[0].mxu0 %v4282
        %v4682 = vpop.f32.mrb[0].mxu0
        %v4683 = vadd.f32 %v4458, %v4682
        %v4684 = vpop.f32.mrb[0].mxu0
        %4685 = vmatprep.mubr.f32.mxu0 0.0
        %4686 = vmatmul.mubr.f32.gmra.mrb[0].mxu0 %v4285
        %v4687 = vpop.f32.mrb[0].mxu0
        %v4688 = vadd.f32 %v4463, %v4687
        %v4689 = vpop.f32.mrb[0].mxu0
        %4690 = vmatprep.mubr.f32.mxu0 0.0
        %4691 = vmatmul.mubr.f32.gmra.mrb[0].mxu0 %v4288
        %v4692 = vpop.f32.mrb[0].mxu0
        %v4693 = vadd.f32 %v4468, %v4692
        %v4694 = vpop.f32.mrb[0].mxu0
        %4695 = vmatprep.mubr.f32.mxu0 0.0
        %4696 = vmatmul.mubr.f32.gmra.mrb[0].mxu0 %v4291
        %v4697 = vpop.f32.mrb[0].mxu0
        %v4698 = vadd.f32 %v4473, %v4697
        %v4699 = vpop.f32.mrb[0].mxu0
        %4700 = vmatprep.mubr.f32.mxu0 0.0
        %4701 = vmatmul.mubr.f32.gmra.mrb[0].mxu0 %v4294
        %v4702 = vpop.f32.mrb[0].mxu0
        %v4703 = vadd.f32 %v4478, %v4702
        %v4704 = vpop.f32.mrb[0].mxu0
        %4705 = vmatprep.mubr.f32.mxu0 0.0
        %4706 = vmatmul.mubr.f32.gmra.mrb[0].mxu0 %v4297
        %v4707 = vpop.f32.mrb[0].mxu0
        %v4708 = vadd.f32 %v4483, %v4707
        %v4709 = vpop.f32.mrb[0].mxu0
        %4710 = vmatprep.mubr.f32.mxu0 0.0
        %4711 = vmatmul.mubr.f32.gmra.mrb[0].mxu0 %v4300
        %v4712 = vpop.f32.mrb[0].mxu0
        %v4713 = vadd.f32 %v4488, %v4712
        %v4714 = vpop.f32.mrb[0].mxu0
        %4715 = vmatprep.mubr.f32.mxu0 0.0
        %4716 = vmatmul.mubr.f32.gmra.mrb[0].mxu0 %v4303
        %v4717 = vpop.f32.mrb[0].mxu0
        %v4718 = vadd.f32 %v4493, %v4717
        %v4719 = vpop.f32.mrb[0].mxu0
        %4720 = vmatprep.mubr.f32.mxu0 0.0
        %4721 = vmatmul.mubr.f32.gmra.mrb[0].mxu0 %v4306
        %v4722 = vpop.f32.mrb[0].mxu0
        %v4723 = vadd.f32 %v4498, %v4722
        %v4724 = vpop.f32.mrb[0].mxu0
        %4725 = vmatprep.mubr.f32.mxu0 0.0
        %4726 = vmatmul.mubr.f32.gmra.mrb[0].mxu0 %v4309
        %v4727 = vpop.f32.mrb[0].mxu0
        %v4728 = vadd.f32 %v4503, %v4727
        %v4729 = vpop.f32.mrb[0].mxu0
        %4730 = vmatprep.mubr.f32.mxu0 0.0
        %4731 = vmatmul.mubr.f32.gmra.mrb[0].mxu0 %v4312
        %v4732 = vpop.f32.mrb[0].mxu0
        %v4733 = vadd.f32 %v4508, %v4732
        %v4734 = vpop.f32.mrb[0].mxu0
        %4735 = vmatprep.mubr.f32.mxu0 0.0
        %4736 = vmatmul.mubr.f32.gmra.mrb[0].mxu0 %v4315
        %v4737 = vpop.f32.mrb[0].mxu0
        %v4738 = vadd.f32 %v4513, %v4737
        %v4739 = vpop.f32.mrb[0].mxu0
        %4740 = vmatprep.mubr.f32.mxu0 0.0
        %4741 = vmatmul.mubr.f32.gmra.mrb[0].mxu0 %v4318
        %v4742 = vpop.f32.mrb[0].mxu0
        %v4743 = vadd.f32 %v4518, %v4742
        %v4744 = vpop.f32.mrb[0].mxu0
        %4745 = vmatprep.mubr.f32.mxu0 0.0
        %4746 = vmatmul.mubr.f32.gmra.mrb[0].mxu0 %v4321
        %v4747 = vpop.f32.mrb[0].mxu0
        %v4748 = vadd.f32 %v4523, %v4747
        %v4749 = vpop.f32.mrb[0].mxu0
        %4750 = vmatprep.mubr.f32.mxu0 0.0
        %4751 = vmatmul.mubr.f32.gmra.mrb[0].mxu0 %v4324
        %v4752 = vpop.f32.mrb[0].mxu0
        %v4753 = vadd.f32 %v4528, %v4752
        %v4754 = vpop.f32.mrb[0].mxu0
        %4755 = vmatprep.mubr.f32.mxu0 0.0
        %4756 = vmatmul.mubr.f32.gmra.mrb[0].mxu0 %v4327
        %v4757 = vpop.f32.mrb[0].mxu0
        %v4758 = vadd.f32 %v4533, %v4757
        %v4759 = vpop.f32.mrb[0].mxu0
        %4760 = vmatprep.mubr.f32.mxu0 0.0
        %4761 = vmatmul.mubr.f32.gmra.mrb[0].mxu0 %v4330
        %v4762 = vpop.f32.mrb[0].mxu0
        %v4763 = vadd.f32 %v4538, %v4762
        %v4764 = vpop.f32.mrb[0].mxu0
        %4765 = vmatprep.mubr.f32.mxu0 0.0
        %4766 = vmatmul.mubr.f32.gmra.mrb[0].mxu0 %v4333
        %v4767 = vpop.f32.mrb[0].mxu0
        %v4768 = vadd.f32 %v4543, %v4767
        %v4769 = vpop.f32.mrb[0].mxu0
        %4770 = vmatprep.mubr.f32.mxu0 0.0
        %4771 = vmatmul.mubr.f32.gmra.mrb[0].mxu0 %v4336
        %v4772 = vpop.f32.mrb[0].mxu0
        %v4773 = vadd.f32 %v4548, %v4772
        %v4774 = vpop.f32.mrb[0].mxu0
        %4775 = vmatprep.mubr.f32.mxu0 0.0
        %4776 = vmatmul.mubr.f32.gmra.mrb[0].mxu0 %v4339
        %v4777 = vpop.f32.mrb[0].mxu0
        %v4778 = vadd.f32 %v4553, %v4777
        %v4779 = vpop.f32.mrb[0].mxu0
        %4780 = vmatprep.mubr.f32.mxu0 0.0
        %4781 = vmatmul.mubr.f32.gmra.mrb[0].mxu0 %v4342
        %v4782 = vpop.f32.mrb[0].mxu0
        %v4783 = vadd.f32 %v4558, %v4782
        %v4784 = vpop.f32.mrb[0].mxu0
        %4785 = vmatprep.mubr.f32.mxu0 0.0
        %4786 = vmatmul.mubr.f32.gmra.mrb[0].mxu0 %v4345
        %v4787 = vpop.f32.mrb[0].mxu0
        %v4788 = vadd.f32 %v4563, %v4787
        %v4789 = vpop.f32.mrb[0].mxu0
        %4790 = vmatprep.mubr.f32.mxu0 0.0
        %4791 = vmatmul.mubr.f32.gmra.mrb[0].mxu0 %v4348
        %v4792 = vpop.f32.mrb[0].mxu0
        %v4793 = vadd.f32 %v4568, %v4792
        %v4794 = vpop.f32.mrb[0].mxu0
        %4795 = vmatprep.mubr.f32.mxu0 0.0
        %4796 = vmatmul.mubr.f32.gmra.mrb[0].mxu0 %v4351
        %v4797 = vpop.f32.mrb[0].mxu0
        %v4798 = vadd.f32 %v4573, %v4797
        %v4799 = vpop.f32.mrb[0].mxu0
        %4800 = vmatprep.mubr.f32.mxu0 0.0
        %4801 = vmatmul.mubr.f32.gmra.mrb[0].mxu0 %v4354
        %v4802 = vpop.f32.mrb[0].mxu0
        %v4803 = vadd.f32 %v4578, %v4802
        %v4804 = vpop.f32.mrb[0].mxu0
        %4805 = vdwg.mxu0
        %v4806 = vmax.f32 %v4648, 0.0
        %v4807 = vmax.f32 %v4653, 0.0
        %v4808 = vmax.f32 %v4658, 0.0
        %v4809 = vmax.f32 %v4663, 0.0
        %v4810 = vmax.f32 %v4668, 0.0
        %v4811 = vmax.f32 %v4673, 0.0
        %v4812 = vmax.f32 %v4678, 0.0
        %v4813 = vmax.f32 %v4683, 0.0
        %v4814 = vmax.f32 %v4688, 0.0
        %v4815 = vmax.f32 %v4693, 0.0
        %v4816 = vmax.f32 %v4698, 0.0
        %v4817 = vmax.f32 %v4703, 0.0
        %v4818 = vmax.f32 %v4708, 0.0
        %v4819 = vmax.f32 %v4713, 0.0
        %v4820 = vmax.f32 %v4718, 0.0
        %v4821 = vmax.f32 %v4723, 0.0
        %v4822 = vmax.f32 %v4728, 0.0
        %v4823 = vmax.f32 %v4733, 0.0
        %v4824 = vmax.f32 %v4738, 0.0
        %v4825 = vmax.f32 %v4743, 0.0
        %v4826 = vmax.f32 %v4748, 0.0
        %v4827 = vmax.f32 %v4753, 0.0
        %v4828 = vmax.f32 %v4758, 0.0
        %v4829 = vmax.f32 %v4763, 0.0
        %v4830 = vmax.f32 %v4768, 0.0
        %v4831 = vmax.f32 %v4773, 0.0
        %v4832 = vmax.f32 %v4778, 0.0
        %v4833 = vmax.f32 %v4783, 0.0
        %v4834 = vmax.f32 %v4788, 0.0
        %v4835 = vmax.f32 %v4793, 0.0
        %v4836 = vmax.f32 %v4798, 0.0
        %v4837 = vmax.f32 %v4803, 0.0
        %v4839 = vsel %vm2402, %v4806, 0
        %v4842 = vsel %vm2402, %v4807, 0
        %v4845 = vsel %vm2402, %v4808, 0
        %v4848 = vsel %vm2402, %v4809, 0
        %v4851 = vsel %vm2402, %v4810, 0
        %v4854 = vsel %vm2402, %v4811, 0
        %v4857 = vsel %vm2402, %v4812, 0
        %v4860 = vsel %vm2402, %v4813, 0
        %v4863 = vsel %vm2402, %v4814, 0
        %v4866 = vsel %vm2402, %v4815, 0
        %v4869 = vsel %vm2402, %v4816, 0
        %v4872 = vsel %vm2402, %v4817, 0
        %v4875 = vsel %vm2402, %v4818, 0
        %v4878 = vsel %vm2402, %v4819, 0
        %v4881 = vsel %vm2402, %v4820, 0
        %v4884 = vsel %vm2402, %v4821, 0
        %v4887 = vsel %vm2402, %v4822, 0
        %v4890 = vsel %vm2402, %v4823, 0
        %v4893 = vsel %vm2402, %v4824, 0
        %v4896 = vsel %vm2402, %v4825, 0
        %v4899 = vsel %vm2402, %v4826, 0
        %v4902 = vsel %vm2402, %v4827, 0
        %v4905 = vsel %vm2402, %v4828, 0
        %v4908 = vsel %vm2402, %v4829, 0
        %v4911 = vsel %vm2402, %v4830, 0
        %v4914 = vsel %vm2402, %v4831, 0
        %v4917 = vsel %vm2402, %v4832, 0
        %v4920 = vsel %vm2402, %v4833, 0
        %v4923 = vsel %vm2402, %v4834, 0
        %v4926 = vsel %vm2402, %v4835, 0
        %v4929 = vsel %vm2402, %v4836, 0
        %v4932 = vsel %vm2402, %v4837, 0
        %4934 = vmatprep.subr.mxu0 0.0
        %4935 = vmatpush1.msra.mxu0 %v225
        %4936 = vmatprep.subr.mxu0 0.0
        %4937 = vmatpush1.msra.mxu0 %v226
        %4938 = vmatprep.subr.mxu0 0.0
        %4939 = vmatpush1.msra.mxu0 0.0
        %4940 = vmatprep.subr.mxu0 0.0
        %4941 = vmatpush1.msra.mxu0 0.0
        %4942 = vmatprep.subr.mxu0 0.0
        %4943 = vmatpush1.msra.mxu0 0.0
        %4944 = vmatprep.subr.mxu0 0.0
        %4945 = vmatpush1.msra.mxu0 0.0
        %4946 = vmatprep.subr.mxu0 0.0
        %4947 = vmatpush1.msra.mxu0 0.0
        %4948 = vmatprep.subr.mxu0 0.0
        %4949 = vmatpush1.msra.mxu0 0.0
        %4950 = vmatprep.subr.mxu0 0.0
        %4951 = vmatpush1.msra.mxu0 0.0
        %4952 = vmatprep.subr.mxu0 0.0
        %4953 = vmatpush1.msra.mxu0 0.0
        %4954 = vmatprep.subr.mxu0 0.0
        %4955 = vmatpush1.msra.mxu0 0.0
        %4956 = vmatprep.subr.mxu0 0.0
        %4957 = vmatpush1.msra.mxu0 0.0
        %4958 = vmatprep.subr.mxu0 0.0
        %4959 = vmatpush1.msra.mxu0 0.0
        %4960 = vmatprep.subr.mxu0 0.0
        %4961 = vmatpush1.msra.mxu0 0.0
        %4962 = vmatprep.subr.mxu0 0.0
        %4963 = vmatpush1.msra.mxu0 0.0
        %4964 = vmatprep.subr.mxu0 0.0
        %4965 = vmatpush1.msra.mxu0 0.0
        %4966 = vmatprep.subr.mxu0 0.0
        %4967 = vmatpush1.msra.mxu0 0.0
        %4968 = vmatprep.subr.mxu0 0.0
        %4969 = vmatpush1.msra.mxu0 0.0
        %4970 = vmatprep.subr.mxu0 0.0
        %4971 = vmatpush1.msra.mxu0 0.0
        %4972 = vmatprep.subr.mxu0 0.0
        %4973 = vmatpush1.msra.mxu0 0.0
        %4974 = vmatprep.subr.mxu0 0.0
        %4975 = vmatpush1.msra.mxu0 0.0
        %4976 = vmatprep.subr.mxu0 0.0
        %4977 = vmatpush1.msra.mxu0 0.0
        %4978 = vmatprep.subr.mxu0 0.0
        %4979 = vmatpush1.msra.mxu0 0.0
        %4980 = vmatprep.subr.mxu0 0.0
        %4981 = vmatpush1.msra.mxu0 0.0
        %4982 = vmatprep.subr.mxu0 0.0
        %4983 = vmatpush1.msra.mxu0 0.0
        %4984 = vmatprep.subr.mxu0 0.0
        %4985 = vmatpush1.msra.mxu0 0.0
        %4986 = vmatprep.subr.mxu0 0.0
        %4987 = vmatpush1.msra.mxu0 0.0
        %4988 = vmatprep.subr.mxu0 0.0
        %4989 = vmatpush1.msra.mxu0 0.0
        %4990 = vmatprep.subr.mxu0 0.0
        %4991 = vmatpush1.msra.mxu0 0.0
        %4992 = vmatprep.subr.mxu0 0.0
        %4993 = vmatpush1.msra.mxu0 0.0
        %4994 = vmatprep.subr.mxu0 0.0
        %4995 = vmatpush1.msra.mxu0 0.0
        %4996 = vmatprep.subr.mxu0 0.0
        %4997 = vmatpush1.msra.mxu0 0.0
        %4998 = vmatprep.mubr.f32.mxu0 0.0
        %4999 = vmatmul.mubr.f32.gmra.mrb[0].mxu0 %v4839
        %v5000 = vpop.f32.mrb[0].mxu0
        %v5001 = vadd.f32 0.0, %v5000
        %v5002 = vpop.f32.mrb[0].mxu0
        %5003 = vmatprep.mubr.f32.mxu0 0.0
        %5004 = vmatmul.mubr.f32.gmra.mrb[0].mxu0 %v4842
        %v5005 = vpop.f32.mrb[0].mxu0
        %v5006 = vadd.f32 0.0, %v5005
        %v5007 = vpop.f32.mrb[0].mxu0
        %5008 = vmatprep.mubr.f32.mxu0 0.0
        %5009 = vmatmul.mubr.f32.gmra.mrb[0].mxu0 %v4845
        %v5010 = vpop.f32.mrb[0].mxu0
        %v5011 = vadd.f32 0.0, %v5010
        %v5012 = vpop.f32.mrb[0].mxu0
        %5013 = vmatprep.mubr.f32.mxu0 0.0
        %5014 = vmatmul.mubr.f32.gmra.mrb[0].mxu0 %v4848
        %v5015 = vpop.f32.mrb[0].mxu0
        %v5016 = vadd.f32 0.0, %v5015
        %v5017 = vpop.f32.mrb[0].mxu0
        %5018 = vmatprep.mubr.f32.mxu0 0.0
        %5019 = vmatmul.mubr.f32.gmra.mrb[0].mxu0 %v4851
        %v5020 = vpop.f32.mrb[0].mxu0
        %v5021 = vadd.f32 0.0, %v5020
        %v5022 = vpop.f32.mrb[0].mxu0
        %5023 = vmatprep.mubr.f32.mxu0 0.0
        %5024 = vmatmul.mubr.f32.gmra.mrb[0].mxu0 %v4854
        %v5025 = vpop.f32.mrb[0].mxu0
        %v5026 = vadd.f32 0.0, %v5025
        %v5027 = vpop.f32.mrb[0].mxu0
        %5028 = vmatprep.mubr.f32.mxu0 0.0
        %5029 = vmatmul.mubr.f32.gmra.mrb[0].mxu0 %v4857
        %v5030 = vpop.f32.mrb[0].mxu0
        %v5031 = vadd.f32 0.0, %v5030
        %v5032 = vpop.f32.mrb[0].mxu0
        %5033 = vmatprep.mubr.f32.mxu0 0.0
        %5034 = vmatmul.mubr.f32.gmra.mrb[0].mxu0 %v4860
        %v5035 = vpop.f32.mrb[0].mxu0
        %v5036 = vadd.f32 0.0, %v5035
        %v5037 = vpop.f32.mrb[0].mxu0
        %5038 = vmatprep.mubr.f32.mxu0 0.0
        %5039 = vmatmul.mubr.f32.gmra.mrb[0].mxu0 %v4863
        %v5040 = vpop.f32.mrb[0].mxu0
        %v5041 = vadd.f32 0.0, %v5040
        %v5042 = vpop.f32.mrb[0].mxu0
        %5043 = vmatprep.mubr.f32.mxu0 0.0
        %5044 = vmatmul.mubr.f32.gmra.mrb[0].mxu0 %v4866
        %v5045 = vpop.f32.mrb[0].mxu0
        %v5046 = vadd.f32 0.0, %v5045
        %v5047 = vpop.f32.mrb[0].mxu0
        %5048 = vmatprep.mubr.f32.mxu0 0.0
        %5049 = vmatmul.mubr.f32.gmra.mrb[0].mxu0 %v4869
        %v5050 = vpop.f32.mrb[0].mxu0
        %v5051 = vadd.f32 0.0, %v5050
        %v5052 = vpop.f32.mrb[0].mxu0
        %5053 = vmatprep.mubr.f32.mxu0 0.0
        %5054 = vmatmul.mubr.f32.gmra.mrb[0].mxu0 %v4872
        %v5055 = vpop.f32.mrb[0].mxu0
        %v5056 = vadd.f32 0.0, %v5055
        %v5057 = vpop.f32.mrb[0].mxu0
        %5058 = vmatprep.mubr.f32.mxu0 0.0
        %5059 = vmatmul.mubr.f32.gmra.mrb[0].mxu0 %v4875
        %v5060 = vpop.f32.mrb[0].mxu0
        %v5061 = vadd.f32 0.0, %v5060
        %v5062 = vpop.f32.mrb[0].mxu0
        %5063 = vmatprep.mubr.f32.mxu0 0.0
        %5064 = vmatmul.mubr.f32.gmra.mrb[0].mxu0 %v4878
        %v5065 = vpop.f32.mrb[0].mxu0
        %v5066 = vadd.f32 0.0, %v5065
        %v5067 = vpop.f32.mrb[0].mxu0
        %5068 = vmatprep.mubr.f32.mxu0 0.0
        %5069 = vmatmul.mubr.f32.gmra.mrb[0].mxu0 %v4881
        %v5070 = vpop.f32.mrb[0].mxu0
        %v5071 = vadd.f32 0.0, %v5070
        %v5072 = vpop.f32.mrb[0].mxu0
        %5073 = vmatprep.mubr.f32.mxu0 0.0
        %5074 = vmatmul.mubr.f32.gmra.mrb[0].mxu0 %v4884
        %v5075 = vpop.f32.mrb[0].mxu0
        %v5076 = vadd.f32 0.0, %v5075
        %v5077 = vpop.f32.mrb[0].mxu0
        %5078 = vmatprep.mubr.f32.mxu0 0.0
        %5079 = vmatmul.mubr.f32.gmra.mrb[0].mxu0 %v4887
        %v5080 = vpop.f32.mrb[0].mxu0
        %v5081 = vadd.f32 0.0, %v5080
        %v5082 = vpop.f32.mrb[0].mxu0
        %5083 = vmatprep.mubr.f32.mxu0 0.0
        %5084 = vmatmul.mubr.f32.gmra.mrb[0].mxu0 %v4890
        %v5085 = vpop.f32.mrb[0].mxu0
        %v5086 = vadd.f32 0.0, %v5085
        %v5087 = vpop.f32.mrb[0].mxu0
        %5088 = vmatprep.mubr.f32.mxu0 0.0
        %5089 = vmatmul.mubr.f32.gmra.mrb[0].mxu0 %v4893
        %v5090 = vpop.f32.mrb[0].mxu0
        %v5091 = vadd.f32 0.0, %v5090
        %v5092 = vpop.f32.mrb[0].mxu0
        %5093 = vmatprep.mubr.f32.mxu0 0.0
        %5094 = vmatmul.mubr.f32.gmra.mrb[0].mxu0 %v4896
        %v5095 = vpop.f32.mrb[0].mxu0
        %v5096 = vadd.f32 0.0, %v5095
        %v5097 = vpop.f32.mrb[0].mxu0
        %5098 = vmatprep.mubr.f32.mxu0 0.0
        %5099 = vmatmul.mubr.f32.gmra.mrb[0].mxu0 %v4899
        %v5100 = vpop.f32.mrb[0].mxu0
        %v5101 = vadd.f32 0.0, %v5100
        %v5102 = vpop.f32.mrb[0].mxu0
        %5103 = vmatprep.mubr.f32.mxu0 0.0
        %5104 = vmatmul.mubr.f32.gmra.mrb[0].mxu0 %v4902
        %v5105 = vpop.f32.mrb[0].mxu0
        %v5106 = vadd.f32 0.0, %v5105
        %v5107 = vpop.f32.mrb[0].mxu0
        %5108 = vmatprep.mubr.f32.mxu0 0.0
        %5109 = vmatmul.mubr.f32.gmra.mrb[0].mxu0 %v4905
        %v5110 = vpop.f32.mrb[0].mxu0
        %v5111 = vadd.f32 0.0, %v5110
        %v5112 = vpop.f32.mrb[0].mxu0
        %5113 = vmatprep.mubr.f32.mxu0 0.0
        %5114 = vmatmul.mubr.f32.gmra.mrb[0].mxu0 %v4908
        %v5115 = vpop.f32.mrb[0].mxu0
        %v5116 = vadd.f32 0.0, %v5115
        %v5117 = vpop.f32.mrb[0].mxu0
        %5118 = vmatprep.mubr.f32.mxu0 0.0
        %5119 = vmatmul.mubr.f32.gmra.mrb[0].mxu0 %v4911
        %v5120 = vpop.f32.mrb[0].mxu0
        %v5121 = vadd.f32 0.0, %v5120
        %v5122 = vpop.f32.mrb[0].mxu0
        %5123 = vmatprep.mubr.f32.mxu0 0.0
        %5124 = vmatmul.mubr.f32.gmra.mrb[0].mxu0 %v4914
        %v5125 = vpop.f32.mrb[0].mxu0
        %v5126 = vadd.f32 0.0, %v5125
        %v5127 = vpop.f32.mrb[0].mxu0
        %5128 = vmatprep.mubr.f32.mxu0 0.0
        %5129 = vmatmul.mubr.f32.gmra.mrb[0].mxu0 %v4917
        %v5130 = vpop.f32.mrb[0].mxu0
        %v5131 = vadd.f32 0.0, %v5130
        %v5132 = vpop.f32.mrb[0].mxu0
        %5133 = vmatprep.mubr.f32.mxu0 0.0
        %5134 = vmatmul.mubr.f32.gmra.mrb[0].mxu0 %v4920
        %v5135 = vpop.f32.mrb[0].mxu0
        %v5136 = vadd.f32 0.0, %v5135
        %v5137 = vpop.f32.mrb[0].mxu0
        %5138 = vmatprep.mubr.f32.mxu0 0.0
        %5139 = vmatmul.mubr.f32.gmra.mrb[0].mxu0 %v4923
        %v5140 = vpop.f32.mrb[0].mxu0
        %v5141 = vadd.f32 0.0, %v5140
        %v5142 = vpop.f32.mrb[0].mxu0
        %5143 = vmatprep.mubr.f32.mxu0 0.0
        %5144 = vmatmul.mubr.f32.gmra.mrb[0].mxu0 %v4926
        %v5145 = vpop.f32.mrb[0].mxu0
        %v5146 = vadd.f32 0.0, %v5145
        %v5147 = vpop.f32.mrb[0].mxu0
        %5148 = vmatprep.mubr.f32.mxu0 0.0
        %5149 = vmatmul.mubr.f32.gmra.mrb[0].mxu0 %v4929
        %v5150 = vpop.f32.mrb[0].mxu0
        %v5151 = vadd.f32 0.0, %v5150
        %v5152 = vpop.f32.mrb[0].mxu0
        %5153 = vmatprep.mubr.f32.mxu0 0.0
        %5154 = vmatmul.mubr.f32.gmra.mrb[0].mxu0 %v4932
        %v5155 = vpop.f32.mrb[0].mxu0
        %v5156 = vadd.f32 0.0, %v5155
        %v5157 = vpop.f32.mrb[0].mxu0
        %5158 = vdwg.mxu0
        %v5159 = vadd.f32 %v2724, %v5001
        %v5160 = vadd.f32 %v2725, %v5006
        %v5161 = vadd.f32 %v2726, %v5011
        %v5162 = vadd.f32 %v2727, %v5016
        %v5163 = vadd.f32 %v2728, %v5021
        %v5164 = vadd.f32 %v2729, %v5026
        %v5165 = vadd.f32 %v2730, %v5031
        %v5166 = vadd.f32 %v2731, %v5036
        %v5167 = vadd.f32 %v2732, %v5041
        %v5168 = vadd.f32 %v2733, %v5046
        %v5169 = vadd.f32 %v2734, %v5051
        %v5170 = vadd.f32 %v2735, %v5056
        %v5171 = vadd.f32 %v2736, %v5061
        %v5172 = vadd.f32 %v2737, %v5066
        %v5173 = vadd.f32 %v2738, %v5071
        %v5174 = vadd.f32 %v2739, %v5076
        %v5175 = vadd.f32 %v2740, %v5081
        %v5176 = vadd.f32 %v2741, %v5086
        %v5177 = vadd.f32 %v2742, %v5091
        %v5178 = vadd.f32 %v2743, %v5096
        %v5179 = vadd.f32 %v2744, %v5101
        %v5180 = vadd.f32 %v2745, %v5106
        %v5181 = vadd.f32 %v2746, %v5111
        %v5182 = vadd.f32 %v2747, %v5116
        %v5183 = vadd.f32 %v2748, %v5121
        %v5184 = vadd.f32 %v2749, %v5126
        %v5185 = vadd.f32 %v2750, %v5131
        %v5186 = vadd.f32 %v2751, %v5136
        %v5187 = vadd.f32 %v2752, %v5141
        %v5188 = vadd.f32 %v2753, %v5146
        %v5189 = vadd.f32 %v2754, %v5151
        %v5190 = vadd.f32 %v2755, %v5156
        %v5191 = vmax.f32 %v5159, 0.0
        %v5192 = vmax.f32 %v5160, 0.0
        %v5193 = vmax.f32 %v5161, 0.0
        %v5194 = vmax.f32 %v5162, 0.0
        %v5195 = vmax.f32 %v5163, 0.0
        %v5196 = vmax.f32 %v5164, 0.0
        %v5197 = vmax.f32 %v5165, 0.0
        %v5198 = vmax.f32 %v5166, 0.0
        %v5199 = vmax.f32 %v5167, 0.0
        %v5200 = vmax.f32 %v5168, 0.0
        %v5201 = vmax.f32 %v5169, 0.0
        %v5202 = vmax.f32 %v5170, 0.0
        %v5203 = vmax.f32 %v5171, 0.0
        %v5204 = vmax.f32 %v5172, 0.0
        %v5205 = vmax.f32 %v5173, 0.0
        %v5206 = vmax.f32 %v5174, 0.0
        %v5207 = vmax.f32 %v5175, 0.0
        %v5208 = vmax.f32 %v5176, 0.0
        %v5209 = vmax.f32 %v5177, 0.0
        %v5210 = vmax.f32 %v5178, 0.0
        %v5211 = vmax.f32 %v5179, 0.0
        %v5212 = vmax.f32 %v5180, 0.0
        %v5213 = vmax.f32 %v5181, 0.0
        %v5214 = vmax.f32 %v5182, 0.0
        %v5215 = vmax.f32 %v5183, 0.0
        %v5216 = vmax.f32 %v5184, 0.0
        %v5217 = vmax.f32 %v5185, 0.0
        %v5218 = vmax.f32 %v5186, 0.0
        %v5219 = vmax.f32 %v5187, 0.0
        %v5220 = vmax.f32 %v5188, 0.0
        %v5221 = vmax.f32 %v5189, 0.0
        %v5222 = vmax.f32 %v5190, 0.0
        %5223 = vst.msk [vmem:[%s188] sm:$0xff] %vm259, %v5191
        %5224 = vst.msk [vmem:[%s188 + $0x8] sm:$0xff] %vm259, %v5192
        %5225 = vst.msk [vmem:[%s188 + $0x10] sm:$0xff] %vm259, %v5193
        %5226 = vst.msk [vmem:[%s188 + $0x18] sm:$0xff] %vm259, %v5194
        %5227 = vst.msk [vmem:[%s188 + $0x20] sm:$0xff] %vm259, %v5195
        %5228 = vst.msk [vmem:[%s188 + $0x28] sm:$0xff] %vm259, %v5196
        %5229 = vst.msk [vmem:[%s188 + $0x30] sm:$0xff] %vm259, %v5197
        %5230 = vst.msk [vmem:[%s188 + $0x38] sm:$0xff] %vm259, %v5198
        %5231 = vst.msk [vmem:[%s188 + $0x40] sm:$0xff] %vm259, %v5199
        %5232 = vst.msk [vmem:[%s188 + $0x48] sm:$0xff] %vm259, %v5200
        %5233 = vst.msk [vmem:[%s188 + $0x50] sm:$0xff] %vm259, %v5201
        %5234 = vst.msk [vmem:[%s188 + $0x58] sm:$0xff] %vm259, %v5202
        %5235 = vst.msk [vmem:[%s188 + $0x60] sm:$0xff] %vm259, %v5203
        %5236 = vst.msk [vmem:[%s188 + $0x68] sm:$0xff] %vm259, %v5204
        %5237 = vst.msk [vmem:[%s188 + $0x70] sm:$0xff] %vm259, %v5205
        %5238 = vst.msk [vmem:[%s188 + $0x78] sm:$0xff] %vm259, %v5206
        %5239 = vst.msk [vmem:[%s188 + $0x80] sm:$0xff] %vm259, %v5207
        %5240 = vst.msk [vmem:[%s188 + $0x88] sm:$0xff] %vm259, %v5208
        %5241 = vst.msk [vmem:[%s188 + $0x90] sm:$0xff] %vm259, %v5209
        %5242 = vst.msk [vmem:[%s188 + $0x98] sm:$0xff] %vm259, %v5210
        %5243 = vst.msk [vmem:[%s188 + $0xa0] sm:$0xff] %vm259, %v5211
        %5244 = vst.msk [vmem:[%s188 + $0xa8] sm:$0xff] %vm259, %v5212
        %5245 = vst.msk [vmem:[%s188 + $0xb0] sm:$0xff] %vm259, %v5213
        %5246 = vst.msk [vmem:[%s188 + $0xb8] sm:$0xff] %vm259, %v5214
        %5247 = vst.msk [vmem:[%s188 + $0xc0] sm:$0xff] %vm259, %v5215
        %5248 = vst.msk [vmem:[%s188 + $0xc8] sm:$0xff] %vm259, %v5216
        %5249 = vst.msk [vmem:[%s188 + $0xd0] sm:$0xff] %vm259, %v5217
        %5250 = vst.msk [vmem:[%s188 + $0xd8] sm:$0xff] %vm259, %v5218
        %5251 = vst.msk [vmem:[%s188 + $0xe0] sm:$0xff] %vm259, %v5219
        %5252 = vst.msk [vmem:[%s188 + $0xe8] sm:$0xff] %vm259, %v5220
        %5253 = vst.msk [vmem:[%s188 + $0xf0] sm:$0xff] %vm259, %v5221
        %5254 = vst.msk [vmem:[%s188 + $0xf8] sm:$0xff] %vm259, %v5222
        %s5255 = sand.u32 %s96, 1
        %s5256 = scalar_lea.sflag [#allocation6], %s5255
        %s5257 = sand.u32 %s96, 1
        %s5258 = smul.addr %s5257, 256
        %s5259 = scalar_lea.vmem [#allocation7], %s5258
        // Predicated region
        $region37: #{residual_stack_nchw.1} parent=31 // pred_check
          %p5260 = pneg %p106
        $region38: #{residual_stack_nchw.1} parent=31 // pred_check_branch
          %5262 = sbr.rel (%p5260) target = $region40
        $region39: #{residual_stack_nchw.1} parent=31 // pred_region
          %s5264 = ssub.s32 4096, 4096
          %5265 = vsyncadd %s5256, %s5264
          %s5266 = smul.addr %s20, 32
          %s5267 = smul.addr %s5266, 128
          %s5268 = scalar_lea.hbm %s3, %s5267
          %s5269 = sshll.u32 %s5259, 4
          %s5270 = int_to_ptr.vmem [resolvable:$true] %s5269
          %5275 = dma.vmem_to_hbm [thread:$0]  %s5270, 4096, %s5268, %s5256, 128, 128, 8
        $region40: #{residual_stack_nchw.1} parent=31 // pred_fallthru
          _
      $region32: #{residual_stack_nchw.1} parent=5 // pred_fallthru
        _
      %p5276 = scmp.le.s32.totalorder 2, %s15
      // Predicated region
      $region41: #{residual_stack_nchw.1} parent=5 // pred_check
        %p5277 = pneg %p5276
      $region42: #{residual_stack_nchw.1} parent=5 // pred_check_branch
        %5279 = sbr.rel (%p5277) target = $region44
      $region43: #{residual_stack_nchw.1} parent=5 // pred_region
        %s5280 = ssub.s32 %s15, 2
        // Predicated region
        $region45: #{residual_stack_nchw.1} parent=43 // pred_check
          %p5281 = pneg %p112
        $region46: #{residual_stack_nchw.1} parent=43 // pred_check_branch
          %5283 = sbr.rel (%p5281) target = $region48
        $region47: #{residual_stack_nchw.1} parent=43 // pred_region
          %s5284 = sand.u32 %s97, 1
          %s5285 = scalar_lea.sflag [#allocation6], %s5284
          %s5286 = sand.u32 %s97, 1
          %s5287 = smul.addr %s5286, 256
          %s5288 = scalar_lea.vmem [#allocation7], %s5287
          %5289 = dma.done %s5285, 4096
        $region48: #{residual_stack_nchw.1} parent=43 // pred_fallthru
          _
      $region44: #{residual_stack_nchw.1} parent=5 // pred_fallthru
        _
    $region6: #{residual_stack_nchw.1} parent=1 // loop_footer
      %s19 = sadd.s32 1, %s15
    $region7: #{residual_stack_nchw.1} parent=1 // loop_footer_branch
      %14 = sbr.rel target = $region3
    $region8: #{residual_stack_nchw.1} parent=1 // loop_exit
      _
    %5290 = vsyncpa [#allocation5], 1
    %s5291 = scalar_lea.sflag [#allocation5], 1
    %5292 = vsyncpa %s5291, 1
    %5293 = vsyncpa [#allocation6], 1
    %s5294 = scalar_lea.sflag [#allocation6], 1
    %5295 = vsyncpa %s5294, 1

</llo_original>
